<compile_context>
chip_gen: v7x
topology: tpu7x:2x2x1
jax: 0.10.0
libtpu: 0.0.40
codegen_flags: <defaults>
</compile_context>

<pallas_src>
import functools

import numpy as np
import jax
import jax.numpy as jnp
from jax import lax
from jax.experimental import pallas as pl
from jax.experimental.pallas import tpu as pltpu


def _residual_kernel(x_ref, w1_ref, b1_ref, w2_ref, b2_ref, masks_ref, o_ref, *,
                     H, W, C, K, add_skip):
    """Fused conv1 -> ReLU -> conv2 -> (+skip) -> ReLU over the whole (C, B*H*W) slab.

    x_ref    : (C, L)            input, channels in sublanes, batch*spatial in lanes (L = B*H*W)
    w*_ref   : (K*K*C, C, 1)     weights, w[(kh*K+kw)*C + ci, co, 0] = torch_w[co, ci, kh, kw]
    b*_ref   : (C, 1)            biases
    masks_ref: (K*K, 1, L)       per-tap boundary masks (1.0 inside image, 0.0 outside)
    o_ref    : (C, L)            output
    """
    P = (K - 1) // 2
    L = x_ref.shape[-1]
    x = x_ref[...]                                    # (C, L) f32

    taps = [(kh - P, kw - P) for kh in range(K) for kw in range(K)]

    def conv(v, w_ref, b_ref):
        # C independent accumulators -> 4x shorter dependent-add chains on the VALU.
        n_acc = min(C, 4)
        accs = [jnp.zeros((C, L), jnp.float32) for _ in range(n_acc)]
        for t, (dh, dw) in enumerate(taps):
            s = dh * W + dw
            if dh == 0 and dw == 0:
                vs = v                                # center tap: no shift, no mask
            else:
                # out[f] = v[(f + s) % L]  ==  roll(v, -s); garbage brought in by the
                # circular rotation only lands on positions zeroed by the boundary mask.
                vs = pltpu.roll(v, (-s) % L, axis=1) * masks_ref[t]   # (C, L)
            for ci in range(C):
                wcol = w_ref[t * C + ci]              # (C, 1): sublane-shaped weight load
                a = (t * C + ci) % n_acc
                accs[a] = accs[a] + wcol * vs[ci:ci + 1, :]   # rank-1 broadcast FMA
        # tree-sum the independent partials
        while len(accs) > 1:
            nxt = [accs[i] + accs[i + 1] for i in range(0, len(accs) - 1, 2)]
            if len(accs) % 2:
                nxt.append(accs[-1])
            accs = nxt
        return accs[0] + b_ref[...]

    y = jnp.maximum(conv(x, w1_ref, b1_ref), 0.0)     # conv1 + ReLU
    y2 = conv(y, w2_ref, b2_ref)                      # conv2
    out = x + y2 if add_skip else y2                  # optional skip connection
    o_ref[...] = jnp.maximum(out, 0.0)                # final ReLU, lane-dense store


@functools.partial(jax.jit, static_argnames=("kernel_size", "add_skip_connection"))
def residual_layer_forward(x_nchw, w1, b1, w2, b2, *, kernel_size,
                           add_skip_connection=True):
    """x_nchw: (B, C, H, W) float32; weights in PyTorch (Cout, Cin, KH, KW) layout."""
    B, C, H, W = x_nchw.shape
    K = kernel_size
    assert K % 2 == 1, "symmetric 'same' padding math assumes odd kernel_size"
    HW = H * W
    L = B * HW

    # (B, C, H, W) -> (C, B*H*W): batch folded into the lane axis (lane width = 512 here).
    x_flat = jnp.transpose(x_nchw.astype(jnp.float32), (1, 0, 2, 3)).reshape(C, L)

    # (Cout, Cin, KH, KW) -> (K*K*Cin, Cout, 1): each (tap, ci) column is a (Cout, 1)
    # sublane vector directly loadable from the Ref.
    def prep_w(w):
        return (jnp.transpose(w, (2, 3, 1, 0))
                .reshape(K * K * C, C)[:, :, None]
                .astype(jnp.float32))

    w1_k, w2_k = prep_w(w1), prep_w(w2)
    b1_k = b1.reshape(C, 1).astype(jnp.float32)
    b2_k = b2.reshape(C, 1).astype(jnp.float32)

    # Boundary masks, built with numpy at trace time (shapes are static) -> XLA constant.
    P = (K - 1) // 2
    pos = np.arange(L) % HW
    h_idx = pos // W
    w_idx = pos % W
    mask_rows = []
    for kh in range(K):
        for kw in range(K):
            dh, dw = kh - P, kw - P
            ok = ((h_idx + dh >= 0) & (h_idx + dh < H) &
                  (w_idx + dw >= 0) & (w_idx + dw < W))
            mask_rows.append(ok.astype(np.float32))
    masks = jnp.asarray(np.stack(mask_rows, axis=0)[:, None, :])      # (K*K, 1, L)

    kernel = functools.partial(_residual_kernel, H=H, W=W, C=C, K=K,
                               add_skip=add_skip_connection)

    flops = 2 * 2 * (K * K) * C * C * L               # two convs of rank-1 FMAs
    bytes_accessed = 4 * (2 * C * L + 2 * K * K * C * C + 2 * C + K * K * L)

    out_flat = pl.pallas_call(
        kernel,
        out_shape=jax.ShapeDtypeStruct((C, L), jnp.float32),
        grid_spec=pltpu.PrefetchScalarGridSpec(
            num_scalar_prefetch=0,
            grid=(1,),                                # single step: kernel is launch-bound
            in_specs=[
                pl.BlockSpec((C, L), lambda i: (0, 0)),
                pl.BlockSpec((K * K * C, C, 1), lambda i: (0, 0, 0)),
                pl.BlockSpec((C, 1), lambda i: (0, 0)),
                pl.BlockSpec((K * K * C, C, 1), lambda i: (0, 0, 0)),
                pl.BlockSpec((C, 1), lambda i: (0, 0)),
                pl.BlockSpec((K * K, 1, L), lambda i: (0, 0, 0)),
            ],
            out_specs=pl.BlockSpec((C, L), lambda i: (0, 0)),
        ),
        compiler_params=pltpu.CompilerParams(
            dimension_semantics=("arbitrary",)),
        cost_estimate=pl.CostEstimate(
            flops=flops, transcendentals=0, bytes_accessed=bytes_accessed),
    )(x_flat, w1_k, b1_k, w2_k, b2_k, masks)

    # (C, B*H*W) -> (B, C, H, W)
    return jnp.transpose(out_flat.reshape(C, B, H, W), (1, 0, 2, 3))


def orthogonal_conv_weight(key, out_c, in_c, k, std=1.0):
    """Mimics torch.nn.init.orthogonal_ on a (out_c, in_c, k, k) conv weight."""
    rows, cols = out_c, in_c * k * k
    a = jax.random.normal(key, (max(rows, cols), min(rows, cols)), jnp.float32)
    q, r = jnp.linalg.qr(a)
    q = q * jnp.sign(jnp.diagonal(r))[None, :]
    if rows < cols:
        q = q.T
    return (std * q[:rows, :cols]).reshape(out_c, in_c, k, k)


def _reference(x_nchw, w1, b1, w2, b2, add_skip=True):
    """Plain-JAX reference (NCHW conv, same semantics as torch Conv2d)."""
    dn = lax.conv_dimension_numbers(x_nchw.shape, w1.shape,
                                    ('NCHW', 'OIHW', 'NCHW'))

    def conv(x, w, b):
        y = lax.conv_general_dilated(x, w, (1, 1), 'SAME', dimension_numbers=dn)
        return y + b[None, :, None, None]

    y = jax.nn.relu(conv(x_nchw, w1, b1))
    y = conv(y, w2, b2)
    return jax.nn.relu(x_nchw + y if add_skip else y)


if __name__ == "__main__":
    B, C, H, W = 2, 4, 16, 16
    K = 3  # kernel_size

    key = jax.random.PRNGKey(0)
    kx, k1, k2 = jax.random.split(key, 3)

    x = jax.random.normal(kx, (B, C, H, W), jnp.float32)
    w1 = orthogonal_conv_weight(k1, C, C, K, std=1.0)
    b1 = jnp.zeros((C,), jnp.float32)
    w2 = orthogonal_conv_weight(k2, C, C, K, std=1.0)
    b2 = jnp.zeros((C,), jnp.float32)

    # Skip-connection variant (module default).
    out = residual_layer_forward(x, w1, b1, w2, b2, kernel_size=K)
    out = jax.block_until_ready(out)
    ref = _reference(x, w1, b1, w2, b2, add_skip=True)
    assert out.shape == (B, C, H, W)
    assert jnp.max(jnp.abs(out - ref)) < 1e-4

    # No-skip variant.
    out_ns = residual_layer_forward(x, w1, b1, w2, b2, kernel_size=K,
                                    add_skip_connection=False)
    out_ns = jax.block_until_ready(out_ns)
    ref_ns = _reference(x, w1, b1, w2, b2, add_skip=False)
    assert jnp.max(jnp.abs(out_ns - ref_ns)) < 1e-4

    print("KERNEL_OK")
</pallas_src>

<mosaic_0001>
module attributes {stable_mosaic.version = 11 : i64} {
  func.func @_residual_kernel(%arg0: i32, %arg1: memref<4x512xf32, #tpu.memory_space<vmem>>, %arg2: memref<36x4x1xf32, #tpu.memory_space<vmem>>, %arg3: memref<4x1xf32, #tpu.memory_space<vmem>>, %arg4: memref<36x4x1xf32, #tpu.memory_space<vmem>>, %arg5: memref<4x1xf32, #tpu.memory_space<vmem>>, %arg6: memref<9x1x512xf32, #tpu.memory_space<vmem>>, %arg7: memref<4x512xf32, #tpu.memory_space<vmem>>) attributes {dimension_semantics = [#tpu.dimension_semantics<arbitrary>], iteration_bounds = array<i64: 1>, scalar_prefetch = 0 : i64, scratch_operands = 0 : i64, tpu.core_type = #tpu.core_type<tc>, window_params = [{pipeline_mode = #tpu.pipeline_mode<synchronous>, transform_indices = @transform_0, window_bounds = array<i64: 4, 512>}, {pipeline_mode = #tpu.pipeline_mode<synchronous>, transform_indices = @transform_1, window_bounds = array<i64: 36, 4, 1>}, {pipeline_mode = #tpu.pipeline_mode<synchronous>, transform_indices = @transform_2, window_bounds = array<i64: 4, 1>}, {pipeline_mode = #tpu.pipeline_mode<synchronous>, transform_indices = @transform_3, window_bounds = array<i64: 36, 4, 1>}, {pipeline_mode = #tpu.pipeline_mode<synchronous>, transform_indices = @transform_4, window_bounds = array<i64: 4, 1>}, {pipeline_mode = #tpu.pipeline_mode<synchronous>, transform_indices = @transform_5, window_bounds = array<i64: 9, 1, 512>}, {pipeline_mode = #tpu.pipeline_mode<synchronous>, transform_indices = @transform_6, window_bounds = array<i64: 4, 512>}]} {
    %c0 = arith.constant 0 : index
    %c0_0 = arith.constant 0 : index
    %0 = vector.load %arg1[%c0, %c0_0] : memref<4x512xf32, #tpu.memory_space<vmem>>, vector<4x512xf32>
    %cst = arith.constant 0.000000e+00 : f32
    %1 = vector.broadcast %cst : f32 to vector<4x512xf32>
    %cst_1 = arith.constant 0.000000e+00 : f32
    %2 = vector.broadcast %cst_1 : f32 to vector<4x512xf32>
    %cst_2 = arith.constant 0.000000e+00 : f32
    %3 = vector.broadcast %cst_2 : f32 to vector<4x512xf32>
    %cst_3 = arith.constant 0.000000e+00 : f32
    %4 = vector.broadcast %cst_3 : f32 to vector<4x512xf32>
    %c17_i32 = arith.constant 17 : i32
    %5 = tpu.dynamic_rotate %0 by %c17_i32 dim 1 : vector<4x512xf32>, i32 -> vector<4x512xf32>
    %c0_4 = arith.constant 0 : index
    %c0_5 = arith.constant 0 : index
    %c0_6 = arith.constant 0 : index
    %6 = vector.load %arg6[%c0_4, %c0_5, %c0_6] : memref<9x1x512xf32, #tpu.memory_space<vmem>>, vector<1x1x512xf32>
    %7 = vector.shape_cast %6 : vector<1x1x512xf32> to vector<1x512xf32>
    %8 = vector.broadcast %7 : vector<1x512xf32> to vector<4x512xf32>
    %9 = arith.mulf %5, %8 : vector<4x512xf32>
    %c0_7 = arith.constant 0 : index
    %c0_8 = arith.constant 0 : index
    %c0_9 = arith.constant 0 : index
    %10 = vector.load %arg2[%c0_7, %c0_8, %c0_9] : memref<36x4x1xf32, #tpu.memory_space<vmem>>, vector<1x4x1xf32>
    %11 = vector.shape_cast %10 : vector<1x4x1xf32> to vector<4x1xf32>
    %12 = vector.extract_strided_slice %9 {offsets = [0, 0], sizes = [1, 512], strides = [1, 1]} : vector<4x512xf32> to vector<1x512xf32>
    %13 = vector.broadcast %11 : vector<4x1xf32> to vector<4x512xf32>
    %14 = vector.broadcast %12 : vector<1x512xf32> to vector<4x512xf32>
    %15 = arith.mulf %13, %14 : vector<4x512xf32>
    %16 = arith.addf %1, %15 : vector<4x512xf32>
    %c1 = arith.constant 1 : index
    %c0_10 = arith.constant 0 : index
    %c0_11 = arith.constant 0 : index
    %17 = vector.load %arg2[%c1, %c0_10, %c0_11] : memref<36x4x1xf32, #tpu.memory_space<vmem>>, vector<1x4x1xf32>
    %18 = vector.shape_cast %17 : vector<1x4x1xf32> to vector<4x1xf32>
    %19 = vector.extract_strided_slice %9 {offsets = [1, 0], sizes = [1, 512], strides = [1, 1]} : vector<4x512xf32> to vector<1x512xf32>
    %20 = vector.broadcast %18 : vector<4x1xf32> to vector<4x512xf32>
    %21 = vector.broadcast %19 : vector<1x512xf32> to vector<4x512xf32>
    %22 = arith.mulf %20, %21 : vector<4x512xf32>
    %23 = arith.addf %2, %22 : vector<4x512xf32>
    %c2 = arith.constant 2 : index
    %c0_12 = arith.constant 0 : index
    %c0_13 = arith.constant 0 : index
    %24 = vector.load %arg2[%c2, %c0_12, %c0_13] : memref<36x4x1xf32, #tpu.memory_space<vmem>>, vector<1x4x1xf32>
    %25 = vector.shape_cast %24 : vector<1x4x1xf32> to vector<4x1xf32>
    %26 = vector.extract_strided_slice %9 {offsets = [2, 0], sizes = [1, 512], strides = [1, 1]} : vector<4x512xf32> to vector<1x512xf32>
    %27 = vector.broadcast %25 : vector<4x1xf32> to vector<4x512xf32>
    %28 = vector.broadcast %26 : vector<1x512xf32> to vector<4x512xf32>
    %29 = arith.mulf %27, %28 : vector<4x512xf32>
    %30 = arith.addf %3, %29 : vector<4x512xf32>
    %c3 = arith.constant 3 : index
    %c0_14 = arith.constant 0 : index
    %c0_15 = arith.constant 0 : index
    %31 = vector.load %arg2[%c3, %c0_14, %c0_15] : memref<36x4x1xf32, #tpu.memory_space<vmem>>, vector<1x4x1xf32>
    %32 = vector.shape_cast %31 : vector<1x4x1xf32> to vector<4x1xf32>
    %33 = vector.extract_strided_slice %9 {offsets = [3, 0], sizes = [1, 512], strides = [1, 1]} : vector<4x512xf32> to vector<1x512xf32>
    %34 = vector.broadcast %32 : vector<4x1xf32> to vector<4x512xf32>
    %35 = vector.broadcast %33 : vector<1x512xf32> to vector<4x512xf32>
    %36 = arith.mulf %34, %35 : vector<4x512xf32>
    %37 = arith.addf %4, %36 : vector<4x512xf32>
    %c16_i32 = arith.constant 16 : i32
    %38 = tpu.dynamic_rotate %0 by %c16_i32 dim 1 : vector<4x512xf32>, i32 -> vector<4x512xf32>
    %c1_16 = arith.constant 1 : index
    %c0_17 = arith.constant 0 : index
    %c0_18 = arith.constant 0 : index
    %39 = vector.load %arg6[%c1_16, %c0_17, %c0_18] : memref<9x1x512xf32, #tpu.memory_space<vmem>>, vector<1x1x512xf32>
    %40 = vector.shape_cast %39 : vector<1x1x512xf32> to vector<1x512xf32>
    %41 = vector.broadcast %40 : vector<1x512xf32> to vector<4x512xf32>
    %42 = arith.mulf %38, %41 : vector<4x512xf32>
    %c4 = arith.constant 4 : index
    %c0_19 = arith.constant 0 : index
    %c0_20 = arith.constant 0 : index
    %43 = vector.load %arg2[%c4, %c0_19, %c0_20] : memref<36x4x1xf32, #tpu.memory_space<vmem>>, vector<1x4x1xf32>
    %44 = vector.shape_cast %43 : vector<1x4x1xf32> to vector<4x1xf32>
    %45 = vector.extract_strided_slice %42 {offsets = [0, 0], sizes = [1, 512], strides = [1, 1]} : vector<4x512xf32> to vector<1x512xf32>
    %46 = vector.broadcast %44 : vector<4x1xf32> to vector<4x512xf32>
    %47 = vector.broadcast %45 : vector<1x512xf32> to vector<4x512xf32>
    %48 = arith.mulf %46, %47 : vector<4x512xf32>
    %49 = arith.addf %16, %48 : vector<4x512xf32>
    %c5 = arith.constant 5 : index
    %c0_21 = arith.constant 0 : index
    %c0_22 = arith.constant 0 : index
    %50 = vector.load %arg2[%c5, %c0_21, %c0_22] : memref<36x4x1xf32, #tpu.memory_space<vmem>>, vector<1x4x1xf32>
    %51 = vector.shape_cast %50 : vector<1x4x1xf32> to vector<4x1xf32>
    %52 = vector.extract_strided_slice %42 {offsets = [1, 0], sizes = [1, 512], strides = [1, 1]} : vector<4x512xf32> to vector<1x512xf32>
    %53 = vector.broadcast %51 : vector<4x1xf32> to vector<4x512xf32>
    %54 = vector.broadcast %52 : vector<1x512xf32> to vector<4x512xf32>
    %55 = arith.mulf %53, %54 : vector<4x512xf32>
    %56 = arith.addf %23, %55 : vector<4x512xf32>
    %c6 = arith.constant 6 : index
    %c0_23 = arith.constant 0 : index
    %c0_24 = arith.constant 0 : index
    %57 = vector.load %arg2[%c6, %c0_23, %c0_24] : memref<36x4x1xf32, #tpu.memory_space<vmem>>, vector<1x4x1xf32>
    %58 = vector.shape_cast %57 : vector<1x4x1xf32> to vector<4x1xf32>
    %59 = vector.extract_strided_slice %42 {offsets = [2, 0], sizes = [1, 512], strides = [1, 1]} : vector<4x512xf32> to vector<1x512xf32>
    %60 = vector.broadcast %58 : vector<4x1xf32> to vector<4x512xf32>
    %61 = vector.broadcast %59 : vector<1x512xf32> to vector<4x512xf32>
    %62 = arith.mulf %60, %61 : vector<4x512xf32>
    %63 = arith.addf %30, %62 : vector<4x512xf32>
    %c7 = arith.constant 7 : index
    %c0_25 = arith.constant 0 : index
    %c0_26 = arith.constant 0 : index
    %64 = vector.load %arg2[%c7, %c0_25, %c0_26] : memref<36x4x1xf32, #tpu.memory_space<vmem>>, vector<1x4x1xf32>
    %65 = vector.shape_cast %64 : vector<1x4x1xf32> to vector<4x1xf32>
    %66 = vector.extract_strided_slice %42 {offsets = [3, 0], sizes = [1, 512], strides = [1, 1]} : vector<4x512xf32> to vector<1x512xf32>
    %67 = vector.broadcast %65 : vector<4x1xf32> to vector<4x512xf32>
    %68 = vector.broadcast %66 : vector<1x512xf32> to vector<4x512xf32>
    %69 = arith.mulf %67, %68 : vector<4x512xf32>
    %70 = arith.addf %37, %69 : vector<4x512xf32>
    %c15_i32 = arith.constant 15 : i32
    %71 = tpu.dynamic_rotate %0 by %c15_i32 dim 1 : vector<4x512xf32>, i32 -> vector<4x512xf32>
    %c2_27 = arith.constant 2 : index
    %c0_28 = arith.constant 0 : index
    %c0_29 = arith.constant 0 : index
    %72 = vector.load %arg6[%c2_27, %c0_28, %c0_29] : memref<9x1x512xf32, #tpu.memory_space<vmem>>, vector<1x1x512xf32>
    %73 = vector.shape_cast %72 : vector<1x1x512xf32> to vector<1x512xf32>
    %74 = vector.broadcast %73 : vector<1x512xf32> to vector<4x512xf32>
    %75 = arith.mulf %71, %74 : vector<4x512xf32>
    %c8 = arith.constant 8 : index
    %c0_30 = arith.constant 0 : index
    %c0_31 = arith.constant 0 : index
    %76 = vector.load %arg2[%c8, %c0_30, %c0_31] : memref<36x4x1xf32, #tpu.memory_space<vmem>>, vector<1x4x1xf32>
    %77 = vector.shape_cast %76 : vector<1x4x1xf32> to vector<4x1xf32>
    %78 = vector.extract_strided_slice %75 {offsets = [0, 0], sizes = [1, 512], strides = [1, 1]} : vector<4x512xf32> to vector<1x512xf32>
    %79 = vector.broadcast %77 : vector<4x1xf32> to vector<4x512xf32>
    %80 = vector.broadcast %78 : vector<1x512xf32> to vector<4x512xf32>
    %81 = arith.mulf %79, %80 : vector<4x512xf32>
    %82 = arith.addf %49, %81 : vector<4x512xf32>
    %c9 = arith.constant 9 : index
    %c0_32 = arith.constant 0 : index
    %c0_33 = arith.constant 0 : index
    %83 = vector.load %arg2[%c9, %c0_32, %c0_33] : memref<36x4x1xf32, #tpu.memory_space<vmem>>, vector<1x4x1xf32>
    %84 = vector.shape_cast %83 : vector<1x4x1xf32> to vector<4x1xf32>
    %85 = vector.extract_strided_slice %75 {offsets = [1, 0], sizes = [1, 512], strides = [1, 1]} : vector<4x512xf32> to vector<1x512xf32>
    %86 = vector.broadcast %84 : vector<4x1xf32> to vector<4x512xf32>
    %87 = vector.broadcast %85 : vector<1x512xf32> to vector<4x512xf32>
    %88 = arith.mulf %86, %87 : vector<4x512xf32>
    %89 = arith.addf %56, %88 : vector<4x512xf32>
    %c10 = arith.constant 10 : index
    %c0_34 = arith.constant 0 : index
    %c0_35 = arith.constant 0 : index
    %90 = vector.load %arg2[%c10, %c0_34, %c0_35] : memref<36x4x1xf32, #tpu.memory_space<vmem>>, vector<1x4x1xf32>
    %91 = vector.shape_cast %90 : vector<1x4x1xf32> to vector<4x1xf32>
    %92 = vector.extract_strided_slice %75 {offsets = [2, 0], sizes = [1, 512], strides = [1, 1]} : vector<4x512xf32> to vector<1x512xf32>
    %93 = vector.broadcast %91 : vector<4x1xf32> to vector<4x512xf32>
    %94 = vector.broadcast %92 : vector<1x512xf32> to vector<4x512xf32>
    %95 = arith.mulf %93, %94 : vector<4x512xf32>
    %96 = arith.addf %63, %95 : vector<4x512xf32>
    %c11 = arith.constant 11 : index
    %c0_36 = arith.constant 0 : index
    %c0_37 = arith.constant 0 : index
    %97 = vector.load %arg2[%c11, %c0_36, %c0_37] : memref<36x4x1xf32, #tpu.memory_space<vmem>>, vector<1x4x1xf32>
    %98 = vector.shape_cast %97 : vector<1x4x1xf32> to vector<4x1xf32>
    %99 = vector.extract_strided_slice %75 {offsets = [3, 0], sizes = [1, 512], strides = [1, 1]} : vector<4x512xf32> to vector<1x512xf32>
    %100 = vector.broadcast %98 : vector<4x1xf32> to vector<4x512xf32>
    %101 = vector.broadcast %99 : vector<1x512xf32> to vector<4x512xf32>
    %102 = arith.mulf %100, %101 : vector<4x512xf32>
    %103 = arith.addf %70, %102 : vector<4x512xf32>
    %c1_i32 = arith.constant 1 : i32
    %104 = tpu.dynamic_rotate %0 by %c1_i32 dim 1 : vector<4x512xf32>, i32 -> vector<4x512xf32>
    %c3_38 = arith.constant 3 : index
    %c0_39 = arith.constant 0 : index
    %c0_40 = arith.constant 0 : index
    %105 = vector.load %arg6[%c3_38, %c0_39, %c0_40] : memref<9x1x512xf32, #tpu.memory_space<vmem>>, vector<1x1x512xf32>
    %106 = vector.shape_cast %105 : vector<1x1x512xf32> to vector<1x512xf32>
    %107 = vector.broadcast %106 : vector<1x512xf32> to vector<4x512xf32>
    %108 = arith.mulf %104, %107 : vector<4x512xf32>
    %c12 = arith.constant 12 : index
    %c0_41 = arith.constant 0 : index
    %c0_42 = arith.constant 0 : index
    %109 = vector.load %arg2[%c12, %c0_41, %c0_42] : memref<36x4x1xf32, #tpu.memory_space<vmem>>, vector<1x4x1xf32>
    %110 = vector.shape_cast %109 : vector<1x4x1xf32> to vector<4x1xf32>
    %111 = vector.extract_strided_slice %108 {offsets = [0, 0], sizes = [1, 512], strides = [1, 1]} : vector<4x512xf32> to vector<1x512xf32>
    %112 = vector.broadcast %110 : vector<4x1xf32> to vector<4x512xf32>
    %113 = vector.broadcast %111 : vector<1x512xf32> to vector<4x512xf32>
    %114 = arith.mulf %112, %113 : vector<4x512xf32>
    %115 = arith.addf %82, %114 : vector<4x512xf32>
    %c13 = arith.constant 13 : index
    %c0_43 = arith.constant 0 : index
    %c0_44 = arith.constant 0 : index
    %116 = vector.load %arg2[%c13, %c0_43, %c0_44] : memref<36x4x1xf32, #tpu.memory_space<vmem>>, vector<1x4x1xf32>
    %117 = vector.shape_cast %116 : vector<1x4x1xf32> to vector<4x1xf32>
    %118 = vector.extract_strided_slice %108 {offsets = [1, 0], sizes = [1, 512], strides = [1, 1]} : vector<4x512xf32> to vector<1x512xf32>
    %119 = vector.broadcast %117 : vector<4x1xf32> to vector<4x512xf32>
    %120 = vector.broadcast %118 : vector<1x512xf32> to vector<4x512xf32>
    %121 = arith.mulf %119, %120 : vector<4x512xf32>
    %122 = arith.addf %89, %121 : vector<4x512xf32>
    %c14 = arith.constant 14 : index
    %c0_45 = arith.constant 0 : index
    %c0_46 = arith.constant 0 : index
    %123 = vector.load %arg2[%c14, %c0_45, %c0_46] : memref<36x4x1xf32, #tpu.memory_space<vmem>>, vector<1x4x1xf32>
    %124 = vector.shape_cast %123 : vector<1x4x1xf32> to vector<4x1xf32>
    %125 = vector.extract_strided_slice %108 {offsets = [2, 0], sizes = [1, 512], strides = [1, 1]} : vector<4x512xf32> to vector<1x512xf32>
    %126 = vector.broadcast %124 : vector<4x1xf32> to vector<4x512xf32>
    %127 = vector.broadcast %125 : vector<1x512xf32> to vector<4x512xf32>
    %128 = arith.mulf %126, %127 : vector<4x512xf32>
    %129 = arith.addf %96, %128 : vector<4x512xf32>
    %c15 = arith.constant 15 : index
    %c0_47 = arith.constant 0 : index
    %c0_48 = arith.constant 0 : index
    %130 = vector.load %arg2[%c15, %c0_47, %c0_48] : memref<36x4x1xf32, #tpu.memory_space<vmem>>, vector<1x4x1xf32>
    %131 = vector.shape_cast %130 : vector<1x4x1xf32> to vector<4x1xf32>
    %132 = vector.extract_strided_slice %108 {offsets = [3, 0], sizes = [1, 512], strides = [1, 1]} : vector<4x512xf32> to vector<1x512xf32>
    %133 = vector.broadcast %131 : vector<4x1xf32> to vector<4x512xf32>
    %134 = vector.broadcast %132 : vector<1x512xf32> to vector<4x512xf32>
    %135 = arith.mulf %133, %134 : vector<4x512xf32>
    %136 = arith.addf %103, %135 : vector<4x512xf32>
    %c16 = arith.constant 16 : index
    %c0_49 = arith.constant 0 : index
    %c0_50 = arith.constant 0 : index
    %137 = vector.load %arg2[%c16, %c0_49, %c0_50] : memref<36x4x1xf32, #tpu.memory_space<vmem>>, vector<1x4x1xf32>
    %138 = vector.shape_cast %137 : vector<1x4x1xf32> to vector<4x1xf32>
    %139 = vector.extract_strided_slice %0 {offsets = [0, 0], sizes = [1, 512], strides = [1, 1]} : vector<4x512xf32> to vector<1x512xf32>
    %140 = vector.broadcast %138 : vector<4x1xf32> to vector<4x512xf32>
    %141 = vector.broadcast %139 : vector<1x512xf32> to vector<4x512xf32>
    %142 = arith.mulf %140, %141 : vector<4x512xf32>
    %143 = arith.addf %115, %142 : vector<4x512xf32>
    %c17 = arith.constant 17 : index
    %c0_51 = arith.constant 0 : index
    %c0_52 = arith.constant 0 : index
    %144 = vector.load %arg2[%c17, %c0_51, %c0_52] : memref<36x4x1xf32, #tpu.memory_space<vmem>>, vector<1x4x1xf32>
    %145 = vector.shape_cast %144 : vector<1x4x1xf32> to vector<4x1xf32>
    %146 = vector.extract_strided_slice %0 {offsets = [1, 0], sizes = [1, 512], strides = [1, 1]} : vector<4x512xf32> to vector<1x512xf32>
    %147 = vector.broadcast %145 : vector<4x1xf32> to vector<4x512xf32>
    %148 = vector.broadcast %146 : vector<1x512xf32> to vector<4x512xf32>
    %149 = arith.mulf %147, %148 : vector<4x512xf32>
    %150 = arith.addf %122, %149 : vector<4x512xf32>
    %c18 = arith.constant 18 : index
    %c0_53 = arith.constant 0 : index
    %c0_54 = arith.constant 0 : index
    %151 = vector.load %arg2[%c18, %c0_53, %c0_54] : memref<36x4x1xf32, #tpu.memory_space<vmem>>, vector<1x4x1xf32>
    %152 = vector.shape_cast %151 : vector<1x4x1xf32> to vector<4x1xf32>
    %153 = vector.extract_strided_slice %0 {offsets = [2, 0], sizes = [1, 512], strides = [1, 1]} : vector<4x512xf32> to vector<1x512xf32>
    %154 = vector.broadcast %152 : vector<4x1xf32> to vector<4x512xf32>
    %155 = vector.broadcast %153 : vector<1x512xf32> to vector<4x512xf32>
    %156 = arith.mulf %154, %155 : vector<4x512xf32>
    %157 = arith.addf %129, %156 : vector<4x512xf32>
    %c19 = arith.constant 19 : index
    %c0_55 = arith.constant 0 : index
    %c0_56 = arith.constant 0 : index
    %158 = vector.load %arg2[%c19, %c0_55, %c0_56] : memref<36x4x1xf32, #tpu.memory_space<vmem>>, vector<1x4x1xf32>
    %159 = vector.shape_cast %158 : vector<1x4x1xf32> to vector<4x1xf32>
    %160 = vector.extract_strided_slice %0 {offsets = [3, 0], sizes = [1, 512], strides = [1, 1]} : vector<4x512xf32> to vector<1x512xf32>
    %161 = vector.broadcast %159 : vector<4x1xf32> to vector<4x512xf32>
    %162 = vector.broadcast %160 : vector<1x512xf32> to vector<4x512xf32>
    %163 = arith.mulf %161, %162 : vector<4x512xf32>
    %164 = arith.addf %136, %163 : vector<4x512xf32>
    %c511_i32 = arith.constant 511 : i32
    %165 = tpu.dynamic_rotate %0 by %c511_i32 dim 1 : vector<4x512xf32>, i32 -> vector<4x512xf32>
    %c5_57 = arith.constant 5 : index
    %c0_58 = arith.constant 0 : index
    %c0_59 = arith.constant 0 : index
    %166 = vector.load %arg6[%c5_57, %c0_58, %c0_59] : memref<9x1x512xf32, #tpu.memory_space<vmem>>, vector<1x1x512xf32>
    %167 = vector.shape_cast %166 : vector<1x1x512xf32> to vector<1x512xf32>
    %168 = vector.broadcast %167 : vector<1x512xf32> to vector<4x512xf32>
    %169 = arith.mulf %165, %168 : vector<4x512xf32>
    %c20 = arith.constant 20 : index
    %c0_60 = arith.constant 0 : index
    %c0_61 = arith.constant 0 : index
    %170 = vector.load %arg2[%c20, %c0_60, %c0_61] : memref<36x4x1xf32, #tpu.memory_space<vmem>>, vector<1x4x1xf32>
    %171 = vector.shape_cast %170 : vector<1x4x1xf32> to vector<4x1xf32>
    %172 = vector.extract_strided_slice %169 {offsets = [0, 0], sizes = [1, 512], strides = [1, 1]} : vector<4x512xf32> to vector<1x512xf32>
    %173 = vector.broadcast %171 : vector<4x1xf32> to vector<4x512xf32>
    %174 = vector.broadcast %172 : vector<1x512xf32> to vector<4x512xf32>
    %175 = arith.mulf %173, %174 : vector<4x512xf32>
    %176 = arith.addf %143, %175 : vector<4x512xf32>
    %c21 = arith.constant 21 : index
    %c0_62 = arith.constant 0 : index
    %c0_63 = arith.constant 0 : index
    %177 = vector.load %arg2[%c21, %c0_62, %c0_63] : memref<36x4x1xf32, #tpu.memory_space<vmem>>, vector<1x4x1xf32>
    %178 = vector.shape_cast %177 : vector<1x4x1xf32> to vector<4x1xf32>
    %179 = vector.extract_strided_slice %169 {offsets = [1, 0], sizes = [1, 512], strides = [1, 1]} : vector<4x512xf32> to vector<1x512xf32>
    %180 = vector.broadcast %178 : vector<4x1xf32> to vector<4x512xf32>
    %181 = vector.broadcast %179 : vector<1x512xf32> to vector<4x512xf32>
    %182 = arith.mulf %180, %181 : vector<4x512xf32>
    %183 = arith.addf %150, %182 : vector<4x512xf32>
    %c22 = arith.constant 22 : index
    %c0_64 = arith.constant 0 : index
    %c0_65 = arith.constant 0 : index
    %184 = vector.load %arg2[%c22, %c0_64, %c0_65] : memref<36x4x1xf32, #tpu.memory_space<vmem>>, vector<1x4x1xf32>
    %185 = vector.shape_cast %184 : vector<1x4x1xf32> to vector<4x1xf32>
    %186 = vector.extract_strided_slice %169 {offsets = [2, 0], sizes = [1, 512], strides = [1, 1]} : vector<4x512xf32> to vector<1x512xf32>
    %187 = vector.broadcast %185 : vector<4x1xf32> to vector<4x512xf32>
    %188 = vector.broadcast %186 : vector<1x512xf32> to vector<4x512xf32>
    %189 = arith.mulf %187, %188 : vector<4x512xf32>
    %190 = arith.addf %157, %189 : vector<4x512xf32>
    %c23 = arith.constant 23 : index
    %c0_66 = arith.constant 0 : index
    %c0_67 = arith.constant 0 : index
    %191 = vector.load %arg2[%c23, %c0_66, %c0_67] : memref<36x4x1xf32, #tpu.memory_space<vmem>>, vector<1x4x1xf32>
    %192 = vector.shape_cast %191 : vector<1x4x1xf32> to vector<4x1xf32>
    %193 = vector.extract_strided_slice %169 {offsets = [3, 0], sizes = [1, 512], strides = [1, 1]} : vector<4x512xf32> to vector<1x512xf32>
    %194 = vector.broadcast %192 : vector<4x1xf32> to vector<4x512xf32>
    %195 = vector.broadcast %193 : vector<1x512xf32> to vector<4x512xf32>
    %196 = arith.mulf %194, %195 : vector<4x512xf32>
    %197 = arith.addf %164, %196 : vector<4x512xf32>
    %c497_i32 = arith.constant 497 : i32
    %198 = tpu.dynamic_rotate %0 by %c497_i32 dim 1 : vector<4x512xf32>, i32 -> vector<4x512xf32>
    %c6_68 = arith.constant 6 : index
    %c0_69 = arith.constant 0 : index
    %c0_70 = arith.constant 0 : index
    %199 = vector.load %arg6[%c6_68, %c0_69, %c0_70] : memref<9x1x512xf32, #tpu.memory_space<vmem>>, vector<1x1x512xf32>
    %200 = vector.shape_cast %199 : vector<1x1x512xf32> to vector<1x512xf32>
    %201 = vector.broadcast %200 : vector<1x512xf32> to vector<4x512xf32>
    %202 = arith.mulf %198, %201 : vector<4x512xf32>
    %c24 = arith.constant 24 : index
    %c0_71 = arith.constant 0 : index
    %c0_72 = arith.constant 0 : index
    %203 = vector.load %arg2[%c24, %c0_71, %c0_72] : memref<36x4x1xf32, #tpu.memory_space<vmem>>, vector<1x4x1xf32>
    %204 = vector.shape_cast %203 : vector<1x4x1xf32> to vector<4x1xf32>
    %205 = vector.extract_strided_slice %202 {offsets = [0, 0], sizes = [1, 512], strides = [1, 1]} : vector<4x512xf32> to vector<1x512xf32>
    %206 = vector.broadcast %204 : vector<4x1xf32> to vector<4x512xf32>
    %207 = vector.broadcast %205 : vector<1x512xf32> to vector<4x512xf32>
    %208 = arith.mulf %206, %207 : vector<4x512xf32>
    %209 = arith.addf %176, %208 : vector<4x512xf32>
    %c25 = arith.constant 25 : index
    %c0_73 = arith.constant 0 : index
    %c0_74 = arith.constant 0 : index
    %210 = vector.load %arg2[%c25, %c0_73, %c0_74] : memref<36x4x1xf32, #tpu.memory_space<vmem>>, vector<1x4x1xf32>
    %211 = vector.shape_cast %210 : vector<1x4x1xf32> to vector<4x1xf32>
    %212 = vector.extract_strided_slice %202 {offsets = [1, 0], sizes = [1, 512], strides = [1, 1]} : vector<4x512xf32> to vector<1x512xf32>
    %213 = vector.broadcast %211 : vector<4x1xf32> to vector<4x512xf32>
    %214 = vector.broadcast %212 : vector<1x512xf32> to vector<4x512xf32>
    %215 = arith.mulf %213, %214 : vector<4x512xf32>
    %216 = arith.addf %183, %215 : vector<4x512xf32>
    %c26 = arith.constant 26 : index
    %c0_75 = arith.constant 0 : index
    %c0_76 = arith.constant 0 : index
    %217 = vector.load %arg2[%c26, %c0_75, %c0_76] : memref<36x4x1xf32, #tpu.memory_space<vmem>>, vector<1x4x1xf32>
    %218 = vector.shape_cast %217 : vector<1x4x1xf32> to vector<4x1xf32>
    %219 = vector.extract_strided_slice %202 {offsets = [2, 0], sizes = [1, 512], strides = [1, 1]} : vector<4x512xf32> to vector<1x512xf32>
    %220 = vector.broadcast %218 : vector<4x1xf32> to vector<4x512xf32>
    %221 = vector.broadcast %219 : vector<1x512xf32> to vector<4x512xf32>
    %222 = arith.mulf %220, %221 : vector<4x512xf32>
    %223 = arith.addf %190, %222 : vector<4x512xf32>
    %c27 = arith.constant 27 : index
    %c0_77 = arith.constant 0 : index
    %c0_78 = arith.constant 0 : index
    %224 = vector.load %arg2[%c27, %c0_77, %c0_78] : memref<36x4x1xf32, #tpu.memory_space<vmem>>, vector<1x4x1xf32>
    %225 = vector.shape_cast %224 : vector<1x4x1xf32> to vector<4x1xf32>
    %226 = vector.extract_strided_slice %202 {offsets = [3, 0], sizes = [1, 512], strides = [1, 1]} : vector<4x512xf32> to vector<1x512xf32>
    %227 = vector.broadcast %225 : vector<4x1xf32> to vector<4x512xf32>
    %228 = vector.broadcast %226 : vector<1x512xf32> to vector<4x512xf32>
    %229 = arith.mulf %227, %228 : vector<4x512xf32>
    %230 = arith.addf %197, %229 : vector<4x512xf32>
    %c496_i32 = arith.constant 496 : i32
    %231 = tpu.dynamic_rotate %0 by %c496_i32 dim 1 : vector<4x512xf32>, i32 -> vector<4x512xf32>
    %c7_79 = arith.constant 7 : index
    %c0_80 = arith.constant 0 : index
    %c0_81 = arith.constant 0 : index
    %232 = vector.load %arg6[%c7_79, %c0_80, %c0_81] : memref<9x1x512xf32, #tpu.memory_space<vmem>>, vector<1x1x512xf32>
    %233 = vector.shape_cast %232 : vector<1x1x512xf32> to vector<1x512xf32>
    %234 = vector.broadcast %233 : vector<1x512xf32> to vector<4x512xf32>
    %235 = arith.mulf %231, %234 : vector<4x512xf32>
    %c28 = arith.constant 28 : index
    %c0_82 = arith.constant 0 : index
    %c0_83 = arith.constant 0 : index
    %236 = vector.load %arg2[%c28, %c0_82, %c0_83] : memref<36x4x1xf32, #tpu.memory_space<vmem>>, vector<1x4x1xf32>
    %237 = vector.shape_cast %236 : vector<1x4x1xf32> to vector<4x1xf32>
    %238 = vector.extract_strided_slice %235 {offsets = [0, 0], sizes = [1, 512], strides = [1, 1]} : vector<4x512xf32> to vector<1x512xf32>
    %239 = vector.broadcast %237 : vector<4x1xf32> to vector<4x512xf32>
    %240 = vector.broadcast %238 : vector<1x512xf32> to vector<4x512xf32>
    %241 = arith.mulf %239, %240 : vector<4x512xf32>
    %242 = arith.addf %209, %241 : vector<4x512xf32>
    %c29 = arith.constant 29 : index
    %c0_84 = arith.constant 0 : index
    %c0_85 = arith.constant 0 : index
    %243 = vector.load %arg2[%c29, %c0_84, %c0_85] : memref<36x4x1xf32, #tpu.memory_space<vmem>>, vector<1x4x1xf32>
    %244 = vector.shape_cast %243 : vector<1x4x1xf32> to vector<4x1xf32>
    %245 = vector.extract_strided_slice %235 {offsets = [1, 0], sizes = [1, 512], strides = [1, 1]} : vector<4x512xf32> to vector<1x512xf32>
    %246 = vector.broadcast %244 : vector<4x1xf32> to vector<4x512xf32>
    %247 = vector.broadcast %245 : vector<1x512xf32> to vector<4x512xf32>
    %248 = arith.mulf %246, %247 : vector<4x512xf32>
    %249 = arith.addf %216, %248 : vector<4x512xf32>
    %c30 = arith.constant 30 : index
    %c0_86 = arith.constant 0 : index
    %c0_87 = arith.constant 0 : index
    %250 = vector.load %arg2[%c30, %c0_86, %c0_87] : memref<36x4x1xf32, #tpu.memory_space<vmem>>, vector<1x4x1xf32>
    %251 = vector.shape_cast %250 : vector<1x4x1xf32> to vector<4x1xf32>
    %252 = vector.extract_strided_slice %235 {offsets = [2, 0], sizes = [1, 512], strides = [1, 1]} : vector<4x512xf32> to vector<1x512xf32>
    %253 = vector.broadcast %251 : vector<4x1xf32> to vector<4x512xf32>
    %254 = vector.broadcast %252 : vector<1x512xf32> to vector<4x512xf32>
    %255 = arith.mulf %253, %254 : vector<4x512xf32>
    %256 = arith.addf %223, %255 : vector<4x512xf32>
    %c31 = arith.constant 31 : index
    %c0_88 = arith.constant 0 : index
    %c0_89 = arith.constant 0 : index
    %257 = vector.load %arg2[%c31, %c0_88, %c0_89] : memref<36x4x1xf32, #tpu.memory_space<vmem>>, vector<1x4x1xf32>
    %258 = vector.shape_cast %257 : vector<1x4x1xf32> to vector<4x1xf32>
    %259 = vector.extract_strided_slice %235 {offsets = [3, 0], sizes = [1, 512], strides = [1, 1]} : vector<4x512xf32> to vector<1x512xf32>
    %260 = vector.broadcast %258 : vector<4x1xf32> to vector<4x512xf32>
    %261 = vector.broadcast %259 : vector<1x512xf32> to vector<4x512xf32>
    %262 = arith.mulf %260, %261 : vector<4x512xf32>
    %263 = arith.addf %230, %262 : vector<4x512xf32>
    %c495_i32 = arith.constant 495 : i32
    %264 = tpu.dynamic_rotate %0 by %c495_i32 dim 1 : vector<4x512xf32>, i32 -> vector<4x512xf32>
    %c8_90 = arith.constant 8 : index
    %c0_91 = arith.constant 0 : index
    %c0_92 = arith.constant 0 : index
    %265 = vector.load %arg6[%c8_90, %c0_91, %c0_92] : memref<9x1x512xf32, #tpu.memory_space<vmem>>, vector<1x1x512xf32>
    %266 = vector.shape_cast %265 : vector<1x1x512xf32> to vector<1x512xf32>
    %267 = vector.broadcast %266 : vector<1x512xf32> to vector<4x512xf32>
    %268 = arith.mulf %264, %267 : vector<4x512xf32>
    %c32 = arith.constant 32 : index
    %c0_93 = arith.constant 0 : index
    %c0_94 = arith.constant 0 : index
    %269 = vector.load %arg2[%c32, %c0_93, %c0_94] : memref<36x4x1xf32, #tpu.memory_space<vmem>>, vector<1x4x1xf32>
    %270 = vector.shape_cast %269 : vector<1x4x1xf32> to vector<4x1xf32>
    %271 = vector.extract_strided_slice %268 {offsets = [0, 0], sizes = [1, 512], strides = [1, 1]} : vector<4x512xf32> to vector<1x512xf32>
    %272 = vector.broadcast %270 : vector<4x1xf32> to vector<4x512xf32>
    %273 = vector.broadcast %271 : vector<1x512xf32> to vector<4x512xf32>
    %274 = arith.mulf %272, %273 : vector<4x512xf32>
    %275 = arith.addf %242, %274 : vector<4x512xf32>
    %c33 = arith.constant 33 : index
    %c0_95 = arith.constant 0 : index
    %c0_96 = arith.constant 0 : index
    %276 = vector.load %arg2[%c33, %c0_95, %c0_96] : memref<36x4x1xf32, #tpu.memory_space<vmem>>, vector<1x4x1xf32>
    %277 = vector.shape_cast %276 : vector<1x4x1xf32> to vector<4x1xf32>
    %278 = vector.extract_strided_slice %268 {offsets = [1, 0], sizes = [1, 512], strides = [1, 1]} : vector<4x512xf32> to vector<1x512xf32>
    %279 = vector.broadcast %277 : vector<4x1xf32> to vector<4x512xf32>
    %280 = vector.broadcast %278 : vector<1x512xf32> to vector<4x512xf32>
    %281 = arith.mulf %279, %280 : vector<4x512xf32>
    %282 = arith.addf %249, %281 : vector<4x512xf32>
    %c34 = arith.constant 34 : index
    %c0_97 = arith.constant 0 : index
    %c0_98 = arith.constant 0 : index
    %283 = vector.load %arg2[%c34, %c0_97, %c0_98] : memref<36x4x1xf32, #tpu.memory_space<vmem>>, vector<1x4x1xf32>
    %284 = vector.shape_cast %283 : vector<1x4x1xf32> to vector<4x1xf32>
    %285 = vector.extract_strided_slice %268 {offsets = [2, 0], sizes = [1, 512], strides = [1, 1]} : vector<4x512xf32> to vector<1x512xf32>
    %286 = vector.broadcast %284 : vector<4x1xf32> to vector<4x512xf32>
    %287 = vector.broadcast %285 : vector<1x512xf32> to vector<4x512xf32>
    %288 = arith.mulf %286, %287 : vector<4x512xf32>
    %289 = arith.addf %256, %288 : vector<4x512xf32>
    %c35 = arith.constant 35 : index
    %c0_99 = arith.constant 0 : index
    %c0_100 = arith.constant 0 : index
    %290 = vector.load %arg2[%c35, %c0_99, %c0_100] : memref<36x4x1xf32, #tpu.memory_space<vmem>>, vector<1x4x1xf32>
    %291 = vector.shape_cast %290 : vector<1x4x1xf32> to vector<4x1xf32>
    %292 = vector.extract_strided_slice %268 {offsets = [3, 0], sizes = [1, 512], strides = [1, 1]} : vector<4x512xf32> to vector<1x512xf32>
    %293 = vector.broadcast %291 : vector<4x1xf32> to vector<4x512xf32>
    %294 = vector.broadcast %292 : vector<1x512xf32> to vector<4x512xf32>
    %295 = arith.mulf %293, %294 : vector<4x512xf32>
    %296 = arith.addf %263, %295 : vector<4x512xf32>
    %297 = arith.addf %275, %282 : vector<4x512xf32>
    %298 = arith.addf %289, %296 : vector<4x512xf32>
    %299 = arith.addf %297, %298 : vector<4x512xf32>
    %c0_101 = arith.constant 0 : index
    %c0_102 = arith.constant 0 : index
    %300 = vector.load %arg3[%c0_101, %c0_102] : memref<4x1xf32, #tpu.memory_space<vmem>>, vector<4x1xf32>
    %301 = vector.broadcast %300 : vector<4x1xf32> to vector<4x512xf32>
    %302 = arith.addf %299, %301 : vector<4x512xf32>
    %cst_103 = arith.constant 0.000000e+00 : f32
    %303 = vector.broadcast %cst_103 : f32 to vector<4x512xf32>
    %304 = arith.maximumf %302, %303 : vector<4x512xf32>
    %cst_104 = arith.constant 0.000000e+00 : f32
    %305 = vector.broadcast %cst_104 : f32 to vector<4x512xf32>
    %cst_105 = arith.constant 0.000000e+00 : f32
    %306 = vector.broadcast %cst_105 : f32 to vector<4x512xf32>
    %cst_106 = arith.constant 0.000000e+00 : f32
    %307 = vector.broadcast %cst_106 : f32 to vector<4x512xf32>
    %cst_107 = arith.constant 0.000000e+00 : f32
    %308 = vector.broadcast %cst_107 : f32 to vector<4x512xf32>
    %c17_i32_108 = arith.constant 17 : i32
    %309 = tpu.dynamic_rotate %304 by %c17_i32_108 dim 1 : vector<4x512xf32>, i32 -> vector<4x512xf32>
    %c0_109 = arith.constant 0 : index
    %c0_110 = arith.constant 0 : index
    %c0_111 = arith.constant 0 : index
    %310 = vector.load %arg6[%c0_109, %c0_110, %c0_111] : memref<9x1x512xf32, #tpu.memory_space<vmem>>, vector<1x1x512xf32>
    %311 = vector.shape_cast %310 : vector<1x1x512xf32> to vector<1x512xf32>
    %312 = vector.broadcast %311 : vector<1x512xf32> to vector<4x512xf32>
    %313 = arith.mulf %309, %312 : vector<4x512xf32>
    %c0_112 = arith.constant 0 : index
    %c0_113 = arith.constant 0 : index
    %c0_114 = arith.constant 0 : index
    %314 = vector.load %arg4[%c0_112, %c0_113, %c0_114] : memref<36x4x1xf32, #tpu.memory_space<vmem>>, vector<1x4x1xf32>
    %315 = vector.shape_cast %314 : vector<1x4x1xf32> to vector<4x1xf32>
    %316 = vector.extract_strided_slice %313 {offsets = [0, 0], sizes = [1, 512], strides = [1, 1]} : vector<4x512xf32> to vector<1x512xf32>
    %317 = vector.broadcast %315 : vector<4x1xf32> to vector<4x512xf32>
    %318 = vector.broadcast %316 : vector<1x512xf32> to vector<4x512xf32>
    %319 = arith.mulf %317, %318 : vector<4x512xf32>
    %320 = arith.addf %305, %319 : vector<4x512xf32>
    %c1_115 = arith.constant 1 : index
    %c0_116 = arith.constant 0 : index
    %c0_117 = arith.constant 0 : index
    %321 = vector.load %arg4[%c1_115, %c0_116, %c0_117] : memref<36x4x1xf32, #tpu.memory_space<vmem>>, vector<1x4x1xf32>
    %322 = vector.shape_cast %321 : vector<1x4x1xf32> to vector<4x1xf32>
    %323 = vector.extract_strided_slice %313 {offsets = [1, 0], sizes = [1, 512], strides = [1, 1]} : vector<4x512xf32> to vector<1x512xf32>
    %324 = vector.broadcast %322 : vector<4x1xf32> to vector<4x512xf32>
    %325 = vector.broadcast %323 : vector<1x512xf32> to vector<4x512xf32>
    %326 = arith.mulf %324, %325 : vector<4x512xf32>
    %327 = arith.addf %306, %326 : vector<4x512xf32>
    %c2_118 = arith.constant 2 : index
    %c0_119 = arith.constant 0 : index
    %c0_120 = arith.constant 0 : index
    %328 = vector.load %arg4[%c2_118, %c0_119, %c0_120] : memref<36x4x1xf32, #tpu.memory_space<vmem>>, vector<1x4x1xf32>
    %329 = vector.shape_cast %328 : vector<1x4x1xf32> to vector<4x1xf32>
    %330 = vector.extract_strided_slice %313 {offsets = [2, 0], sizes = [1, 512], strides = [1, 1]} : vector<4x512xf32> to vector<1x512xf32>
    %331 = vector.broadcast %329 : vector<4x1xf32> to vector<4x512xf32>
    %332 = vector.broadcast %330 : vector<1x512xf32> to vector<4x512xf32>
    %333 = arith.mulf %331, %332 : vector<4x512xf32>
    %334 = arith.addf %307, %333 : vector<4x512xf32>
    %c3_121 = arith.constant 3 : index
    %c0_122 = arith.constant 0 : index
    %c0_123 = arith.constant 0 : index
    %335 = vector.load %arg4[%c3_121, %c0_122, %c0_123] : memref<36x4x1xf32, #tpu.memory_space<vmem>>, vector<1x4x1xf32>
    %336 = vector.shape_cast %335 : vector<1x4x1xf32> to vector<4x1xf32>
    %337 = vector.extract_strided_slice %313 {offsets = [3, 0], sizes = [1, 512], strides = [1, 1]} : vector<4x512xf32> to vector<1x512xf32>
    %338 = vector.broadcast %336 : vector<4x1xf32> to vector<4x512xf32>
    %339 = vector.broadcast %337 : vector<1x512xf32> to vector<4x512xf32>
    %340 = arith.mulf %338, %339 : vector<4x512xf32>
    %341 = arith.addf %308, %340 : vector<4x512xf32>
    %c16_i32_124 = arith.constant 16 : i32
    %342 = tpu.dynamic_rotate %304 by %c16_i32_124 dim 1 : vector<4x512xf32>, i32 -> vector<4x512xf32>
    %c1_125 = arith.constant 1 : index
    %c0_126 = arith.constant 0 : index
    %c0_127 = arith.constant 0 : index
    %343 = vector.load %arg6[%c1_125, %c0_126, %c0_127] : memref<9x1x512xf32, #tpu.memory_space<vmem>>, vector<1x1x512xf32>
    %344 = vector.shape_cast %343 : vector<1x1x512xf32> to vector<1x512xf32>
    %345 = vector.broadcast %344 : vector<1x512xf32> to vector<4x512xf32>
    %346 = arith.mulf %342, %345 : vector<4x512xf32>
    %c4_128 = arith.constant 4 : index
    %c0_129 = arith.constant 0 : index
    %c0_130 = arith.constant 0 : index
    %347 = vector.load %arg4[%c4_128, %c0_129, %c0_130] : memref<36x4x1xf32, #tpu.memory_space<vmem>>, vector<1x4x1xf32>
    %348 = vector.shape_cast %347 : vector<1x4x1xf32> to vector<4x1xf32>
    %349 = vector.extract_strided_slice %346 {offsets = [0, 0], sizes = [1, 512], strides = [1, 1]} : vector<4x512xf32> to vector<1x512xf32>
    %350 = vector.broadcast %348 : vector<4x1xf32> to vector<4x512xf32>
    %351 = vector.broadcast %349 : vector<1x512xf32> to vector<4x512xf32>
    %352 = arith.mulf %350, %351 : vector<4x512xf32>
    %353 = arith.addf %320, %352 : vector<4x512xf32>
    %c5_131 = arith.constant 5 : index
    %c0_132 = arith.constant 0 : index
    %c0_133 = arith.constant 0 : index
    %354 = vector.load %arg4[%c5_131, %c0_132, %c0_133] : memref<36x4x1xf32, #tpu.memory_space<vmem>>, vector<1x4x1xf32>
    %355 = vector.shape_cast %354 : vector<1x4x1xf32> to vector<4x1xf32>
    %356 = vector.extract_strided_slice %346 {offsets = [1, 0], sizes = [1, 512], strides = [1, 1]} : vector<4x512xf32> to vector<1x512xf32>
    %357 = vector.broadcast %355 : vector<4x1xf32> to vector<4x512xf32>
    %358 = vector.broadcast %356 : vector<1x512xf32> to vector<4x512xf32>
    %359 = arith.mulf %357, %358 : vector<4x512xf32>
    %360 = arith.addf %327, %359 : vector<4x512xf32>
    %c6_134 = arith.constant 6 : index
    %c0_135 = arith.constant 0 : index
    %c0_136 = arith.constant 0 : index
    %361 = vector.load %arg4[%c6_134, %c0_135, %c0_136] : memref<36x4x1xf32, #tpu.memory_space<vmem>>, vector<1x4x1xf32>
    %362 = vector.shape_cast %361 : vector<1x4x1xf32> to vector<4x1xf32>
    %363 = vector.extract_strided_slice %346 {offsets = [2, 0], sizes = [1, 512], strides = [1, 1]} : vector<4x512xf32> to vector<1x512xf32>
    %364 = vector.broadcast %362 : vector<4x1xf32> to vector<4x512xf32>
    %365 = vector.broadcast %363 : vector<1x512xf32> to vector<4x512xf32>
    %366 = arith.mulf %364, %365 : vector<4x512xf32>
    %367 = arith.addf %334, %366 : vector<4x512xf32>
    %c7_137 = arith.constant 7 : index
    %c0_138 = arith.constant 0 : index
    %c0_139 = arith.constant 0 : index
    %368 = vector.load %arg4[%c7_137, %c0_138, %c0_139] : memref<36x4x1xf32, #tpu.memory_space<vmem>>, vector<1x4x1xf32>
    %369 = vector.shape_cast %368 : vector<1x4x1xf32> to vector<4x1xf32>
    %370 = vector.extract_strided_slice %346 {offsets = [3, 0], sizes = [1, 512], strides = [1, 1]} : vector<4x512xf32> to vector<1x512xf32>
    %371 = vector.broadcast %369 : vector<4x1xf32> to vector<4x512xf32>
    %372 = vector.broadcast %370 : vector<1x512xf32> to vector<4x512xf32>
    %373 = arith.mulf %371, %372 : vector<4x512xf32>
    %374 = arith.addf %341, %373 : vector<4x512xf32>
    %c15_i32_140 = arith.constant 15 : i32
    %375 = tpu.dynamic_rotate %304 by %c15_i32_140 dim 1 : vector<4x512xf32>, i32 -> vector<4x512xf32>
    %c2_141 = arith.constant 2 : index
    %c0_142 = arith.constant 0 : index
    %c0_143 = arith.constant 0 : index
    %376 = vector.load %arg6[%c2_141, %c0_142, %c0_143] : memref<9x1x512xf32, #tpu.memory_space<vmem>>, vector<1x1x512xf32>
    %377 = vector.shape_cast %376 : vector<1x1x512xf32> to vector<1x512xf32>
    %378 = vector.broadcast %377 : vector<1x512xf32> to vector<4x512xf32>
    %379 = arith.mulf %375, %378 : vector<4x512xf32>
    %c8_144 = arith.constant 8 : index
    %c0_145 = arith.constant 0 : index
    %c0_146 = arith.constant 0 : index
    %380 = vector.load %arg4[%c8_144, %c0_145, %c0_146] : memref<36x4x1xf32, #tpu.memory_space<vmem>>, vector<1x4x1xf32>
    %381 = vector.shape_cast %380 : vector<1x4x1xf32> to vector<4x1xf32>
    %382 = vector.extract_strided_slice %379 {offsets = [0, 0], sizes = [1, 512], strides = [1, 1]} : vector<4x512xf32> to vector<1x512xf32>
    %383 = vector.broadcast %381 : vector<4x1xf32> to vector<4x512xf32>
    %384 = vector.broadcast %382 : vector<1x512xf32> to vector<4x512xf32>
    %385 = arith.mulf %383, %384 : vector<4x512xf32>
    %386 = arith.addf %353, %385 : vector<4x512xf32>
    %c9_147 = arith.constant 9 : index
    %c0_148 = arith.constant 0 : index
    %c0_149 = arith.constant 0 : index
    %387 = vector.load %arg4[%c9_147, %c0_148, %c0_149] : memref<36x4x1xf32, #tpu.memory_space<vmem>>, vector<1x4x1xf32>
    %388 = vector.shape_cast %387 : vector<1x4x1xf32> to vector<4x1xf32>
    %389 = vector.extract_strided_slice %379 {offsets = [1, 0], sizes = [1, 512], strides = [1, 1]} : vector<4x512xf32> to vector<1x512xf32>
    %390 = vector.broadcast %388 : vector<4x1xf32> to vector<4x512xf32>
    %391 = vector.broadcast %389 : vector<1x512xf32> to vector<4x512xf32>
    %392 = arith.mulf %390, %391 : vector<4x512xf32>
    %393 = arith.addf %360, %392 : vector<4x512xf32>
    %c10_150 = arith.constant 10 : index
    %c0_151 = arith.constant 0 : index
    %c0_152 = arith.constant 0 : index
    %394 = vector.load %arg4[%c10_150, %c0_151, %c0_152] : memref<36x4x1xf32, #tpu.memory_space<vmem>>, vector<1x4x1xf32>
    %395 = vector.shape_cast %394 : vector<1x4x1xf32> to vector<4x1xf32>
    %396 = vector.extract_strided_slice %379 {offsets = [2, 0], sizes = [1, 512], strides = [1, 1]} : vector<4x512xf32> to vector<1x512xf32>
    %397 = vector.broadcast %395 : vector<4x1xf32> to vector<4x512xf32>
    %398 = vector.broadcast %396 : vector<1x512xf32> to vector<4x512xf32>
    %399 = arith.mulf %397, %398 : vector<4x512xf32>
    %400 = arith.addf %367, %399 : vector<4x512xf32>
    %c11_153 = arith.constant 11 : index
    %c0_154 = arith.constant 0 : index
    %c0_155 = arith.constant 0 : index
    %401 = vector.load %arg4[%c11_153, %c0_154, %c0_155] : memref<36x4x1xf32, #tpu.memory_space<vmem>>, vector<1x4x1xf32>
    %402 = vector.shape_cast %401 : vector<1x4x1xf32> to vector<4x1xf32>
    %403 = vector.extract_strided_slice %379 {offsets = [3, 0], sizes = [1, 512], strides = [1, 1]} : vector<4x512xf32> to vector<1x512xf32>
    %404 = vector.broadcast %402 : vector<4x1xf32> to vector<4x512xf32>
    %405 = vector.broadcast %403 : vector<1x512xf32> to vector<4x512xf32>
    %406 = arith.mulf %404, %405 : vector<4x512xf32>
    %407 = arith.addf %374, %406 : vector<4x512xf32>
    %c1_i32_156 = arith.constant 1 : i32
    %408 = tpu.dynamic_rotate %304 by %c1_i32_156 dim 1 : vector<4x512xf32>, i32 -> vector<4x512xf32>
    %c3_157 = arith.constant 3 : index
    %c0_158 = arith.constant 0 : index
    %c0_159 = arith.constant 0 : index
    %409 = vector.load %arg6[%c3_157, %c0_158, %c0_159] : memref<9x1x512xf32, #tpu.memory_space<vmem>>, vector<1x1x512xf32>
    %410 = vector.shape_cast %409 : vector<1x1x512xf32> to vector<1x512xf32>
    %411 = vector.broadcast %410 : vector<1x512xf32> to vector<4x512xf32>
    %412 = arith.mulf %408, %411 : vector<4x512xf32>
    %c12_160 = arith.constant 12 : index
    %c0_161 = arith.constant 0 : index
    %c0_162 = arith.constant 0 : index
    %413 = vector.load %arg4[%c12_160, %c0_161, %c0_162] : memref<36x4x1xf32, #tpu.memory_space<vmem>>, vector<1x4x1xf32>
    %414 = vector.shape_cast %413 : vector<1x4x1xf32> to vector<4x1xf32>
    %415 = vector.extract_strided_slice %412 {offsets = [0, 0], sizes = [1, 512], strides = [1, 1]} : vector<4x512xf32> to vector<1x512xf32>
    %416 = vector.broadcast %414 : vector<4x1xf32> to vector<4x512xf32>
    %417 = vector.broadcast %415 : vector<1x512xf32> to vector<4x512xf32>
    %418 = arith.mulf %416, %417 : vector<4x512xf32>
    %419 = arith.addf %386, %418 : vector<4x512xf32>
    %c13_163 = arith.constant 13 : index
    %c0_164 = arith.constant 0 : index
    %c0_165 = arith.constant 0 : index
    %420 = vector.load %arg4[%c13_163, %c0_164, %c0_165] : memref<36x4x1xf32, #tpu.memory_space<vmem>>, vector<1x4x1xf32>
    %421 = vector.shape_cast %420 : vector<1x4x1xf32> to vector<4x1xf32>
    %422 = vector.extract_strided_slice %412 {offsets = [1, 0], sizes = [1, 512], strides = [1, 1]} : vector<4x512xf32> to vector<1x512xf32>
    %423 = vector.broadcast %421 : vector<4x1xf32> to vector<4x512xf32>
    %424 = vector.broadcast %422 : vector<1x512xf32> to vector<4x512xf32>
    %425 = arith.mulf %423, %424 : vector<4x512xf32>
    %426 = arith.addf %393, %425 : vector<4x512xf32>
    %c14_166 = arith.constant 14 : index
    %c0_167 = arith.constant 0 : index
    %c0_168 = arith.constant 0 : index
    %427 = vector.load %arg4[%c14_166, %c0_167, %c0_168] : memref<36x4x1xf32, #tpu.memory_space<vmem>>, vector<1x4x1xf32>
    %428 = vector.shape_cast %427 : vector<1x4x1xf32> to vector<4x1xf32>
    %429 = vector.extract_strided_slice %412 {offsets = [2, 0], sizes = [1, 512], strides = [1, 1]} : vector<4x512xf32> to vector<1x512xf32>
    %430 = vector.broadcast %428 : vector<4x1xf32> to vector<4x512xf32>
    %431 = vector.broadcast %429 : vector<1x512xf32> to vector<4x512xf32>
    %432 = arith.mulf %430, %431 : vector<4x512xf32>
    %433 = arith.addf %400, %432 : vector<4x512xf32>
    %c15_169 = arith.constant 15 : index
    %c0_170 = arith.constant 0 : index
    %c0_171 = arith.constant 0 : index
    %434 = vector.load %arg4[%c15_169, %c0_170, %c0_171] : memref<36x4x1xf32, #tpu.memory_space<vmem>>, vector<1x4x1xf32>
    %435 = vector.shape_cast %434 : vector<1x4x1xf32> to vector<4x1xf32>
    %436 = vector.extract_strided_slice %412 {offsets = [3, 0], sizes = [1, 512], strides = [1, 1]} : vector<4x512xf32> to vector<1x512xf32>
    %437 = vector.broadcast %435 : vector<4x1xf32> to vector<4x512xf32>
    %438 = vector.broadcast %436 : vector<1x512xf32> to vector<4x512xf32>
    %439 = arith.mulf %437, %438 : vector<4x512xf32>
    %440 = arith.addf %407, %439 : vector<4x512xf32>
    %c16_172 = arith.constant 16 : index
    %c0_173 = arith.constant 0 : index
    %c0_174 = arith.constant 0 : index
    %441 = vector.load %arg4[%c16_172, %c0_173, %c0_174] : memref<36x4x1xf32, #tpu.memory_space<vmem>>, vector<1x4x1xf32>
    %442 = vector.shape_cast %441 : vector<1x4x1xf32> to vector<4x1xf32>
    %443 = vector.extract_strided_slice %304 {offsets = [0, 0], sizes = [1, 512], strides = [1, 1]} : vector<4x512xf32> to vector<1x512xf32>
    %444 = vector.broadcast %442 : vector<4x1xf32> to vector<4x512xf32>
    %445 = vector.broadcast %443 : vector<1x512xf32> to vector<4x512xf32>
    %446 = arith.mulf %444, %445 : vector<4x512xf32>
    %447 = arith.addf %419, %446 : vector<4x512xf32>
    %c17_175 = arith.constant 17 : index
    %c0_176 = arith.constant 0 : index
    %c0_177 = arith.constant 0 : index
    %448 = vector.load %arg4[%c17_175, %c0_176, %c0_177] : memref<36x4x1xf32, #tpu.memory_space<vmem>>, vector<1x4x1xf32>
    %449 = vector.shape_cast %448 : vector<1x4x1xf32> to vector<4x1xf32>
    %450 = vector.extract_strided_slice %304 {offsets = [1, 0], sizes = [1, 512], strides = [1, 1]} : vector<4x512xf32> to vector<1x512xf32>
    %451 = vector.broadcast %449 : vector<4x1xf32> to vector<4x512xf32>
    %452 = vector.broadcast %450 : vector<1x512xf32> to vector<4x512xf32>
    %453 = arith.mulf %451, %452 : vector<4x512xf32>
    %454 = arith.addf %426, %453 : vector<4x512xf32>
    %c18_178 = arith.constant 18 : index
    %c0_179 = arith.constant 0 : index
    %c0_180 = arith.constant 0 : index
    %455 = vector.load %arg4[%c18_178, %c0_179, %c0_180] : memref<36x4x1xf32, #tpu.memory_space<vmem>>, vector<1x4x1xf32>
    %456 = vector.shape_cast %455 : vector<1x4x1xf32> to vector<4x1xf32>
    %457 = vector.extract_strided_slice %304 {offsets = [2, 0], sizes = [1, 512], strides = [1, 1]} : vector<4x512xf32> to vector<1x512xf32>
    %458 = vector.broadcast %456 : vector<4x1xf32> to vector<4x512xf32>
    %459 = vector.broadcast %457 : vector<1x512xf32> to vector<4x512xf32>
    %460 = arith.mulf %458, %459 : vector<4x512xf32>
    %461 = arith.addf %433, %460 : vector<4x512xf32>
    %c19_181 = arith.constant 19 : index
    %c0_182 = arith.constant 0 : index
    %c0_183 = arith.constant 0 : index
    %462 = vector.load %arg4[%c19_181, %c0_182, %c0_183] : memref<36x4x1xf32, #tpu.memory_space<vmem>>, vector<1x4x1xf32>
    %463 = vector.shape_cast %462 : vector<1x4x1xf32> to vector<4x1xf32>
    %464 = vector.extract_strided_slice %304 {offsets = [3, 0], sizes = [1, 512], strides = [1, 1]} : vector<4x512xf32> to vector<1x512xf32>
    %465 = vector.broadcast %463 : vector<4x1xf32> to vector<4x512xf32>
    %466 = vector.broadcast %464 : vector<1x512xf32> to vector<4x512xf32>
    %467 = arith.mulf %465, %466 : vector<4x512xf32>
    %468 = arith.addf %440, %467 : vector<4x512xf32>
    %c511_i32_184 = arith.constant 511 : i32
    %469 = tpu.dynamic_rotate %304 by %c511_i32_184 dim 1 : vector<4x512xf32>, i32 -> vector<4x512xf32>
    %c5_185 = arith.constant 5 : index
    %c0_186 = arith.constant 0 : index
    %c0_187 = arith.constant 0 : index
    %470 = vector.load %arg6[%c5_185, %c0_186, %c0_187] : memref<9x1x512xf32, #tpu.memory_space<vmem>>, vector<1x1x512xf32>
    %471 = vector.shape_cast %470 : vector<1x1x512xf32> to vector<1x512xf32>
    %472 = vector.broadcast %471 : vector<1x512xf32> to vector<4x512xf32>
    %473 = arith.mulf %469, %472 : vector<4x512xf32>
    %c20_188 = arith.constant 20 : index
    %c0_189 = arith.constant 0 : index
    %c0_190 = arith.constant 0 : index
    %474 = vector.load %arg4[%c20_188, %c0_189, %c0_190] : memref<36x4x1xf32, #tpu.memory_space<vmem>>, vector<1x4x1xf32>
    %475 = vector.shape_cast %474 : vector<1x4x1xf32> to vector<4x1xf32>
    %476 = vector.extract_strided_slice %473 {offsets = [0, 0], sizes = [1, 512], strides = [1, 1]} : vector<4x512xf32> to vector<1x512xf32>
    %477 = vector.broadcast %475 : vector<4x1xf32> to vector<4x512xf32>
    %478 = vector.broadcast %476 : vector<1x512xf32> to vector<4x512xf32>
    %479 = arith.mulf %477, %478 : vector<4x512xf32>
    %480 = arith.addf %447, %479 : vector<4x512xf32>
    %c21_191 = arith.constant 21 : index
    %c0_192 = arith.constant 0 : index
    %c0_193 = arith.constant 0 : index
    %481 = vector.load %arg4[%c21_191, %c0_192, %c0_193] : memref<36x4x1xf32, #tpu.memory_space<vmem>>, vector<1x4x1xf32>
    %482 = vector.shape_cast %481 : vector<1x4x1xf32> to vector<4x1xf32>
    %483 = vector.extract_strided_slice %473 {offsets = [1, 0], sizes = [1, 512], strides = [1, 1]} : vector<4x512xf32> to vector<1x512xf32>
    %484 = vector.broadcast %482 : vector<4x1xf32> to vector<4x512xf32>
    %485 = vector.broadcast %483 : vector<1x512xf32> to vector<4x512xf32>
    %486 = arith.mulf %484, %485 : vector<4x512xf32>
    %487 = arith.addf %454, %486 : vector<4x512xf32>
    %c22_194 = arith.constant 22 : index
    %c0_195 = arith.constant 0 : index
    %c0_196 = arith.constant 0 : index
    %488 = vector.load %arg4[%c22_194, %c0_195, %c0_196] : memref<36x4x1xf32, #tpu.memory_space<vmem>>, vector<1x4x1xf32>
    %489 = vector.shape_cast %488 : vector<1x4x1xf32> to vector<4x1xf32>
    %490 = vector.extract_strided_slice %473 {offsets = [2, 0], sizes = [1, 512], strides = [1, 1]} : vector<4x512xf32> to vector<1x512xf32>
    %491 = vector.broadcast %489 : vector<4x1xf32> to vector<4x512xf32>
    %492 = vector.broadcast %490 : vector<1x512xf32> to vector<4x512xf32>
    %493 = arith.mulf %491, %492 : vector<4x512xf32>
    %494 = arith.addf %461, %493 : vector<4x512xf32>
    %c23_197 = arith.constant 23 : index
    %c0_198 = arith.constant 0 : index
    %c0_199 = arith.constant 0 : index
    %495 = vector.load %arg4[%c23_197, %c0_198, %c0_199] : memref<36x4x1xf32, #tpu.memory_space<vmem>>, vector<1x4x1xf32>
    %496 = vector.shape_cast %495 : vector<1x4x1xf32> to vector<4x1xf32>
    %497 = vector.extract_strided_slice %473 {offsets = [3, 0], sizes = [1, 512], strides = [1, 1]} : vector<4x512xf32> to vector<1x512xf32>
    %498 = vector.broadcast %496 : vector<4x1xf32> to vector<4x512xf32>
    %499 = vector.broadcast %497 : vector<1x512xf32> to vector<4x512xf32>
    %500 = arith.mulf %498, %499 : vector<4x512xf32>
    %501 = arith.addf %468, %500 : vector<4x512xf32>
    %c497_i32_200 = arith.constant 497 : i32
    %502 = tpu.dynamic_rotate %304 by %c497_i32_200 dim 1 : vector<4x512xf32>, i32 -> vector<4x512xf32>
    %c6_201 = arith.constant 6 : index
    %c0_202 = arith.constant 0 : index
    %c0_203 = arith.constant 0 : index
    %503 = vector.load %arg6[%c6_201, %c0_202, %c0_203] : memref<9x1x512xf32, #tpu.memory_space<vmem>>, vector<1x1x512xf32>
    %504 = vector.shape_cast %503 : vector<1x1x512xf32> to vector<1x512xf32>
    %505 = vector.broadcast %504 : vector<1x512xf32> to vector<4x512xf32>
    %506 = arith.mulf %502, %505 : vector<4x512xf32>
    %c24_204 = arith.constant 24 : index
    %c0_205 = arith.constant 0 : index
    %c0_206 = arith.constant 0 : index
    %507 = vector.load %arg4[%c24_204, %c0_205, %c0_206] : memref<36x4x1xf32, #tpu.memory_space<vmem>>, vector<1x4x1xf32>
    %508 = vector.shape_cast %507 : vector<1x4x1xf32> to vector<4x1xf32>
    %509 = vector.extract_strided_slice %506 {offsets = [0, 0], sizes = [1, 512], strides = [1, 1]} : vector<4x512xf32> to vector<1x512xf32>
    %510 = vector.broadcast %508 : vector<4x1xf32> to vector<4x512xf32>
    %511 = vector.broadcast %509 : vector<1x512xf32> to vector<4x512xf32>
    %512 = arith.mulf %510, %511 : vector<4x512xf32>
    %513 = arith.addf %480, %512 : vector<4x512xf32>
    %c25_207 = arith.constant 25 : index
    %c0_208 = arith.constant 0 : index
    %c0_209 = arith.constant 0 : index
    %514 = vector.load %arg4[%c25_207, %c0_208, %c0_209] : memref<36x4x1xf32, #tpu.memory_space<vmem>>, vector<1x4x1xf32>
    %515 = vector.shape_cast %514 : vector<1x4x1xf32> to vector<4x1xf32>
    %516 = vector.extract_strided_slice %506 {offsets = [1, 0], sizes = [1, 512], strides = [1, 1]} : vector<4x512xf32> to vector<1x512xf32>
    %517 = vector.broadcast %515 : vector<4x1xf32> to vector<4x512xf32>
    %518 = vector.broadcast %516 : vector<1x512xf32> to vector<4x512xf32>
    %519 = arith.mulf %517, %518 : vector<4x512xf32>
    %520 = arith.addf %487, %519 : vector<4x512xf32>
    %c26_210 = arith.constant 26 : index
    %c0_211 = arith.constant 0 : index
    %c0_212 = arith.constant 0 : index
    %521 = vector.load %arg4[%c26_210, %c0_211, %c0_212] : memref<36x4x1xf32, #tpu.memory_space<vmem>>, vector<1x4x1xf32>
    %522 = vector.shape_cast %521 : vector<1x4x1xf32> to vector<4x1xf32>
    %523 = vector.extract_strided_slice %506 {offsets = [2, 0], sizes = [1, 512], strides = [1, 1]} : vector<4x512xf32> to vector<1x512xf32>
    %524 = vector.broadcast %522 : vector<4x1xf32> to vector<4x512xf32>
    %525 = vector.broadcast %523 : vector<1x512xf32> to vector<4x512xf32>
    %526 = arith.mulf %524, %525 : vector<4x512xf32>
    %527 = arith.addf %494, %526 : vector<4x512xf32>
    %c27_213 = arith.constant 27 : index
    %c0_214 = arith.constant 0 : index
    %c0_215 = arith.constant 0 : index
    %528 = vector.load %arg4[%c27_213, %c0_214, %c0_215] : memref<36x4x1xf32, #tpu.memory_space<vmem>>, vector<1x4x1xf32>
    %529 = vector.shape_cast %528 : vector<1x4x1xf32> to vector<4x1xf32>
    %530 = vector.extract_strided_slice %506 {offsets = [3, 0], sizes = [1, 512], strides = [1, 1]} : vector<4x512xf32> to vector<1x512xf32>
    %531 = vector.broadcast %529 : vector<4x1xf32> to vector<4x512xf32>
    %532 = vector.broadcast %530 : vector<1x512xf32> to vector<4x512xf32>
    %533 = arith.mulf %531, %532 : vector<4x512xf32>
    %534 = arith.addf %501, %533 : vector<4x512xf32>
    %c496_i32_216 = arith.constant 496 : i32
    %535 = tpu.dynamic_rotate %304 by %c496_i32_216 dim 1 : vector<4x512xf32>, i32 -> vector<4x512xf32>
    %c7_217 = arith.constant 7 : index
    %c0_218 = arith.constant 0 : index
    %c0_219 = arith.constant 0 : index
    %536 = vector.load %arg6[%c7_217, %c0_218, %c0_219] : memref<9x1x512xf32, #tpu.memory_space<vmem>>, vector<1x1x512xf32>
    %537 = vector.shape_cast %536 : vector<1x1x512xf32> to vector<1x512xf32>
    %538 = vector.broadcast %537 : vector<1x512xf32> to vector<4x512xf32>
    %539 = arith.mulf %535, %538 : vector<4x512xf32>
    %c28_220 = arith.constant 28 : index
    %c0_221 = arith.constant 0 : index
    %c0_222 = arith.constant 0 : index
    %540 = vector.load %arg4[%c28_220, %c0_221, %c0_222] : memref<36x4x1xf32, #tpu.memory_space<vmem>>, vector<1x4x1xf32>
    %541 = vector.shape_cast %540 : vector<1x4x1xf32> to vector<4x1xf32>
    %542 = vector.extract_strided_slice %539 {offsets = [0, 0], sizes = [1, 512], strides = [1, 1]} : vector<4x512xf32> to vector<1x512xf32>
    %543 = vector.broadcast %541 : vector<4x1xf32> to vector<4x512xf32>
    %544 = vector.broadcast %542 : vector<1x512xf32> to vector<4x512xf32>
    %545 = arith.mulf %543, %544 : vector<4x512xf32>
    %546 = arith.addf %513, %545 : vector<4x512xf32>
    %c29_223 = arith.constant 29 : index
    %c0_224 = arith.constant 0 : index
    %c0_225 = arith.constant 0 : index
    %547 = vector.load %arg4[%c29_223, %c0_224, %c0_225] : memref<36x4x1xf32, #tpu.memory_space<vmem>>, vector<1x4x1xf32>
    %548 = vector.shape_cast %547 : vector<1x4x1xf32> to vector<4x1xf32>
    %549 = vector.extract_strided_slice %539 {offsets = [1, 0], sizes = [1, 512], strides = [1, 1]} : vector<4x512xf32> to vector<1x512xf32>
    %550 = vector.broadcast %548 : vector<4x1xf32> to vector<4x512xf32>
    %551 = vector.broadcast %549 : vector<1x512xf32> to vector<4x512xf32>
    %552 = arith.mulf %550, %551 : vector<4x512xf32>
    %553 = arith.addf %520, %552 : vector<4x512xf32>
    %c30_226 = arith.constant 30 : index
    %c0_227 = arith.constant 0 : index
    %c0_228 = arith.constant 0 : index
    %554 = vector.load %arg4[%c30_226, %c0_227, %c0_228] : memref<36x4x1xf32, #tpu.memory_space<vmem>>, vector<1x4x1xf32>
    %555 = vector.shape_cast %554 : vector<1x4x1xf32> to vector<4x1xf32>
    %556 = vector.extract_strided_slice %539 {offsets = [2, 0], sizes = [1, 512], strides = [1, 1]} : vector<4x512xf32> to vector<1x512xf32>
    %557 = vector.broadcast %555 : vector<4x1xf32> to vector<4x512xf32>
    %558 = vector.broadcast %556 : vector<1x512xf32> to vector<4x512xf32>
    %559 = arith.mulf %557, %558 : vector<4x512xf32>
    %560 = arith.addf %527, %559 : vector<4x512xf32>
    %c31_229 = arith.constant 31 : index
    %c0_230 = arith.constant 0 : index
    %c0_231 = arith.constant 0 : index
    %561 = vector.load %arg4[%c31_229, %c0_230, %c0_231] : memref<36x4x1xf32, #tpu.memory_space<vmem>>, vector<1x4x1xf32>
    %562 = vector.shape_cast %561 : vector<1x4x1xf32> to vector<4x1xf32>
    %563 = vector.extract_strided_slice %539 {offsets = [3, 0], sizes = [1, 512], strides = [1, 1]} : vector<4x512xf32> to vector<1x512xf32>
    %564 = vector.broadcast %562 : vector<4x1xf32> to vector<4x512xf32>
    %565 = vector.broadcast %563 : vector<1x512xf32> to vector<4x512xf32>
    %566 = arith.mulf %564, %565 : vector<4x512xf32>
    %567 = arith.addf %534, %566 : vector<4x512xf32>
    %c495_i32_232 = arith.constant 495 : i32
    %568 = tpu.dynamic_rotate %304 by %c495_i32_232 dim 1 : vector<4x512xf32>, i32 -> vector<4x512xf32>
    %c8_233 = arith.constant 8 : index
    %c0_234 = arith.constant 0 : index
    %c0_235 = arith.constant 0 : index
    %569 = vector.load %arg6[%c8_233, %c0_234, %c0_235] : memref<9x1x512xf32, #tpu.memory_space<vmem>>, vector<1x1x512xf32>
    %570 = vector.shape_cast %569 : vector<1x1x512xf32> to vector<1x512xf32>
    %571 = vector.broadcast %570 : vector<1x512xf32> to vector<4x512xf32>
    %572 = arith.mulf %568, %571 : vector<4x512xf32>
    %c32_236 = arith.constant 32 : index
    %c0_237 = arith.constant 0 : index
    %c0_238 = arith.constant 0 : index
    %573 = vector.load %arg4[%c32_236, %c0_237, %c0_238] : memref<36x4x1xf32, #tpu.memory_space<vmem>>, vector<1x4x1xf32>
    %574 = vector.shape_cast %573 : vector<1x4x1xf32> to vector<4x1xf32>
    %575 = vector.extract_strided_slice %572 {offsets = [0, 0], sizes = [1, 512], strides = [1, 1]} : vector<4x512xf32> to vector<1x512xf32>
    %576 = vector.broadcast %574 : vector<4x1xf32> to vector<4x512xf32>
    %577 = vector.broadcast %575 : vector<1x512xf32> to vector<4x512xf32>
    %578 = arith.mulf %576, %577 : vector<4x512xf32>
    %579 = arith.addf %546, %578 : vector<4x512xf32>
    %c33_239 = arith.constant 33 : index
    %c0_240 = arith.constant 0 : index
    %c0_241 = arith.constant 0 : index
    %580 = vector.load %arg4[%c33_239, %c0_240, %c0_241] : memref<36x4x1xf32, #tpu.memory_space<vmem>>, vector<1x4x1xf32>
    %581 = vector.shape_cast %580 : vector<1x4x1xf32> to vector<4x1xf32>
    %582 = vector.extract_strided_slice %572 {offsets = [1, 0], sizes = [1, 512], strides = [1, 1]} : vector<4x512xf32> to vector<1x512xf32>
    %583 = vector.broadcast %581 : vector<4x1xf32> to vector<4x512xf32>
    %584 = vector.broadcast %582 : vector<1x512xf32> to vector<4x512xf32>
    %585 = arith.mulf %583, %584 : vector<4x512xf32>
    %586 = arith.addf %553, %585 : vector<4x512xf32>
    %c34_242 = arith.constant 34 : index
    %c0_243 = arith.constant 0 : index
    %c0_244 = arith.constant 0 : index
    %587 = vector.load %arg4[%c34_242, %c0_243, %c0_244] : memref<36x4x1xf32, #tpu.memory_space<vmem>>, vector<1x4x1xf32>
    %588 = vector.shape_cast %587 : vector<1x4x1xf32> to vector<4x1xf32>
    %589 = vector.extract_strided_slice %572 {offsets = [2, 0], sizes = [1, 512], strides = [1, 1]} : vector<4x512xf32> to vector<1x512xf32>
    %590 = vector.broadcast %588 : vector<4x1xf32> to vector<4x512xf32>
    %591 = vector.broadcast %589 : vector<1x512xf32> to vector<4x512xf32>
    %592 = arith.mulf %590, %591 : vector<4x512xf32>
    %593 = arith.addf %560, %592 : vector<4x512xf32>
    %c35_245 = arith.constant 35 : index
    %c0_246 = arith.constant 0 : index
    %c0_247 = arith.constant 0 : index
    %594 = vector.load %arg4[%c35_245, %c0_246, %c0_247] : memref<36x4x1xf32, #tpu.memory_space<vmem>>, vector<1x4x1xf32>
    %595 = vector.shape_cast %594 : vector<1x4x1xf32> to vector<4x1xf32>
    %596 = vector.extract_strided_slice %572 {offsets = [3, 0], sizes = [1, 512], strides = [1, 1]} : vector<4x512xf32> to vector<1x512xf32>
    %597 = vector.broadcast %595 : vector<4x1xf32> to vector<4x512xf32>
    %598 = vector.broadcast %596 : vector<1x512xf32> to vector<4x512xf32>
    %599 = arith.mulf %597, %598 : vector<4x512xf32>
    %600 = arith.addf %567, %599 : vector<4x512xf32>
    %601 = arith.addf %579, %586 : vector<4x512xf32>
    %602 = arith.addf %593, %600 : vector<4x512xf32>
    %603 = arith.addf %601, %602 : vector<4x512xf32>
    %c0_248 = arith.constant 0 : index
    %c0_249 = arith.constant 0 : index
    %604 = vector.load %arg5[%c0_248, %c0_249] : memref<4x1xf32, #tpu.memory_space<vmem>>, vector<4x1xf32>
    %605 = vector.broadcast %604 : vector<4x1xf32> to vector<4x512xf32>
    %606 = arith.addf %603, %605 : vector<4x512xf32>
    %607 = arith.addf %0, %606 : vector<4x512xf32>
    %cst_250 = arith.constant 0.000000e+00 : f32
    %608 = vector.broadcast %cst_250 : f32 to vector<4x512xf32>
    %609 = arith.maximumf %607, %608 : vector<4x512xf32>
    %c0_251 = arith.constant 0 : index
    %c0_252 = arith.constant 0 : index
    %610 = vector.load %arg7[%c0_251, %c0_252] : memref<4x512xf32, #tpu.memory_space<vmem>>, vector<4x512xf32>
    tpu.vector_store %arg7[%c0_251, %c0_252], %609 {strides = array<i32>} : memref<4x512xf32, #tpu.memory_space<vmem>>, vector<4x512xf32>,
    return
  }
  func.func @transform_0(%arg0: i32) -> (i32, i32) {
    %c0_i32 = arith.constant 0 : i32
    %c0_i32_0 = arith.constant 0 : i32
    %c0_i32_1 = arith.constant 0 : i32
    return %c0_i32, %c0_i32_0 : i32, i32
  }
  func.func @transform_1(%arg0: i32) -> (i32, i32, i32) {
    %c0_i32 = arith.constant 0 : i32
    %c0_i32_0 = arith.constant 0 : i32
    %c0_i32_1 = arith.constant 0 : i32
    %c0_i32_2 = arith.constant 0 : i32
    return %c0_i32, %c0_i32_0, %c0_i32_1 : i32, i32, i32
  }
  func.func @transform_2(%arg0: i32) -> (i32, i32) {
    %c0_i32 = arith.constant 0 : i32
    %c0_i32_0 = arith.constant 0 : i32
    %c0_i32_1 = arith.constant 0 : i32
    return %c0_i32, %c0_i32_0 : i32, i32
  }
  func.func @transform_3(%arg0: i32) -> (i32, i32, i32) {
    %c0_i32 = arith.constant 0 : i32
    %c0_i32_0 = arith.constant 0 : i32
    %c0_i32_1 = arith.constant 0 : i32
    %c0_i32_2 = arith.constant 0 : i32
    return %c0_i32, %c0_i32_0, %c0_i32_1 : i32, i32, i32
  }
  func.func @transform_4(%arg0: i32) -> (i32, i32) {
    %c0_i32 = arith.constant 0 : i32
    %c0_i32_0 = arith.constant 0 : i32
    %c0_i32_1 = arith.constant 0 : i32
    return %c0_i32, %c0_i32_0 : i32, i32
  }
  func.func @transform_5(%arg0: i32) -> (i32, i32, i32) {
    %c0_i32 = arith.constant 0 : i32
    %c0_i32_0 = arith.constant 0 : i32
    %c0_i32_1 = arith.constant 0 : i32
    %c0_i32_2 = arith.constant 0 : i32
    return %c0_i32, %c0_i32_0, %c0_i32_1 : i32, i32, i32
  }
  func.func @transform_6(%arg0: i32) -> (i32, i32) {
    %c0_i32 = arith.constant 0 : i32
    %c0_i32_0 = arith.constant 0 : i32
    %c0_i32_1 = arith.constant 0 : i32
    return %c0_i32, %c0_i32_0 : i32, i32
  }
}

</mosaic_0001>

<llo_original>
// kernel: residual_layer_forward.1
$region0: #{residual_layer_forward.1}
  #allocation0 [shape = 'u32[]', space=smem, size = 0x4, offset = 0x4, fixed_abs, tag = 'smem constant byte address 0x4 - core index']
  #allocation1 [shape = 'u32[144,128]{1,0:T(1,128)}', space=vmem, size = 0x12000, scoped, tag = 'internal scratch']
  %s0 = inlined_call_operand.vmem [shape: f32[4,512], index: 0, kind: input, shape index: {}]
  %s1 = inlined_call_operand.vmem [shape: f32[36,4,1], index: 1, kind: input, shape index: {}]
  %s2 = inlined_call_operand.vmem [shape: f32[4,1], index: 2, kind: input, shape index: {}]
  %s3 = inlined_call_operand.vmem [shape: f32[36,4,1], index: 3, kind: input, shape index: {}]
  %s4 = inlined_call_operand.vmem [shape: f32[4,1], index: 4, kind: input, shape index: {}]
  %s5 = inlined_call_operand.vmem [shape: f32[9,1,512], index: 5, kind: input, shape index: {}]
  %s6 = inlined_call_operand.vmem [shape: f32[4,512], index: 6, kind: output, shape index: {}]
  %s7 = sld [smem:[#allocation0]]
  $region34: #{residual_layer_forward.1} parent=0
    _
  %s9 = ssub.s32 1, %s7
  %s10 = scalar_select 0, %s9, %s7
  // Predicated region
  $region2: #{residual_layer_forward.1} parent=0 // pred_check
    _
  $region3: #{residual_layer_forward.1} parent=0 // pred_check_branch
    %12 = sbr.rel (0) target = $region5
  $region4: #{residual_layer_forward.1} parent=0 // pred_region
    _
  $region5: #{residual_layer_forward.1} parent=0 // pred_fallthru
    _
  // Predicated region
  $region6: #{residual_layer_forward.1} parent=0 // pred_check
    _
  $region7: #{residual_layer_forward.1} parent=0 // pred_check_branch
    %14 = sbr.rel (0) target = $region9
  $region8: #{residual_layer_forward.1} parent=0 // pred_region
    _
  $region9: #{residual_layer_forward.1} parent=0 // pred_fallthru
    _
  // Predicated region
  $region10: #{residual_layer_forward.1} parent=0 // pred_check
    _
  $region11: #{residual_layer_forward.1} parent=0 // pred_check_branch
    %16 = sbr.rel (0) target = $region13
  $region12: #{residual_layer_forward.1} parent=0 // pred_region
    _
  $region13: #{residual_layer_forward.1} parent=0 // pred_fallthru
    _
  // Predicated region
  $region14: #{residual_layer_forward.1} parent=0 // pred_check
    _
  $region15: #{residual_layer_forward.1} parent=0 // pred_check_branch
    %18 = sbr.rel (0) target = $region17
  $region16: #{residual_layer_forward.1} parent=0 // pred_region
    _
  $region17: #{residual_layer_forward.1} parent=0 // pred_fallthru
    _
  // Predicated region
  $region18: #{residual_layer_forward.1} parent=0 // pred_check
    _
  $region19: #{residual_layer_forward.1} parent=0 // pred_check_branch
    %20 = sbr.rel (0) target = $region21
  $region20: #{residual_layer_forward.1} parent=0 // pred_region
    _
  $region21: #{residual_layer_forward.1} parent=0 // pred_fallthru
    _
  // Predicated region
  $region22: #{residual_layer_forward.1} parent=0 // pred_check
    _
  $region23: #{residual_layer_forward.1} parent=0 // pred_check_branch
    %22 = sbr.rel (0) target = $region25
  $region24: #{residual_layer_forward.1} parent=0 // pred_region
    _
  $region25: #{residual_layer_forward.1} parent=0 // pred_fallthru
    _
  %v23 = vld [vmem:[%s0] sm:$0xff]
  %v24 = vld [vmem:[%s0 + $0x8] sm:$0xff]
  %v27 = vcombine.high %v23, %v23
  %v28 = vcombine.high %v24, %v24
  %31 = vrot.lane.b32.xlu0 %v23, 17
  %v32 = vpop.permute.xlu0 %31
  %33 = vrot.lane.b32.xlu0 %v27, 17
  %v34 = vpop.permute.xlu0 %33
  %35 = vrot.lane.b32.xlu0 %v24, 17
  %v36 = vpop.permute.xlu0 %35
  %37 = vrot.lane.b32.xlu0 %v28, 17
  %v38 = vpop.permute.xlu0 %37
  %v39 = vlaneseq
  %v40 = vand.u32 %v39, 127
  %vm41 = vcmp.lt.s32.totalorder %v40, 17
  %v42 = vsel %vm41, %v36, %v38
  %v43 = vsel %vm41, %v34, %v36
  %v44 = vsel %vm41, %v32, %v34
  %v45 = vsel %vm41, %v38, %v32
  %v46 = vld [vmem:[%s5] sm:$0xf]
  %v48 = vlaneseq
  %v49 = vshrl.u32 %v48, 7
  %v50 = vsub.s32 0, %v49
  %v51 = vrot.slane %v46, %v50
  %v52 = vlaneseq
  %v53 = vshrl.u32 %v52, 7
  %v54 = vsub.s32 1, %v53
  %v55 = vrot.slane %v46, %v54
  %v56 = vlaneseq
  %v57 = vshrl.u32 %v56, 7
  %v58 = vsub.s32 2, %v57
  %v59 = vrot.slane %v46, %v58
  %v60 = vlaneseq
  %v61 = vshrl.u32 %v60, 7
  %v62 = vsub.s32 3, %v61
  %v63 = vrot.slane %v46, %v62
  %v68 = vmul.f32 %v45, %v51
  %v69 = vmul.f32 %v44, %v55
  %v70 = vmul.f32 %v43, %v59
  %v71 = vmul.f32 %v42, %v63
  %v72 = vld [vmem:[%s1] sm:$0xf]
  %74 = vset.pattern.permute.xlu0 0
  %75 = vperm.xlu0 %74, %v72
  %v76 = vpop.permute.xlu0 %75
  %v78 = vlaneseq
  %v79 = vshrl.u32 %v78, 7
  %v80 = vsub.s32 0, %v79
  %v81 = vrot.slane %v68, %v80
  %v82 = vlaneseq
  %v83 = vshrl.u32 %v82, 7
  %v84 = vsub.s32 0, %v83
  %v85 = vrot.slane %v69, %v84
  %v86 = vlaneseq
  %v87 = vshrl.u32 %v86, 7
  %v88 = vsub.s32 0, %v87
  %v89 = vrot.slane %v70, %v88
  %v90 = vlaneseq
  %v91 = vshrl.u32 %v90, 7
  %v92 = vsub.s32 0, %v91
  %v93 = vrot.slane %v71, %v92
  %v94 = vmul.f32 %v76, %v81
  %v95 = vmul.f32 %v76, %v85
  %v96 = vmul.f32 %v76, %v89
  %v97 = vmul.f32 %v76, %v93
  %v98 = vadd.f32 %v94, 0.0
  %v99 = vadd.f32 %v95, 0.0
  %v100 = vadd.f32 %v96, 0.0
  %v101 = vadd.f32 %v97, 0.0
  %s102 = scalar_lea.vmem %s1, 4
  %v103 = vld [vmem:[%s102] sm:$0xf]
  %105 = vset.pattern.permute.xlu0 0
  %106 = vperm.xlu0 %105, %v103
  %v107 = vpop.permute.xlu0 %106
  %v109 = vlaneseq
  %v110 = vshrl.u32 %v109, 7
  %v111 = vsub.s32 1, %v110
  %v112 = vrot.slane %v68, %v111
  %v113 = vlaneseq
  %v114 = vshrl.u32 %v113, 7
  %v115 = vsub.s32 1, %v114
  %v116 = vrot.slane %v69, %v115
  %v117 = vlaneseq
  %v118 = vshrl.u32 %v117, 7
  %v119 = vsub.s32 1, %v118
  %v120 = vrot.slane %v70, %v119
  %v121 = vlaneseq
  %v122 = vshrl.u32 %v121, 7
  %v123 = vsub.s32 1, %v122
  %v124 = vrot.slane %v71, %v123
  %v125 = vmul.f32 %v107, %v112
  %v126 = vmul.f32 %v107, %v116
  %v127 = vmul.f32 %v107, %v120
  %v128 = vmul.f32 %v107, %v124
  %v129 = vadd.f32 %v125, 0.0
  %v130 = vadd.f32 %v126, 0.0
  %v131 = vadd.f32 %v127, 0.0
  %v132 = vadd.f32 %v128, 0.0
  %s133 = scalar_lea.vmem %s1, 8
  %v134 = vld [vmem:[%s133] sm:$0xf]
  %136 = vset.pattern.permute.xlu0 0
  %137 = vperm.xlu0 %136, %v134
  %v138 = vpop.permute.xlu0 %137
  %v140 = vlaneseq
  %v141 = vshrl.u32 %v140, 7
  %v142 = vsub.s32 2, %v141
  %v143 = vrot.slane %v68, %v142
  %v144 = vlaneseq
  %v145 = vshrl.u32 %v144, 7
  %v146 = vsub.s32 2, %v145
  %v147 = vrot.slane %v69, %v146
  %v148 = vlaneseq
  %v149 = vshrl.u32 %v148, 7
  %v150 = vsub.s32 2, %v149
  %v151 = vrot.slane %v70, %v150
  %v152 = vlaneseq
  %v153 = vshrl.u32 %v152, 7
  %v154 = vsub.s32 2, %v153
  %v155 = vrot.slane %v71, %v154
  %v156 = vmul.f32 %v138, %v143
  %v157 = vmul.f32 %v138, %v147
  %v158 = vmul.f32 %v138, %v151
  %v159 = vmul.f32 %v138, %v155
  %v160 = vadd.f32 %v156, 0.0
  %v161 = vadd.f32 %v157, 0.0
  %v162 = vadd.f32 %v158, 0.0
  %v163 = vadd.f32 %v159, 0.0
  %s164 = scalar_lea.vmem %s1, 12
  %v165 = vld [vmem:[%s164] sm:$0xf]
  %167 = vset.pattern.permute.xlu0 0
  %168 = vperm.xlu0 %167, %v165
  %v169 = vpop.permute.xlu0 %168
  %v171 = vlaneseq
  %v172 = vshrl.u32 %v171, 7
  %v173 = vsub.s32 3, %v172
  %v174 = vrot.slane %v68, %v173
  %v175 = vlaneseq
  %v176 = vshrl.u32 %v175, 7
  %v177 = vsub.s32 3, %v176
  %v178 = vrot.slane %v69, %v177
  %v179 = vlaneseq
  %v180 = vshrl.u32 %v179, 7
  %v181 = vsub.s32 3, %v180
  %v182 = vrot.slane %v70, %v181
  %v183 = vlaneseq
  %v184 = vshrl.u32 %v183, 7
  %v185 = vsub.s32 3, %v184
  %v186 = vrot.slane %v71, %v185
  %v187 = vmul.f32 %v169, %v174
  %v188 = vmul.f32 %v169, %v178
  %v189 = vmul.f32 %v169, %v182
  %v190 = vmul.f32 %v169, %v186
  %v191 = vadd.f32 %v187, 0.0
  %v192 = vadd.f32 %v188, 0.0
  %v193 = vadd.f32 %v189, 0.0
  %v194 = vadd.f32 %v190, 0.0
  %195 = vrot.lane.b32.xlu0 %v23, 16
  %v196 = vpop.permute.xlu0 %195
  %197 = vrot.lane.b32.xlu0 %v27, 16
  %v198 = vpop.permute.xlu0 %197
  %199 = vrot.lane.b32.xlu0 %v24, 16
  %v200 = vpop.permute.xlu0 %199
  %201 = vrot.lane.b32.xlu0 %v28, 16
  %v202 = vpop.permute.xlu0 %201
  %vm203 = vcmp.lt.s32.totalorder %v40, 16
  %v204 = vsel %vm203, %v200, %v202
  %v205 = vsel %vm203, %v198, %v200
  %v206 = vsel %vm203, %v196, %v198
  %v207 = vsel %vm203, %v202, %v196
  %s208 = scalar_lea.vmem %s5, 4
  %v209 = vld [vmem:[%s208] sm:$0xf]
  %v211 = vlaneseq
  %v212 = vshrl.u32 %v211, 7
  %v213 = vsub.s32 0, %v212
  %v214 = vrot.slane %v209, %v213
  %v215 = vlaneseq
  %v216 = vshrl.u32 %v215, 7
  %v217 = vsub.s32 1, %v216
  %v218 = vrot.slane %v209, %v217
  %v219 = vlaneseq
  %v220 = vshrl.u32 %v219, 7
  %v221 = vsub.s32 2, %v220
  %v222 = vrot.slane %v209, %v221
  %v223 = vlaneseq
  %v224 = vshrl.u32 %v223, 7
  %v225 = vsub.s32 3, %v224
  %v226 = vrot.slane %v209, %v225
  %v231 = vmul.f32 %v207, %v214
  %v232 = vmul.f32 %v206, %v218
  %v233 = vmul.f32 %v205, %v222
  %v234 = vmul.f32 %v204, %v226
  %s235 = scalar_lea.vmem %s1, 16
  %v236 = vld [vmem:[%s235] sm:$0xf]
  %238 = vset.pattern.permute.xlu0 0
  %239 = vperm.xlu0 %238, %v236
  %v240 = vpop.permute.xlu0 %239
  %v242 = vlaneseq
  %v243 = vshrl.u32 %v242, 7
  %v244 = vsub.s32 0, %v243
  %v245 = vrot.slane %v231, %v244
  %v246 = vlaneseq
  %v247 = vshrl.u32 %v246, 7
  %v248 = vsub.s32 0, %v247
  %v249 = vrot.slane %v232, %v248
  %v250 = vlaneseq
  %v251 = vshrl.u32 %v250, 7
  %v252 = vsub.s32 0, %v251
  %v253 = vrot.slane %v233, %v252
  %v254 = vlaneseq
  %v255 = vshrl.u32 %v254, 7
  %v256 = vsub.s32 0, %v255
  %v257 = vrot.slane %v234, %v256
  %v258 = vmul.f32 %v240, %v245
  %v259 = vmul.f32 %v240, %v249
  %v260 = vmul.f32 %v240, %v253
  %v261 = vmul.f32 %v240, %v257
  %v262 = vadd.f32 %v98, %v258
  %v263 = vadd.f32 %v99, %v259
  %v264 = vadd.f32 %v100, %v260
  %v265 = vadd.f32 %v101, %v261
  %s266 = scalar_lea.vmem %s1, 20
  %v267 = vld [vmem:[%s266] sm:$0xf]
  %269 = vset.pattern.permute.xlu0 0
  %270 = vperm.xlu0 %269, %v267
  %v271 = vpop.permute.xlu0 %270
  %v273 = vlaneseq
  %v274 = vshrl.u32 %v273, 7
  %v275 = vsub.s32 1, %v274
  %v276 = vrot.slane %v231, %v275
  %v277 = vlaneseq
  %v278 = vshrl.u32 %v277, 7
  %v279 = vsub.s32 1, %v278
  %v280 = vrot.slane %v232, %v279
  %v281 = vlaneseq
  %v282 = vshrl.u32 %v281, 7
  %v283 = vsub.s32 1, %v282
  %v284 = vrot.slane %v233, %v283
  %v285 = vlaneseq
  %v286 = vshrl.u32 %v285, 7
  %v287 = vsub.s32 1, %v286
  %v288 = vrot.slane %v234, %v287
  %v289 = vmul.f32 %v271, %v276
  %v290 = vmul.f32 %v271, %v280
  %v291 = vmul.f32 %v271, %v284
  %v292 = vmul.f32 %v271, %v288
  %v293 = vadd.f32 %v129, %v289
  %v294 = vadd.f32 %v130, %v290
  %v295 = vadd.f32 %v131, %v291
  %v296 = vadd.f32 %v132, %v292
  %s297 = scalar_lea.vmem %s1, 24
  %v298 = vld [vmem:[%s297] sm:$0xf]
  %300 = vset.pattern.permute.xlu0 0
  %301 = vperm.xlu0 %300, %v298
  %v302 = vpop.permute.xlu0 %301
  %v304 = vlaneseq
  %v305 = vshrl.u32 %v304, 7
  %v306 = vsub.s32 2, %v305
  %v307 = vrot.slane %v231, %v306
  %v308 = vlaneseq
  %v309 = vshrl.u32 %v308, 7
  %v310 = vsub.s32 2, %v309
  %v311 = vrot.slane %v232, %v310
  %v312 = vlaneseq
  %v313 = vshrl.u32 %v312, 7
  %v314 = vsub.s32 2, %v313
  %v315 = vrot.slane %v233, %v314
  %v316 = vlaneseq
  %v317 = vshrl.u32 %v316, 7
  %v318 = vsub.s32 2, %v317
  %v319 = vrot.slane %v234, %v318
  %v320 = vmul.f32 %v302, %v307
  %v321 = vmul.f32 %v302, %v311
  %v322 = vmul.f32 %v302, %v315
  %v323 = vmul.f32 %v302, %v319
  %v324 = vadd.f32 %v160, %v320
  %v325 = vadd.f32 %v161, %v321
  %v326 = vadd.f32 %v162, %v322
  %v327 = vadd.f32 %v163, %v323
  %s328 = scalar_lea.vmem %s1, 28
  %v329 = vld [vmem:[%s328] sm:$0xf]
  %331 = vset.pattern.permute.xlu0 0
  %332 = vperm.xlu0 %331, %v329
  %v333 = vpop.permute.xlu0 %332
  %v335 = vlaneseq
  %v336 = vshrl.u32 %v335, 7
  %v337 = vsub.s32 3, %v336
  %v338 = vrot.slane %v231, %v337
  %v339 = vlaneseq
  %v340 = vshrl.u32 %v339, 7
  %v341 = vsub.s32 3, %v340
  %v342 = vrot.slane %v232, %v341
  %v343 = vlaneseq
  %v344 = vshrl.u32 %v343, 7
  %v345 = vsub.s32 3, %v344
  %v346 = vrot.slane %v233, %v345
  %v347 = vlaneseq
  %v348 = vshrl.u32 %v347, 7
  %v349 = vsub.s32 3, %v348
  %v350 = vrot.slane %v234, %v349
  %v351 = vmul.f32 %v333, %v338
  %v352 = vmul.f32 %v333, %v342
  %v353 = vmul.f32 %v333, %v346
  %v354 = vmul.f32 %v333, %v350
  %v355 = vadd.f32 %v191, %v351
  %v356 = vadd.f32 %v192, %v352
  %v357 = vadd.f32 %v193, %v353
  %v358 = vadd.f32 %v194, %v354
  %359 = vrot.lane.b32.xlu0 %v23, 15
  %v360 = vpop.permute.xlu0 %359
  %361 = vrot.lane.b32.xlu0 %v27, 15
  %v362 = vpop.permute.xlu0 %361
  %363 = vrot.lane.b32.xlu0 %v24, 15
  %v364 = vpop.permute.xlu0 %363
  %365 = vrot.lane.b32.xlu0 %v28, 15
  %v366 = vpop.permute.xlu0 %365
  %vm367 = vcmp.lt.s32.totalorder %v40, 15
  %v368 = vsel %vm367, %v364, %v366
  %v369 = vsel %vm367, %v362, %v364
  %v370 = vsel %vm367, %v360, %v362
  %v371 = vsel %vm367, %v366, %v360
  %s372 = scalar_lea.vmem %s5, 8
  %v373 = vld [vmem:[%s372] sm:$0xf]
  %v375 = vlaneseq
  %v376 = vshrl.u32 %v375, 7
  %v377 = vsub.s32 0, %v376
  %v378 = vrot.slane %v373, %v377
  %v379 = vlaneseq
  %v380 = vshrl.u32 %v379, 7
  %v381 = vsub.s32 1, %v380
  %v382 = vrot.slane %v373, %v381
  %v383 = vlaneseq
  %v384 = vshrl.u32 %v383, 7
  %v385 = vsub.s32 2, %v384
  %v386 = vrot.slane %v373, %v385
  %v387 = vlaneseq
  %v388 = vshrl.u32 %v387, 7
  %v389 = vsub.s32 3, %v388
  %v390 = vrot.slane %v373, %v389
  %v395 = vmul.f32 %v371, %v378
  %v396 = vmul.f32 %v370, %v382
  %v397 = vmul.f32 %v369, %v386
  %v398 = vmul.f32 %v368, %v390
  %s399 = scalar_lea.vmem %s1, 32
  %v400 = vld [vmem:[%s399] sm:$0xf]
  %402 = vset.pattern.permute.xlu0 0
  %403 = vperm.xlu0 %402, %v400
  %v404 = vpop.permute.xlu0 %403
  %v406 = vlaneseq
  %v407 = vshrl.u32 %v406, 7
  %v408 = vsub.s32 0, %v407
  %v409 = vrot.slane %v395, %v408
  %v410 = vlaneseq
  %v411 = vshrl.u32 %v410, 7
  %v412 = vsub.s32 0, %v411
  %v413 = vrot.slane %v396, %v412
  %v414 = vlaneseq
  %v415 = vshrl.u32 %v414, 7
  %v416 = vsub.s32 0, %v415
  %v417 = vrot.slane %v397, %v416
  %v418 = vlaneseq
  %v419 = vshrl.u32 %v418, 7
  %v420 = vsub.s32 0, %v419
  %v421 = vrot.slane %v398, %v420
  %v422 = vmul.f32 %v404, %v409
  %v423 = vmul.f32 %v404, %v413
  %v424 = vmul.f32 %v404, %v417
  %v425 = vmul.f32 %v404, %v421
  %v426 = vadd.f32 %v262, %v422
  %v427 = vadd.f32 %v263, %v423
  %v428 = vadd.f32 %v264, %v424
  %v429 = vadd.f32 %v265, %v425
  %s430 = scalar_lea.vmem %s1, 36
  %v431 = vld [vmem:[%s430] sm:$0xf]
  %433 = vset.pattern.permute.xlu0 0
  %434 = vperm.xlu0 %433, %v431
  %v435 = vpop.permute.xlu0 %434
  %v437 = vlaneseq
  %v438 = vshrl.u32 %v437, 7
  %v439 = vsub.s32 1, %v438
  %v440 = vrot.slane %v395, %v439
  %v441 = vlaneseq
  %v442 = vshrl.u32 %v441, 7
  %v443 = vsub.s32 1, %v442
  %v444 = vrot.slane %v396, %v443
  %v445 = vlaneseq
  %v446 = vshrl.u32 %v445, 7
  %v447 = vsub.s32 1, %v446
  %v448 = vrot.slane %v397, %v447
  %v449 = vlaneseq
  %v450 = vshrl.u32 %v449, 7
  %v451 = vsub.s32 1, %v450
  %v452 = vrot.slane %v398, %v451
  %v453 = vmul.f32 %v435, %v440
  %v454 = vmul.f32 %v435, %v444
  %v455 = vmul.f32 %v435, %v448
  %v456 = vmul.f32 %v435, %v452
  %v457 = vadd.f32 %v293, %v453
  %v458 = vadd.f32 %v294, %v454
  %v459 = vadd.f32 %v295, %v455
  %v460 = vadd.f32 %v296, %v456
  %s461 = scalar_lea.vmem %s1, 40
  %v462 = vld [vmem:[%s461] sm:$0xf]
  %464 = vset.pattern.permute.xlu0 0
  %465 = vperm.xlu0 %464, %v462
  %v466 = vpop.permute.xlu0 %465
  %v468 = vlaneseq
  %v469 = vshrl.u32 %v468, 7
  %v470 = vsub.s32 2, %v469
  %v471 = vrot.slane %v395, %v470
  %v472 = vlaneseq
  %v473 = vshrl.u32 %v472, 7
  %v474 = vsub.s32 2, %v473
  %v475 = vrot.slane %v396, %v474
  %v476 = vlaneseq
  %v477 = vshrl.u32 %v476, 7
  %v478 = vsub.s32 2, %v477
  %v479 = vrot.slane %v397, %v478
  %v480 = vlaneseq
  %v481 = vshrl.u32 %v480, 7
  %v482 = vsub.s32 2, %v481
  %v483 = vrot.slane %v398, %v482
  %v484 = vmul.f32 %v466, %v471
  %v485 = vmul.f32 %v466, %v475
  %v486 = vmul.f32 %v466, %v479
  %v487 = vmul.f32 %v466, %v483
  %v488 = vadd.f32 %v324, %v484
  %v489 = vadd.f32 %v325, %v485
  %v490 = vadd.f32 %v326, %v486
  %v491 = vadd.f32 %v327, %v487
  %s492 = scalar_lea.vmem %s1, 44
  %v493 = vld [vmem:[%s492] sm:$0xf]
  %495 = vset.pattern.permute.xlu0 0
  %496 = vperm.xlu0 %495, %v493
  %v497 = vpop.permute.xlu0 %496
  %v499 = vlaneseq
  %v500 = vshrl.u32 %v499, 7
  %v501 = vsub.s32 3, %v500
  %v502 = vrot.slane %v395, %v501
  %v503 = vlaneseq
  %v504 = vshrl.u32 %v503, 7
  %v505 = vsub.s32 3, %v504
  %v506 = vrot.slane %v396, %v505
  %v507 = vlaneseq
  %v508 = vshrl.u32 %v507, 7
  %v509 = vsub.s32 3, %v508
  %v510 = vrot.slane %v397, %v509
  %v511 = vlaneseq
  %v512 = vshrl.u32 %v511, 7
  %v513 = vsub.s32 3, %v512
  %v514 = vrot.slane %v398, %v513
  %v515 = vmul.f32 %v497, %v502
  %v516 = vmul.f32 %v497, %v506
  %v517 = vmul.f32 %v497, %v510
  %v518 = vmul.f32 %v497, %v514
  %v519 = vadd.f32 %v355, %v515
  %v520 = vadd.f32 %v356, %v516
  %v521 = vadd.f32 %v357, %v517
  %v522 = vadd.f32 %v358, %v518
  %523 = vrot.lane.b32.xlu0 %v23, 1
  %v524 = vpop.permute.xlu0 %523
  %525 = vrot.lane.b32.xlu0 %v27, 1
  %v526 = vpop.permute.xlu0 %525
  %527 = vrot.lane.b32.xlu0 %v24, 1
  %v528 = vpop.permute.xlu0 %527
  %529 = vrot.lane.b32.xlu0 %v28, 1
  %v530 = vpop.permute.xlu0 %529
  %vm531 = vcmp.lt.s32.totalorder %v40, 1
  %v532 = vsel %vm531, %v528, %v530
  %v533 = vsel %vm531, %v526, %v528
  %v534 = vsel %vm531, %v524, %v526
  %v535 = vsel %vm531, %v530, %v524
  %s536 = scalar_lea.vmem %s5, 12
  %v537 = vld [vmem:[%s536] sm:$0xf]
  %v539 = vlaneseq
  %v540 = vshrl.u32 %v539, 7
  %v541 = vsub.s32 0, %v540
  %v542 = vrot.slane %v537, %v541
  %v543 = vlaneseq
  %v544 = vshrl.u32 %v543, 7
  %v545 = vsub.s32 1, %v544
  %v546 = vrot.slane %v537, %v545
  %v547 = vlaneseq
  %v548 = vshrl.u32 %v547, 7
  %v549 = vsub.s32 2, %v548
  %v550 = vrot.slane %v537, %v549
  %v551 = vlaneseq
  %v552 = vshrl.u32 %v551, 7
  %v553 = vsub.s32 3, %v552
  %v554 = vrot.slane %v537, %v553
  %v559 = vmul.f32 %v535, %v542
  %v560 = vmul.f32 %v534, %v546
  %v561 = vmul.f32 %v533, %v550
  %v562 = vmul.f32 %v532, %v554
  %s563 = scalar_lea.vmem %s1, 48
  %v564 = vld [vmem:[%s563] sm:$0xf]
  %566 = vset.pattern.permute.xlu0 0
  %567 = vperm.xlu0 %566, %v564
  %v568 = vpop.permute.xlu0 %567
  %v570 = vlaneseq
  %v571 = vshrl.u32 %v570, 7
  %v572 = vsub.s32 0, %v571
  %v573 = vrot.slane %v559, %v572
  %v574 = vlaneseq
  %v575 = vshrl.u32 %v574, 7
  %v576 = vsub.s32 0, %v575
  %v577 = vrot.slane %v560, %v576
  %v578 = vlaneseq
  %v579 = vshrl.u32 %v578, 7
  %v580 = vsub.s32 0, %v579
  %v581 = vrot.slane %v561, %v580
  %v582 = vlaneseq
  %v583 = vshrl.u32 %v582, 7
  %v584 = vsub.s32 0, %v583
  %v585 = vrot.slane %v562, %v584
  %v586 = vmul.f32 %v568, %v573
  %v587 = vmul.f32 %v568, %v577
  %v588 = vmul.f32 %v568, %v581
  %v589 = vmul.f32 %v568, %v585
  %v590 = vadd.f32 %v426, %v586
  %v591 = vadd.f32 %v427, %v587
  %v592 = vadd.f32 %v428, %v588
  %v593 = vadd.f32 %v429, %v589
  %s594 = scalar_lea.vmem %s1, 52
  %v595 = vld [vmem:[%s594] sm:$0xf]
  %597 = vset.pattern.permute.xlu0 0
  %598 = vperm.xlu0 %597, %v595
  %v599 = vpop.permute.xlu0 %598
  %v601 = vlaneseq
  %v602 = vshrl.u32 %v601, 7
  %v603 = vsub.s32 1, %v602
  %v604 = vrot.slane %v559, %v603
  %v605 = vlaneseq
  %v606 = vshrl.u32 %v605, 7
  %v607 = vsub.s32 1, %v606
  %v608 = vrot.slane %v560, %v607
  %v609 = vlaneseq
  %v610 = vshrl.u32 %v609, 7
  %v611 = vsub.s32 1, %v610
  %v612 = vrot.slane %v561, %v611
  %v613 = vlaneseq
  %v614 = vshrl.u32 %v613, 7
  %v615 = vsub.s32 1, %v614
  %v616 = vrot.slane %v562, %v615
  %v617 = vmul.f32 %v599, %v604
  %v618 = vmul.f32 %v599, %v608
  %v619 = vmul.f32 %v599, %v612
  %v620 = vmul.f32 %v599, %v616
  %v621 = vadd.f32 %v457, %v617
  %v622 = vadd.f32 %v458, %v618
  %v623 = vadd.f32 %v459, %v619
  %v624 = vadd.f32 %v460, %v620
  %s625 = scalar_lea.vmem %s1, 56
  %v626 = vld [vmem:[%s625] sm:$0xf]
  %628 = vset.pattern.permute.xlu0 0
  %629 = vperm.xlu0 %628, %v626
  %v630 = vpop.permute.xlu0 %629
  %v632 = vlaneseq
  %v633 = vshrl.u32 %v632, 7
  %v634 = vsub.s32 2, %v633
  %v635 = vrot.slane %v559, %v634
  %v636 = vlaneseq
  %v637 = vshrl.u32 %v636, 7
  %v638 = vsub.s32 2, %v637
  %v639 = vrot.slane %v560, %v638
  %v640 = vlaneseq
  %v641 = vshrl.u32 %v640, 7
  %v642 = vsub.s32 2, %v641
  %v643 = vrot.slane %v561, %v642
  %v644 = vlaneseq
  %v645 = vshrl.u32 %v644, 7
  %v646 = vsub.s32 2, %v645
  %v647 = vrot.slane %v562, %v646
  %v648 = vmul.f32 %v630, %v635
  %v649 = vmul.f32 %v630, %v639
  %v650 = vmul.f32 %v630, %v643
  %v651 = vmul.f32 %v630, %v647
  %v652 = vadd.f32 %v488, %v648
  %v653 = vadd.f32 %v489, %v649
  %v654 = vadd.f32 %v490, %v650
  %v655 = vadd.f32 %v491, %v651
  %s656 = scalar_lea.vmem %s1, 60
  %v657 = vld [vmem:[%s656] sm:$0xf]
  %659 = vset.pattern.permute.xlu0 0
  %660 = vperm.xlu0 %659, %v657
  %v661 = vpop.permute.xlu0 %660
  %v663 = vlaneseq
  %v664 = vshrl.u32 %v663, 7
  %v665 = vsub.s32 3, %v664
  %v666 = vrot.slane %v559, %v665
  %v667 = vlaneseq
  %v668 = vshrl.u32 %v667, 7
  %v669 = vsub.s32 3, %v668
  %v670 = vrot.slane %v560, %v669
  %v671 = vlaneseq
  %v672 = vshrl.u32 %v671, 7
  %v673 = vsub.s32 3, %v672
  %v674 = vrot.slane %v561, %v673
  %v675 = vlaneseq
  %v676 = vshrl.u32 %v675, 7
  %v677 = vsub.s32 3, %v676
  %v678 = vrot.slane %v562, %v677
  %v679 = vmul.f32 %v661, %v666
  %v680 = vmul.f32 %v661, %v670
  %v681 = vmul.f32 %v661, %v674
  %v682 = vmul.f32 %v661, %v678
  %v683 = vadd.f32 %v519, %v679
  %v684 = vadd.f32 %v520, %v680
  %v685 = vadd.f32 %v521, %v681
  %v686 = vadd.f32 %v522, %v682
  %s687 = scalar_lea.vmem %s1, 64
  %v688 = vld [vmem:[%s687] sm:$0xf]
  %690 = vset.pattern.permute.xlu0 0
  %691 = vperm.xlu0 %690, %v688
  %v692 = vpop.permute.xlu0 %691
  %v694 = vlaneseq
  %v695 = vshrl.u32 %v694, 7
  %v696 = vsub.s32 0, %v695
  %v697 = vrot.slane %v23, %v696
  %v698 = vlaneseq
  %v699 = vshrl.u32 %v698, 7
  %v700 = vsub.s32 4, %v699
  %v701 = vrot.slane %v23, %v700
  %v702 = vlaneseq
  %v703 = vshrl.u32 %v702, 7
  %v704 = vsub.s32 0, %v703
  %v705 = vrot.slane %v24, %v704
  %v706 = vlaneseq
  %v707 = vshrl.u32 %v706, 7
  %v708 = vsub.s32 4, %v707
  %v709 = vrot.slane %v24, %v708
  %v714 = vlaneseq
  %v715 = vshrl.u32 %v714, 7
  %v716 = vsub.s32 0, %v715
  %v717 = vrot.slane %v697, %v716
  %v718 = vlaneseq
  %v719 = vshrl.u32 %v718, 7
  %v720 = vsub.s32 0, %v719
  %v721 = vrot.slane %v701, %v720
  %v722 = vlaneseq
  %v723 = vshrl.u32 %v722, 7
  %v724 = vsub.s32 0, %v723
  %v725 = vrot.slane %v705, %v724
  %v726 = vlaneseq
  %v727 = vshrl.u32 %v726, 7
  %v728 = vsub.s32 0, %v727
  %v729 = vrot.slane %v709, %v728
  %v730 = vmul.f32 %v692, %v717
  %v731 = vmul.f32 %v692, %v721
  %v732 = vmul.f32 %v692, %v725
  %v733 = vmul.f32 %v692, %v729
  %v734 = vadd.f32 %v590, %v730
  %v735 = vadd.f32 %v591, %v731
  %v736 = vadd.f32 %v592, %v732
  %v737 = vadd.f32 %v593, %v733
  %s738 = scalar_lea.vmem %s1, 68
  %v739 = vld [vmem:[%s738] sm:$0xf]
  %741 = vset.pattern.permute.xlu0 0
  %742 = vperm.xlu0 %741, %v739
  %v743 = vpop.permute.xlu0 %742
  %v745 = vlaneseq
  %v746 = vshrl.u32 %v745, 7
  %v747 = vsub.s32 1, %v746
  %v748 = vrot.slane %v23, %v747
  %v749 = vlaneseq
  %v750 = vshrl.u32 %v749, 7
  %v751 = vsub.s32 5, %v750
  %v752 = vrot.slane %v23, %v751
  %v753 = vlaneseq
  %v754 = vshrl.u32 %v753, 7
  %v755 = vsub.s32 1, %v754
  %v756 = vrot.slane %v24, %v755
  %v757 = vlaneseq
  %v758 = vshrl.u32 %v757, 7
  %v759 = vsub.s32 5, %v758
  %v760 = vrot.slane %v24, %v759
  %v765 = vlaneseq
  %v766 = vshrl.u32 %v765, 7
  %v767 = vsub.s32 1, %v766
  %v768 = vrot.slane %v748, %v767
  %v769 = vlaneseq
  %v770 = vshrl.u32 %v769, 7
  %v771 = vsub.s32 1, %v770
  %v772 = vrot.slane %v752, %v771
  %v773 = vlaneseq
  %v774 = vshrl.u32 %v773, 7
  %v775 = vsub.s32 1, %v774
  %v776 = vrot.slane %v756, %v775
  %v777 = vlaneseq
  %v778 = vshrl.u32 %v777, 7
  %v779 = vsub.s32 1, %v778
  %v780 = vrot.slane %v760, %v779
  %v781 = vmul.f32 %v743, %v768
  %v782 = vmul.f32 %v743, %v772
  %v783 = vmul.f32 %v743, %v776
  %v784 = vmul.f32 %v743, %v780
  %v785 = vadd.f32 %v621, %v781
  %v786 = vadd.f32 %v622, %v782
  %v787 = vadd.f32 %v623, %v783
  %v788 = vadd.f32 %v624, %v784
  %s789 = scalar_lea.vmem %s1, 72
  %v790 = vld [vmem:[%s789] sm:$0xf]
  %792 = vset.pattern.permute.xlu0 0
  %793 = vperm.xlu0 %792, %v790
  %v794 = vpop.permute.xlu0 %793
  %v796 = vlaneseq
  %v797 = vshrl.u32 %v796, 7
  %v798 = vsub.s32 2, %v797
  %v799 = vrot.slane %v23, %v798
  %v800 = vlaneseq
  %v801 = vshrl.u32 %v800, 7
  %v802 = vsub.s32 6, %v801
  %v803 = vrot.slane %v23, %v802
  %v804 = vlaneseq
  %v805 = vshrl.u32 %v804, 7
  %v806 = vsub.s32 2, %v805
  %v807 = vrot.slane %v24, %v806
  %v808 = vlaneseq
  %v809 = vshrl.u32 %v808, 7
  %v810 = vsub.s32 6, %v809
  %v811 = vrot.slane %v24, %v810
  %v816 = vlaneseq
  %v817 = vshrl.u32 %v816, 7
  %v818 = vsub.s32 2, %v817
  %v819 = vrot.slane %v799, %v818
  %v820 = vlaneseq
  %v821 = vshrl.u32 %v820, 7
  %v822 = vsub.s32 2, %v821
  %v823 = vrot.slane %v803, %v822
  %v824 = vlaneseq
  %v825 = vshrl.u32 %v824, 7
  %v826 = vsub.s32 2, %v825
  %v827 = vrot.slane %v807, %v826
  %v828 = vlaneseq
  %v829 = vshrl.u32 %v828, 7
  %v830 = vsub.s32 2, %v829
  %v831 = vrot.slane %v811, %v830
  %v832 = vmul.f32 %v794, %v819
  %v833 = vmul.f32 %v794, %v823
  %v834 = vmul.f32 %v794, %v827
  %v835 = vmul.f32 %v794, %v831
  %v836 = vadd.f32 %v652, %v832
  %v837 = vadd.f32 %v653, %v833
  %v838 = vadd.f32 %v654, %v834
  %v839 = vadd.f32 %v655, %v835
  %s840 = scalar_lea.vmem %s1, 76
  %v841 = vld [vmem:[%s840] sm:$0xf]
  %843 = vset.pattern.permute.xlu0 0
  %844 = vperm.xlu0 %843, %v841
  %v845 = vpop.permute.xlu0 %844
  %v847 = vlaneseq
  %v848 = vshrl.u32 %v847, 7
  %v849 = vsub.s32 3, %v848
  %v850 = vrot.slane %v23, %v849
  %v851 = vlaneseq
  %v852 = vshrl.u32 %v851, 7
  %v853 = vsub.s32 7, %v852
  %v854 = vrot.slane %v23, %v853
  %v855 = vlaneseq
  %v856 = vshrl.u32 %v855, 7
  %v857 = vsub.s32 3, %v856
  %v858 = vrot.slane %v24, %v857
  %v859 = vlaneseq
  %v860 = vshrl.u32 %v859, 7
  %v861 = vsub.s32 7, %v860
  %v862 = vrot.slane %v24, %v861
  %v867 = vlaneseq
  %v868 = vshrl.u32 %v867, 7
  %v869 = vsub.s32 3, %v868
  %v870 = vrot.slane %v850, %v869
  %v871 = vlaneseq
  %v872 = vshrl.u32 %v871, 7
  %v873 = vsub.s32 3, %v872
  %v874 = vrot.slane %v854, %v873
  %v875 = vlaneseq
  %v876 = vshrl.u32 %v875, 7
  %v877 = vsub.s32 3, %v876
  %v878 = vrot.slane %v858, %v877
  %v879 = vlaneseq
  %v880 = vshrl.u32 %v879, 7
  %v881 = vsub.s32 3, %v880
  %v882 = vrot.slane %v862, %v881
  %v883 = vmul.f32 %v845, %v870
  %v884 = vmul.f32 %v845, %v874
  %v885 = vmul.f32 %v845, %v878
  %v886 = vmul.f32 %v845, %v882
  %v887 = vadd.f32 %v683, %v883
  %v888 = vadd.f32 %v684, %v884
  %v889 = vadd.f32 %v685, %v885
  %v890 = vadd.f32 %v686, %v886
  %891 = vrot.lane.b32.xlu0 %v23, 127
  %v892 = vpop.permute.xlu0 %891
  %893 = vrot.lane.b32.xlu0 %v27, 127
  %v894 = vpop.permute.xlu0 %893
  %895 = vrot.lane.b32.xlu0 %v24, 127
  %v896 = vpop.permute.xlu0 %895
  %897 = vrot.lane.b32.xlu0 %v28, 127
  %v898 = vpop.permute.xlu0 %897
  %vm899 = vcmp.lt.s32.totalorder %v40, 127
  %v900 = vsel %vm899, %v896, %v898
  %v901 = vsel %vm899, %v894, %v896
  %v902 = vsel %vm899, %v892, %v894
  %v903 = vsel %vm899, %v898, %v892
  %s904 = scalar_lea.vmem %s5, 20
  %v905 = vld [vmem:[%s904] sm:$0xf]
  %v907 = vlaneseq
  %v908 = vshrl.u32 %v907, 7
  %v909 = vsub.s32 0, %v908
  %v910 = vrot.slane %v905, %v909
  %v911 = vlaneseq
  %v912 = vshrl.u32 %v911, 7
  %v913 = vsub.s32 1, %v912
  %v914 = vrot.slane %v905, %v913
  %v915 = vlaneseq
  %v916 = vshrl.u32 %v915, 7
  %v917 = vsub.s32 2, %v916
  %v918 = vrot.slane %v905, %v917
  %v919 = vlaneseq
  %v920 = vshrl.u32 %v919, 7
  %v921 = vsub.s32 3, %v920
  %v922 = vrot.slane %v905, %v921
  %v927 = vmul.f32 %v902, %v910
  %v928 = vmul.f32 %v901, %v914
  %v929 = vmul.f32 %v900, %v918
  %v930 = vmul.f32 %v903, %v922
  %s931 = scalar_lea.vmem %s1, 80
  %v932 = vld [vmem:[%s931] sm:$0xf]
  %934 = vset.pattern.permute.xlu0 0
  %935 = vperm.xlu0 %934, %v932
  %v936 = vpop.permute.xlu0 %935
  %v938 = vlaneseq
  %v939 = vshrl.u32 %v938, 7
  %v940 = vsub.s32 0, %v939
  %v941 = vrot.slane %v927, %v940
  %v942 = vlaneseq
  %v943 = vshrl.u32 %v942, 7
  %v944 = vsub.s32 0, %v943
  %v945 = vrot.slane %v928, %v944
  %v946 = vlaneseq
  %v947 = vshrl.u32 %v946, 7
  %v948 = vsub.s32 0, %v947
  %v949 = vrot.slane %v929, %v948
  %v950 = vlaneseq
  %v951 = vshrl.u32 %v950, 7
  %v952 = vsub.s32 0, %v951
  %v953 = vrot.slane %v930, %v952
  %v954 = vmul.f32 %v936, %v941
  %v955 = vmul.f32 %v936, %v945
  %v956 = vmul.f32 %v936, %v949
  %v957 = vmul.f32 %v936, %v953
  %v958 = vadd.f32 %v734, %v954
  %v959 = vadd.f32 %v735, %v955
  %v960 = vadd.f32 %v736, %v956
  %v961 = vadd.f32 %v737, %v957
  %s962 = scalar_lea.vmem %s1, 84
  %v963 = vld [vmem:[%s962] sm:$0xf]
  %965 = vset.pattern.permute.xlu0 0
  %966 = vperm.xlu0 %965, %v963
  %v967 = vpop.permute.xlu0 %966
  %v969 = vlaneseq
  %v970 = vshrl.u32 %v969, 7
  %v971 = vsub.s32 1, %v970
  %v972 = vrot.slane %v927, %v971
  %v973 = vlaneseq
  %v974 = vshrl.u32 %v973, 7
  %v975 = vsub.s32 1, %v974
  %v976 = vrot.slane %v928, %v975
  %v977 = vlaneseq
  %v978 = vshrl.u32 %v977, 7
  %v979 = vsub.s32 1, %v978
  %v980 = vrot.slane %v929, %v979
  %v981 = vlaneseq
  %v982 = vshrl.u32 %v981, 7
  %v983 = vsub.s32 1, %v982
  %v984 = vrot.slane %v930, %v983
  %v985 = vmul.f32 %v967, %v972
  %v986 = vmul.f32 %v967, %v976
  %v987 = vmul.f32 %v967, %v980
  %v988 = vmul.f32 %v967, %v984
  %v989 = vadd.f32 %v785, %v985
  %v990 = vadd.f32 %v786, %v986
  %v991 = vadd.f32 %v787, %v987
  %v992 = vadd.f32 %v788, %v988
  %s993 = scalar_lea.vmem %s1, 88
  %v994 = vld [vmem:[%s993] sm:$0xf]
  %996 = vset.pattern.permute.xlu0 0
  %997 = vperm.xlu0 %996, %v994
  %v998 = vpop.permute.xlu0 %997
  %v1000 = vlaneseq
  %v1001 = vshrl.u32 %v1000, 7
  %v1002 = vsub.s32 2, %v1001
  %v1003 = vrot.slane %v927, %v1002
  %v1004 = vlaneseq
  %v1005 = vshrl.u32 %v1004, 7
  %v1006 = vsub.s32 2, %v1005
  %v1007 = vrot.slane %v928, %v1006
  %v1008 = vlaneseq
  %v1009 = vshrl.u32 %v1008, 7
  %v1010 = vsub.s32 2, %v1009
  %v1011 = vrot.slane %v929, %v1010
  %v1012 = vlaneseq
  %v1013 = vshrl.u32 %v1012, 7
  %v1014 = vsub.s32 2, %v1013
  %v1015 = vrot.slane %v930, %v1014
  %v1016 = vmul.f32 %v998, %v1003
  %v1017 = vmul.f32 %v998, %v1007
  %v1018 = vmul.f32 %v998, %v1011
  %v1019 = vmul.f32 %v998, %v1015
  %v1020 = vadd.f32 %v836, %v1016
  %v1021 = vadd.f32 %v837, %v1017
  %v1022 = vadd.f32 %v838, %v1018
  %v1023 = vadd.f32 %v839, %v1019
  %s1024 = scalar_lea.vmem %s1, 92
  %v1025 = vld [vmem:[%s1024] sm:$0xf]
  %1027 = vset.pattern.permute.xlu0 0
  %1028 = vperm.xlu0 %1027, %v1025
  %v1029 = vpop.permute.xlu0 %1028
  %v1031 = vlaneseq
  %v1032 = vshrl.u32 %v1031, 7
  %v1033 = vsub.s32 3, %v1032
  %v1034 = vrot.slane %v927, %v1033
  %v1035 = vlaneseq
  %v1036 = vshrl.u32 %v1035, 7
  %v1037 = vsub.s32 3, %v1036
  %v1038 = vrot.slane %v928, %v1037
  %v1039 = vlaneseq
  %v1040 = vshrl.u32 %v1039, 7
  %v1041 = vsub.s32 3, %v1040
  %v1042 = vrot.slane %v929, %v1041
  %v1043 = vlaneseq
  %v1044 = vshrl.u32 %v1043, 7
  %v1045 = vsub.s32 3, %v1044
  %v1046 = vrot.slane %v930, %v1045
  %v1047 = vmul.f32 %v1029, %v1034
  %v1048 = vmul.f32 %v1029, %v1038
  %v1049 = vmul.f32 %v1029, %v1042
  %v1050 = vmul.f32 %v1029, %v1046
  %v1051 = vadd.f32 %v887, %v1047
  %v1052 = vadd.f32 %v888, %v1048
  %v1053 = vadd.f32 %v889, %v1049
  %v1054 = vadd.f32 %v890, %v1050
  %1055 = vrot.lane.b32.xlu0 %v23, 113
  %v1056 = vpop.permute.xlu0 %1055
  %1057 = vrot.lane.b32.xlu0 %v27, 113
  %v1058 = vpop.permute.xlu0 %1057
  %1059 = vrot.lane.b32.xlu0 %v24, 113
  %v1060 = vpop.permute.xlu0 %1059
  %1061 = vrot.lane.b32.xlu0 %v28, 113
  %v1062 = vpop.permute.xlu0 %1061
  %vm1063 = vcmp.lt.s32.totalorder %v40, 113
  %v1064 = vsel %vm1063, %v1060, %v1062
  %v1065 = vsel %vm1063, %v1058, %v1060
  %v1066 = vsel %vm1063, %v1056, %v1058
  %v1067 = vsel %vm1063, %v1062, %v1056
  %s1068 = scalar_lea.vmem %s5, 24
  %v1069 = vld [vmem:[%s1068] sm:$0xf]
  %v1071 = vlaneseq
  %v1072 = vshrl.u32 %v1071, 7
  %v1073 = vsub.s32 0, %v1072
  %v1074 = vrot.slane %v1069, %v1073
  %v1075 = vlaneseq
  %v1076 = vshrl.u32 %v1075, 7
  %v1077 = vsub.s32 1, %v1076
  %v1078 = vrot.slane %v1069, %v1077
  %v1079 = vlaneseq
  %v1080 = vshrl.u32 %v1079, 7
  %v1081 = vsub.s32 2, %v1080
  %v1082 = vrot.slane %v1069, %v1081
  %v1083 = vlaneseq
  %v1084 = vshrl.u32 %v1083, 7
  %v1085 = vsub.s32 3, %v1084
  %v1086 = vrot.slane %v1069, %v1085
  %v1091 = vmul.f32 %v1066, %v1074
  %v1092 = vmul.f32 %v1065, %v1078
  %v1093 = vmul.f32 %v1064, %v1082
  %v1094 = vmul.f32 %v1067, %v1086
  %s1095 = scalar_lea.vmem %s1, 96
  %v1096 = vld [vmem:[%s1095] sm:$0xf]
  %1098 = vset.pattern.permute.xlu0 0
  %1099 = vperm.xlu0 %1098, %v1096
  %v1100 = vpop.permute.xlu0 %1099
  %v1102 = vlaneseq
  %v1103 = vshrl.u32 %v1102, 7
  %v1104 = vsub.s32 0, %v1103
  %v1105 = vrot.slane %v1091, %v1104
  %v1106 = vlaneseq
  %v1107 = vshrl.u32 %v1106, 7
  %v1108 = vsub.s32 0, %v1107
  %v1109 = vrot.slane %v1092, %v1108
  %v1110 = vlaneseq
  %v1111 = vshrl.u32 %v1110, 7
  %v1112 = vsub.s32 0, %v1111
  %v1113 = vrot.slane %v1093, %v1112
  %v1114 = vlaneseq
  %v1115 = vshrl.u32 %v1114, 7
  %v1116 = vsub.s32 0, %v1115
  %v1117 = vrot.slane %v1094, %v1116
  %v1118 = vmul.f32 %v1100, %v1105
  %v1119 = vmul.f32 %v1100, %v1109
  %v1120 = vmul.f32 %v1100, %v1113
  %v1121 = vmul.f32 %v1100, %v1117
  %v1122 = vadd.f32 %v958, %v1118
  %v1123 = vadd.f32 %v959, %v1119
  %v1124 = vadd.f32 %v960, %v1120
  %v1125 = vadd.f32 %v961, %v1121
  %s1126 = scalar_lea.vmem %s1, 100
  %v1127 = vld [vmem:[%s1126] sm:$0xf]
  %1129 = vset.pattern.permute.xlu0 0
  %1130 = vperm.xlu0 %1129, %v1127
  %v1131 = vpop.permute.xlu0 %1130
  %v1133 = vlaneseq
  %v1134 = vshrl.u32 %v1133, 7
  %v1135 = vsub.s32 1, %v1134
  %v1136 = vrot.slane %v1091, %v1135
  %v1137 = vlaneseq
  %v1138 = vshrl.u32 %v1137, 7
  %v1139 = vsub.s32 1, %v1138
  %v1140 = vrot.slane %v1092, %v1139
  %v1141 = vlaneseq
  %v1142 = vshrl.u32 %v1141, 7
  %v1143 = vsub.s32 1, %v1142
  %v1144 = vrot.slane %v1093, %v1143
  %v1145 = vlaneseq
  %v1146 = vshrl.u32 %v1145, 7
  %v1147 = vsub.s32 1, %v1146
  %v1148 = vrot.slane %v1094, %v1147
  %v1149 = vmul.f32 %v1131, %v1136
  %v1150 = vmul.f32 %v1131, %v1140
  %v1151 = vmul.f32 %v1131, %v1144
  %v1152 = vmul.f32 %v1131, %v1148
  %v1153 = vadd.f32 %v989, %v1149
  %v1154 = vadd.f32 %v990, %v1150
  %v1155 = vadd.f32 %v991, %v1151
  %v1156 = vadd.f32 %v992, %v1152
  %s1157 = scalar_lea.vmem %s1, 104
  %v1158 = vld [vmem:[%s1157] sm:$0xf]
  %1160 = vset.pattern.permute.xlu0 0
  %1161 = vperm.xlu0 %1160, %v1158
  %v1162 = vpop.permute.xlu0 %1161
  %v1164 = vlaneseq
  %v1165 = vshrl.u32 %v1164, 7
  %v1166 = vsub.s32 2, %v1165
  %v1167 = vrot.slane %v1091, %v1166
  %v1168 = vlaneseq
  %v1169 = vshrl.u32 %v1168, 7
  %v1170 = vsub.s32 2, %v1169
  %v1171 = vrot.slane %v1092, %v1170
  %v1172 = vlaneseq
  %v1173 = vshrl.u32 %v1172, 7
  %v1174 = vsub.s32 2, %v1173
  %v1175 = vrot.slane %v1093, %v1174
  %v1176 = vlaneseq
  %v1177 = vshrl.u32 %v1176, 7
  %v1178 = vsub.s32 2, %v1177
  %v1179 = vrot.slane %v1094, %v1178
  %v1180 = vmul.f32 %v1162, %v1167
  %v1181 = vmul.f32 %v1162, %v1171
  %v1182 = vmul.f32 %v1162, %v1175
  %v1183 = vmul.f32 %v1162, %v1179
  %v1184 = vadd.f32 %v1020, %v1180
  %v1185 = vadd.f32 %v1021, %v1181
  %v1186 = vadd.f32 %v1022, %v1182
  %v1187 = vadd.f32 %v1023, %v1183
  %s1188 = scalar_lea.vmem %s1, 108
  %v1189 = vld [vmem:[%s1188] sm:$0xf]
  %1191 = vset.pattern.permute.xlu0 0
  %1192 = vperm.xlu0 %1191, %v1189
  %v1193 = vpop.permute.xlu0 %1192
  %v1195 = vlaneseq
  %v1196 = vshrl.u32 %v1195, 7
  %v1197 = vsub.s32 3, %v1196
  %v1198 = vrot.slane %v1091, %v1197
  %v1199 = vlaneseq
  %v1200 = vshrl.u32 %v1199, 7
  %v1201 = vsub.s32 3, %v1200
  %v1202 = vrot.slane %v1092, %v1201
  %v1203 = vlaneseq
  %v1204 = vshrl.u32 %v1203, 7
  %v1205 = vsub.s32 3, %v1204
  %v1206 = vrot.slane %v1093, %v1205
  %v1207 = vlaneseq
  %v1208 = vshrl.u32 %v1207, 7
  %v1209 = vsub.s32 3, %v1208
  %v1210 = vrot.slane %v1094, %v1209
  %v1211 = vmul.f32 %v1193, %v1198
  %v1212 = vmul.f32 %v1193, %v1202
  %v1213 = vmul.f32 %v1193, %v1206
  %v1214 = vmul.f32 %v1193, %v1210
  %v1215 = vadd.f32 %v1051, %v1211
  %v1216 = vadd.f32 %v1052, %v1212
  %v1217 = vadd.f32 %v1053, %v1213
  %v1218 = vadd.f32 %v1054, %v1214
  %1219 = vrot.lane.b32.xlu0 %v23, 112
  %v1220 = vpop.permute.xlu0 %1219
  %1221 = vrot.lane.b32.xlu0 %v27, 112
  %v1222 = vpop.permute.xlu0 %1221
  %1223 = vrot.lane.b32.xlu0 %v24, 112
  %v1224 = vpop.permute.xlu0 %1223
  %1225 = vrot.lane.b32.xlu0 %v28, 112
  %v1226 = vpop.permute.xlu0 %1225
  %vm1227 = vcmp.lt.s32.totalorder %v40, 112
  %v1228 = vsel %vm1227, %v1224, %v1226
  %v1229 = vsel %vm1227, %v1222, %v1224
  %v1230 = vsel %vm1227, %v1220, %v1222
  %v1231 = vsel %vm1227, %v1226, %v1220
  %s1232 = scalar_lea.vmem %s5, 28
  %v1233 = vld [vmem:[%s1232] sm:$0xf]
  %v1235 = vlaneseq
  %v1236 = vshrl.u32 %v1235, 7
  %v1237 = vsub.s32 0, %v1236
  %v1238 = vrot.slane %v1233, %v1237
  %v1239 = vlaneseq
  %v1240 = vshrl.u32 %v1239, 7
  %v1241 = vsub.s32 1, %v1240
  %v1242 = vrot.slane %v1233, %v1241
  %v1243 = vlaneseq
  %v1244 = vshrl.u32 %v1243, 7
  %v1245 = vsub.s32 2, %v1244
  %v1246 = vrot.slane %v1233, %v1245
  %v1247 = vlaneseq
  %v1248 = vshrl.u32 %v1247, 7
  %v1249 = vsub.s32 3, %v1248
  %v1250 = vrot.slane %v1233, %v1249
  %v1255 = vmul.f32 %v1230, %v1238
  %v1256 = vmul.f32 %v1229, %v1242
  %v1257 = vmul.f32 %v1228, %v1246
  %v1258 = vmul.f32 %v1231, %v1250
  %s1259 = scalar_lea.vmem %s1, 112
  %v1260 = vld [vmem:[%s1259] sm:$0xf]
  %1262 = vset.pattern.permute.xlu0 0
  %1263 = vperm.xlu0 %1262, %v1260
  %v1264 = vpop.permute.xlu0 %1263
  %v1266 = vlaneseq
  %v1267 = vshrl.u32 %v1266, 7
  %v1268 = vsub.s32 0, %v1267
  %v1269 = vrot.slane %v1255, %v1268
  %v1270 = vlaneseq
  %v1271 = vshrl.u32 %v1270, 7
  %v1272 = vsub.s32 0, %v1271
  %v1273 = vrot.slane %v1256, %v1272
  %v1274 = vlaneseq
  %v1275 = vshrl.u32 %v1274, 7
  %v1276 = vsub.s32 0, %v1275
  %v1277 = vrot.slane %v1257, %v1276
  %v1278 = vlaneseq
  %v1279 = vshrl.u32 %v1278, 7
  %v1280 = vsub.s32 0, %v1279
  %v1281 = vrot.slane %v1258, %v1280
  %v1282 = vmul.f32 %v1264, %v1269
  %v1283 = vmul.f32 %v1264, %v1273
  %v1284 = vmul.f32 %v1264, %v1277
  %v1285 = vmul.f32 %v1264, %v1281
  %v1286 = vadd.f32 %v1122, %v1282
  %v1287 = vadd.f32 %v1123, %v1283
  %v1288 = vadd.f32 %v1124, %v1284
  %v1289 = vadd.f32 %v1125, %v1285
  %s1290 = scalar_lea.vmem %s1, 116
  %v1291 = vld [vmem:[%s1290] sm:$0xf]
  %1293 = vset.pattern.permute.xlu0 0
  %1294 = vperm.xlu0 %1293, %v1291
  %v1295 = vpop.permute.xlu0 %1294
  %v1297 = vlaneseq
  %v1298 = vshrl.u32 %v1297, 7
  %v1299 = vsub.s32 1, %v1298
  %v1300 = vrot.slane %v1255, %v1299
  %v1301 = vlaneseq
  %v1302 = vshrl.u32 %v1301, 7
  %v1303 = vsub.s32 1, %v1302
  %v1304 = vrot.slane %v1256, %v1303
  %v1305 = vlaneseq
  %v1306 = vshrl.u32 %v1305, 7
  %v1307 = vsub.s32 1, %v1306
  %v1308 = vrot.slane %v1257, %v1307
  %v1309 = vlaneseq
  %v1310 = vshrl.u32 %v1309, 7
  %v1311 = vsub.s32 1, %v1310
  %v1312 = vrot.slane %v1258, %v1311
  %v1313 = vmul.f32 %v1295, %v1300
  %v1314 = vmul.f32 %v1295, %v1304
  %v1315 = vmul.f32 %v1295, %v1308
  %v1316 = vmul.f32 %v1295, %v1312
  %v1317 = vadd.f32 %v1153, %v1313
  %v1318 = vadd.f32 %v1154, %v1314
  %v1319 = vadd.f32 %v1155, %v1315
  %v1320 = vadd.f32 %v1156, %v1316
  %s1321 = scalar_lea.vmem %s1, 120
  %v1322 = vld [vmem:[%s1321] sm:$0xf]
  %1324 = vset.pattern.permute.xlu0 0
  %1325 = vperm.xlu0 %1324, %v1322
  %v1326 = vpop.permute.xlu0 %1325
  %v1328 = vlaneseq
  %v1329 = vshrl.u32 %v1328, 7
  %v1330 = vsub.s32 2, %v1329
  %v1331 = vrot.slane %v1255, %v1330
  %v1332 = vlaneseq
  %v1333 = vshrl.u32 %v1332, 7
  %v1334 = vsub.s32 2, %v1333
  %v1335 = vrot.slane %v1256, %v1334
  %v1336 = vlaneseq
  %v1337 = vshrl.u32 %v1336, 7
  %v1338 = vsub.s32 2, %v1337
  %v1339 = vrot.slane %v1257, %v1338
  %v1340 = vlaneseq
  %v1341 = vshrl.u32 %v1340, 7
  %v1342 = vsub.s32 2, %v1341
  %v1343 = vrot.slane %v1258, %v1342
  %v1344 = vmul.f32 %v1326, %v1331
  %v1345 = vmul.f32 %v1326, %v1335
  %v1346 = vmul.f32 %v1326, %v1339
  %v1347 = vmul.f32 %v1326, %v1343
  %v1348 = vadd.f32 %v1184, %v1344
  %v1349 = vadd.f32 %v1185, %v1345
  %v1350 = vadd.f32 %v1186, %v1346
  %v1351 = vadd.f32 %v1187, %v1347
  %s1352 = scalar_lea.vmem %s1, 124
  %v1353 = vld [vmem:[%s1352] sm:$0xf]
  %1355 = vset.pattern.permute.xlu0 0
  %1356 = vperm.xlu0 %1355, %v1353
  %v1357 = vpop.permute.xlu0 %1356
  %v1359 = vlaneseq
  %v1360 = vshrl.u32 %v1359, 7
  %v1361 = vsub.s32 3, %v1360
  %v1362 = vrot.slane %v1255, %v1361
  %v1363 = vlaneseq
  %v1364 = vshrl.u32 %v1363, 7
  %v1365 = vsub.s32 3, %v1364
  %v1366 = vrot.slane %v1256, %v1365
  %v1367 = vlaneseq
  %v1368 = vshrl.u32 %v1367, 7
  %v1369 = vsub.s32 3, %v1368
  %v1370 = vrot.slane %v1257, %v1369
  %v1371 = vlaneseq
  %v1372 = vshrl.u32 %v1371, 7
  %v1373 = vsub.s32 3, %v1372
  %v1374 = vrot.slane %v1258, %v1373
  %v1375 = vmul.f32 %v1357, %v1362
  %v1376 = vmul.f32 %v1357, %v1366
  %v1377 = vmul.f32 %v1357, %v1370
  %v1378 = vmul.f32 %v1357, %v1374
  %v1379 = vadd.f32 %v1215, %v1375
  %v1380 = vadd.f32 %v1216, %v1376
  %v1381 = vadd.f32 %v1217, %v1377
  %v1382 = vadd.f32 %v1218, %v1378
  %1383 = vrot.lane.b32.xlu0 %v23, 111
  %v1384 = vpop.permute.xlu0 %1383
  %1385 = vrot.lane.b32.xlu0 %v27, 111
  %v1386 = vpop.permute.xlu0 %1385
  %1387 = vrot.lane.b32.xlu0 %v24, 111
  %v1388 = vpop.permute.xlu0 %1387
  %1389 = vrot.lane.b32.xlu0 %v28, 111
  %v1390 = vpop.permute.xlu0 %1389
  %vm1391 = vcmp.lt.s32.totalorder %v40, 111
  %v1392 = vsel %vm1391, %v1388, %v1390
  %v1393 = vsel %vm1391, %v1386, %v1388
  %v1394 = vsel %vm1391, %v1384, %v1386
  %v1395 = vsel %vm1391, %v1390, %v1384
  %s1396 = scalar_lea.vmem %s5, 32
  %v1397 = vld [vmem:[%s1396] sm:$0xf]
  %v1399 = vlaneseq
  %v1400 = vshrl.u32 %v1399, 7
  %v1401 = vsub.s32 0, %v1400
  %v1402 = vrot.slane %v1397, %v1401
  %v1403 = vlaneseq
  %v1404 = vshrl.u32 %v1403, 7
  %v1405 = vsub.s32 1, %v1404
  %v1406 = vrot.slane %v1397, %v1405
  %v1407 = vlaneseq
  %v1408 = vshrl.u32 %v1407, 7
  %v1409 = vsub.s32 2, %v1408
  %v1410 = vrot.slane %v1397, %v1409
  %v1411 = vlaneseq
  %v1412 = vshrl.u32 %v1411, 7
  %v1413 = vsub.s32 3, %v1412
  %v1414 = vrot.slane %v1397, %v1413
  %v1419 = vmul.f32 %v1394, %v1402
  %v1420 = vmul.f32 %v1393, %v1406
  %v1421 = vmul.f32 %v1392, %v1410
  %v1422 = vmul.f32 %v1395, %v1414
  %s1423 = scalar_lea.vmem %s1, 128
  %v1424 = vld [vmem:[%s1423] sm:$0xf]
  %1426 = vset.pattern.permute.xlu0 0
  %1427 = vperm.xlu0 %1426, %v1424
  %v1428 = vpop.permute.xlu0 %1427
  %v1430 = vlaneseq
  %v1431 = vshrl.u32 %v1430, 7
  %v1432 = vsub.s32 0, %v1431
  %v1433 = vrot.slane %v1419, %v1432
  %v1434 = vlaneseq
  %v1435 = vshrl.u32 %v1434, 7
  %v1436 = vsub.s32 0, %v1435
  %v1437 = vrot.slane %v1420, %v1436
  %v1438 = vlaneseq
  %v1439 = vshrl.u32 %v1438, 7
  %v1440 = vsub.s32 0, %v1439
  %v1441 = vrot.slane %v1421, %v1440
  %v1442 = vlaneseq
  %v1443 = vshrl.u32 %v1442, 7
  %v1444 = vsub.s32 0, %v1443
  %v1445 = vrot.slane %v1422, %v1444
  %v1446 = vmul.f32 %v1428, %v1433
  %v1447 = vmul.f32 %v1428, %v1437
  %v1448 = vmul.f32 %v1428, %v1441
  %v1449 = vmul.f32 %v1428, %v1445
  %v1450 = vadd.f32 %v1286, %v1446
  %v1451 = vadd.f32 %v1287, %v1447
  %v1452 = vadd.f32 %v1288, %v1448
  %v1453 = vadd.f32 %v1289, %v1449
  %s1454 = scalar_lea.vmem %s1, 132
  %v1455 = vld [vmem:[%s1454] sm:$0xf]
  %1457 = vset.pattern.permute.xlu0 0
  %1458 = vperm.xlu0 %1457, %v1455
  %v1459 = vpop.permute.xlu0 %1458
  %v1461 = vlaneseq
  %v1462 = vshrl.u32 %v1461, 7
  %v1463 = vsub.s32 1, %v1462
  %v1464 = vrot.slane %v1419, %v1463
  %v1465 = vlaneseq
  %v1466 = vshrl.u32 %v1465, 7
  %v1467 = vsub.s32 1, %v1466
  %v1468 = vrot.slane %v1420, %v1467
  %v1469 = vlaneseq
  %v1470 = vshrl.u32 %v1469, 7
  %v1471 = vsub.s32 1, %v1470
  %v1472 = vrot.slane %v1421, %v1471
  %v1473 = vlaneseq
  %v1474 = vshrl.u32 %v1473, 7
  %v1475 = vsub.s32 1, %v1474
  %v1476 = vrot.slane %v1422, %v1475
  %v1477 = vmul.f32 %v1459, %v1464
  %v1478 = vmul.f32 %v1459, %v1468
  %v1479 = vmul.f32 %v1459, %v1472
  %v1480 = vmul.f32 %v1459, %v1476
  %v1481 = vadd.f32 %v1317, %v1477
  %v1482 = vadd.f32 %v1318, %v1478
  %v1483 = vadd.f32 %v1319, %v1479
  %v1484 = vadd.f32 %v1320, %v1480
  %s1485 = scalar_lea.vmem %s1, 136
  %v1486 = vld [vmem:[%s1485] sm:$0xf]
  %1488 = vset.pattern.permute.xlu0 0
  %1489 = vperm.xlu0 %1488, %v1486
  %v1490 = vpop.permute.xlu0 %1489
  %v1492 = vlaneseq
  %v1493 = vshrl.u32 %v1492, 7
  %v1494 = vsub.s32 2, %v1493
  %v1495 = vrot.slane %v1419, %v1494
  %v1496 = vlaneseq
  %v1497 = vshrl.u32 %v1496, 7
  %v1498 = vsub.s32 2, %v1497
  %v1499 = vrot.slane %v1420, %v1498
  %v1500 = vlaneseq
  %v1501 = vshrl.u32 %v1500, 7
  %v1502 = vsub.s32 2, %v1501
  %v1503 = vrot.slane %v1421, %v1502
  %v1504 = vlaneseq
  %v1505 = vshrl.u32 %v1504, 7
  %v1506 = vsub.s32 2, %v1505
  %v1507 = vrot.slane %v1422, %v1506
  %v1508 = vmul.f32 %v1490, %v1495
  %v1509 = vmul.f32 %v1490, %v1499
  %v1510 = vmul.f32 %v1490, %v1503
  %v1511 = vmul.f32 %v1490, %v1507
  %v1512 = vadd.f32 %v1348, %v1508
  %v1513 = vadd.f32 %v1349, %v1509
  %v1514 = vadd.f32 %v1350, %v1510
  %v1515 = vadd.f32 %v1351, %v1511
  %s1516 = scalar_lea.vmem %s1, 140
  %v1517 = vld [vmem:[%s1516] sm:$0xf]
  %1519 = vset.pattern.permute.xlu0 0
  %1520 = vperm.xlu0 %1519, %v1517
  %v1521 = vpop.permute.xlu0 %1520
  %v1523 = vlaneseq
  %v1524 = vshrl.u32 %v1523, 7
  %v1525 = vsub.s32 3, %v1524
  %v1526 = vrot.slane %v1419, %v1525
  %v1527 = vlaneseq
  %v1528 = vshrl.u32 %v1527, 7
  %v1529 = vsub.s32 3, %v1528
  %v1530 = vrot.slane %v1420, %v1529
  %v1531 = vlaneseq
  %v1532 = vshrl.u32 %v1531, 7
  %v1533 = vsub.s32 3, %v1532
  %v1534 = vrot.slane %v1421, %v1533
  %v1535 = vlaneseq
  %v1536 = vshrl.u32 %v1535, 7
  %v1537 = vsub.s32 3, %v1536
  %v1538 = vrot.slane %v1422, %v1537
  %v1539 = vmul.f32 %v1521, %v1526
  %v1540 = vmul.f32 %v1521, %v1530
  %v1541 = vmul.f32 %v1521, %v1534
  %v1542 = vmul.f32 %v1521, %v1538
  %v1543 = vadd.f32 %v1379, %v1539
  %v1544 = vadd.f32 %v1380, %v1540
  %v1545 = vadd.f32 %v1381, %v1541
  %v1546 = vadd.f32 %v1382, %v1542
  %v1547 = vadd.f32 %v1450, %v1481
  %v1548 = vadd.f32 %v1451, %v1482
  %v1549 = vadd.f32 %v1452, %v1483
  %v1550 = vadd.f32 %v1453, %v1484
  %v1551 = vadd.f32 %v1512, %v1543
  %v1552 = vadd.f32 %v1513, %v1544
  %v1553 = vadd.f32 %v1514, %v1545
  %v1554 = vadd.f32 %v1515, %v1546
  %v1555 = vadd.f32 %v1547, %v1551
  %v1556 = vadd.f32 %v1548, %v1552
  %v1557 = vadd.f32 %v1549, %v1553
  %v1558 = vadd.f32 %v1550, %v1554
  %v1559 = vld [vmem:[%s2] sm:$0xf]
  %1561 = vset.pattern.permute.xlu0 0
  %1562 = vperm.xlu0 %1561, %v1559
  %v1563 = vpop.permute.xlu0 %1562
  %v1565 = vadd.f32 %v1555, %v1563
  %v1566 = vadd.f32 %v1556, %v1563
  %v1567 = vadd.f32 %v1557, %v1563
  %v1568 = vadd.f32 %v1558, %v1563
  %v1569 = vmax.f32 %v1565, 0.0
  %v1570 = vmax.f32 %v1566, 0.0
  %v1571 = vmax.f32 %v1567, 0.0
  %v1572 = vmax.f32 %v1568, 0.0
  %1573 = vrot.lane.b32.xlu0 %v1569, 17
  %v1574 = vpop.permute.xlu0 %1573
  %1575 = vrot.lane.b32.xlu0 %v1570, 17
  %v1576 = vpop.permute.xlu0 %1575
  %1577 = vrot.lane.b32.xlu0 %v1571, 17
  %v1578 = vpop.permute.xlu0 %1577
  %1579 = vrot.lane.b32.xlu0 %v1572, 17
  %v1580 = vpop.permute.xlu0 %1579
  %v1581 = vsel %vm41, %v1578, %v1580
  %v1582 = vsel %vm41, %v1576, %v1578
  %v1583 = vsel %vm41, %v1574, %v1576
  %v1584 = vsel %vm41, %v1580, %v1574
  %v1585 = vmul.f32 %v1584, %v51
  %v1586 = vmul.f32 %v1583, %v55
  %v1587 = vmul.f32 %v1582, %v59
  %v1588 = vmul.f32 %v1581, %v63
  %v1589 = vld [vmem:[%s3] sm:$0xf]
  %1591 = vset.pattern.permute.xlu0 0
  %1592 = vperm.xlu0 %1591, %v1589
  %v1593 = vpop.permute.xlu0 %1592
  %v1595 = vlaneseq
  %v1596 = vshrl.u32 %v1595, 7
  %v1597 = vsub.s32 0, %v1596
  %v1598 = vrot.slane %v1585, %v1597
  %v1599 = vlaneseq
  %v1600 = vshrl.u32 %v1599, 7
  %v1601 = vsub.s32 0, %v1600
  %v1602 = vrot.slane %v1586, %v1601
  %v1603 = vlaneseq
  %v1604 = vshrl.u32 %v1603, 7
  %v1605 = vsub.s32 0, %v1604
  %v1606 = vrot.slane %v1587, %v1605
  %v1607 = vlaneseq
  %v1608 = vshrl.u32 %v1607, 7
  %v1609 = vsub.s32 0, %v1608
  %v1610 = vrot.slane %v1588, %v1609
  %v1611 = vmul.f32 %v1593, %v1598
  %v1612 = vmul.f32 %v1593, %v1602
  %v1613 = vmul.f32 %v1593, %v1606
  %v1614 = vmul.f32 %v1593, %v1610
  %v1615 = vadd.f32 %v1611, 0.0
  %v1616 = vadd.f32 %v1612, 0.0
  %v1617 = vadd.f32 %v1613, 0.0
  %v1618 = vadd.f32 %v1614, 0.0
  %s1619 = scalar_lea.vmem %s3, 4
  %v1620 = vld [vmem:[%s1619] sm:$0xf]
  %1622 = vset.pattern.permute.xlu0 0
  %1623 = vperm.xlu0 %1622, %v1620
  %v1624 = vpop.permute.xlu0 %1623
  %v1626 = vlaneseq
  %v1627 = vshrl.u32 %v1626, 7
  %v1628 = vsub.s32 1, %v1627
  %v1629 = vrot.slane %v1585, %v1628
  %v1630 = vlaneseq
  %v1631 = vshrl.u32 %v1630, 7
  %v1632 = vsub.s32 1, %v1631
  %v1633 = vrot.slane %v1586, %v1632
  %v1634 = vlaneseq
  %v1635 = vshrl.u32 %v1634, 7
  %v1636 = vsub.s32 1, %v1635
  %v1637 = vrot.slane %v1587, %v1636
  %v1638 = vlaneseq
  %v1639 = vshrl.u32 %v1638, 7
  %v1640 = vsub.s32 1, %v1639
  %v1641 = vrot.slane %v1588, %v1640
  %v1642 = vmul.f32 %v1624, %v1629
  %v1643 = vmul.f32 %v1624, %v1633
  %v1644 = vmul.f32 %v1624, %v1637
  %v1645 = vmul.f32 %v1624, %v1641
  %v1646 = vadd.f32 %v1642, 0.0
  %v1647 = vadd.f32 %v1643, 0.0
  %v1648 = vadd.f32 %v1644, 0.0
  %v1649 = vadd.f32 %v1645, 0.0
  %s1650 = scalar_lea.vmem %s3, 8
  %v1651 = vld [vmem:[%s1650] sm:$0xf]
  %1653 = vset.pattern.permute.xlu0 0
  %1654 = vperm.xlu0 %1653, %v1651
  %v1655 = vpop.permute.xlu0 %1654
  %v1657 = vlaneseq
  %v1658 = vshrl.u32 %v1657, 7
  %v1659 = vsub.s32 2, %v1658
  %v1660 = vrot.slane %v1585, %v1659
  %v1661 = vlaneseq
  %v1662 = vshrl.u32 %v1661, 7
  %v1663 = vsub.s32 2, %v1662
  %v1664 = vrot.slane %v1586, %v1663
  %v1665 = vlaneseq
  %v1666 = vshrl.u32 %v1665, 7
  %v1667 = vsub.s32 2, %v1666
  %v1668 = vrot.slane %v1587, %v1667
  %v1669 = vlaneseq
  %v1670 = vshrl.u32 %v1669, 7
  %v1671 = vsub.s32 2, %v1670
  %v1672 = vrot.slane %v1588, %v1671
  %v1673 = vmul.f32 %v1655, %v1660
  %v1674 = vmul.f32 %v1655, %v1664
  %v1675 = vmul.f32 %v1655, %v1668
  %v1676 = vmul.f32 %v1655, %v1672
  %v1677 = vadd.f32 %v1673, 0.0
  %v1678 = vadd.f32 %v1674, 0.0
  %v1679 = vadd.f32 %v1675, 0.0
  %v1680 = vadd.f32 %v1676, 0.0
  %s1681 = scalar_lea.vmem %s3, 12
  %v1682 = vld [vmem:[%s1681] sm:$0xf]
  %1684 = vset.pattern.permute.xlu0 0
  %1685 = vperm.xlu0 %1684, %v1682
  %v1686 = vpop.permute.xlu0 %1685
  %v1688 = vlaneseq
  %v1689 = vshrl.u32 %v1688, 7
  %v1690 = vsub.s32 3, %v1689
  %v1691 = vrot.slane %v1585, %v1690
  %v1692 = vlaneseq
  %v1693 = vshrl.u32 %v1692, 7
  %v1694 = vsub.s32 3, %v1693
  %v1695 = vrot.slane %v1586, %v1694
  %v1696 = vlaneseq
  %v1697 = vshrl.u32 %v1696, 7
  %v1698 = vsub.s32 3, %v1697
  %v1699 = vrot.slane %v1587, %v1698
  %v1700 = vlaneseq
  %v1701 = vshrl.u32 %v1700, 7
  %v1702 = vsub.s32 3, %v1701
  %v1703 = vrot.slane %v1588, %v1702
  %v1704 = vmul.f32 %v1686, %v1691
  %v1705 = vmul.f32 %v1686, %v1695
  %v1706 = vmul.f32 %v1686, %v1699
  %v1707 = vmul.f32 %v1686, %v1703
  %v1708 = vadd.f32 %v1704, 0.0
  %v1709 = vadd.f32 %v1705, 0.0
  %v1710 = vadd.f32 %v1706, 0.0
  %v1711 = vadd.f32 %v1707, 0.0
  %1712 = vrot.lane.b32.xlu0 %v1569, 16
  %v1713 = vpop.permute.xlu0 %1712
  %1714 = vrot.lane.b32.xlu0 %v1570, 16
  %v1715 = vpop.permute.xlu0 %1714
  %1716 = vrot.lane.b32.xlu0 %v1571, 16
  %v1717 = vpop.permute.xlu0 %1716
  %1718 = vrot.lane.b32.xlu0 %v1572, 16
  %v1719 = vpop.permute.xlu0 %1718
  %v1720 = vsel %vm203, %v1717, %v1719
  %v1721 = vsel %vm203, %v1715, %v1717
  %v1722 = vsel %vm203, %v1713, %v1715
  %v1723 = vsel %vm203, %v1719, %v1713
  %v1724 = vmul.f32 %v1723, %v214
  %v1725 = vmul.f32 %v1722, %v218
  %v1726 = vmul.f32 %v1721, %v222
  %v1727 = vmul.f32 %v1720, %v226
  %s1728 = scalar_lea.vmem %s3, 16
  %v1729 = vld [vmem:[%s1728] sm:$0xf]
  %1731 = vset.pattern.permute.xlu0 0
  %1732 = vperm.xlu0 %1731, %v1729
  %v1733 = vpop.permute.xlu0 %1732
  %v1735 = vlaneseq
  %v1736 = vshrl.u32 %v1735, 7
  %v1737 = vsub.s32 0, %v1736
  %v1738 = vrot.slane %v1724, %v1737
  %v1739 = vlaneseq
  %v1740 = vshrl.u32 %v1739, 7
  %v1741 = vsub.s32 0, %v1740
  %v1742 = vrot.slane %v1725, %v1741
  %v1743 = vlaneseq
  %v1744 = vshrl.u32 %v1743, 7
  %v1745 = vsub.s32 0, %v1744
  %v1746 = vrot.slane %v1726, %v1745
  %v1747 = vlaneseq
  %v1748 = vshrl.u32 %v1747, 7
  %v1749 = vsub.s32 0, %v1748
  %v1750 = vrot.slane %v1727, %v1749
  %v1751 = vmul.f32 %v1733, %v1738
  %v1752 = vmul.f32 %v1733, %v1742
  %v1753 = vmul.f32 %v1733, %v1746
  %v1754 = vmul.f32 %v1733, %v1750
  %v1755 = vadd.f32 %v1615, %v1751
  %v1756 = vadd.f32 %v1616, %v1752
  %v1757 = vadd.f32 %v1617, %v1753
  %v1758 = vadd.f32 %v1618, %v1754
  %s1759 = scalar_lea.vmem %s3, 20
  %v1760 = vld [vmem:[%s1759] sm:$0xf]
  %1762 = vset.pattern.permute.xlu0 0
  %1763 = vperm.xlu0 %1762, %v1760
  %v1764 = vpop.permute.xlu0 %1763
  %v1766 = vlaneseq
  %v1767 = vshrl.u32 %v1766, 7
  %v1768 = vsub.s32 1, %v1767
  %v1769 = vrot.slane %v1724, %v1768
  %v1770 = vlaneseq
  %v1771 = vshrl.u32 %v1770, 7
  %v1772 = vsub.s32 1, %v1771
  %v1773 = vrot.slane %v1725, %v1772
  %v1774 = vlaneseq
  %v1775 = vshrl.u32 %v1774, 7
  %v1776 = vsub.s32 1, %v1775
  %v1777 = vrot.slane %v1726, %v1776
  %v1778 = vlaneseq
  %v1779 = vshrl.u32 %v1778, 7
  %v1780 = vsub.s32 1, %v1779
  %v1781 = vrot.slane %v1727, %v1780
  %v1782 = vmul.f32 %v1764, %v1769
  %v1783 = vmul.f32 %v1764, %v1773
  %v1784 = vmul.f32 %v1764, %v1777
  %v1785 = vmul.f32 %v1764, %v1781
  %v1786 = vadd.f32 %v1646, %v1782
  %v1787 = vadd.f32 %v1647, %v1783
  %v1788 = vadd.f32 %v1648, %v1784
  %v1789 = vadd.f32 %v1649, %v1785
  %s1790 = scalar_lea.vmem %s3, 24
  %v1791 = vld [vmem:[%s1790] sm:$0xf]
  %1793 = vset.pattern.permute.xlu0 0
  %1794 = vperm.xlu0 %1793, %v1791
  %v1795 = vpop.permute.xlu0 %1794
  %v1797 = vlaneseq
  %v1798 = vshrl.u32 %v1797, 7
  %v1799 = vsub.s32 2, %v1798
  %v1800 = vrot.slane %v1724, %v1799
  %v1801 = vlaneseq
  %v1802 = vshrl.u32 %v1801, 7
  %v1803 = vsub.s32 2, %v1802
  %v1804 = vrot.slane %v1725, %v1803
  %v1805 = vlaneseq
  %v1806 = vshrl.u32 %v1805, 7
  %v1807 = vsub.s32 2, %v1806
  %v1808 = vrot.slane %v1726, %v1807
  %v1809 = vlaneseq
  %v1810 = vshrl.u32 %v1809, 7
  %v1811 = vsub.s32 2, %v1810
  %v1812 = vrot.slane %v1727, %v1811
  %v1813 = vmul.f32 %v1795, %v1800
  %v1814 = vmul.f32 %v1795, %v1804
  %v1815 = vmul.f32 %v1795, %v1808
  %v1816 = vmul.f32 %v1795, %v1812
  %v1817 = vadd.f32 %v1677, %v1813
  %v1818 = vadd.f32 %v1678, %v1814
  %v1819 = vadd.f32 %v1679, %v1815
  %v1820 = vadd.f32 %v1680, %v1816
  %s1821 = scalar_lea.vmem %s3, 28
  %v1822 = vld [vmem:[%s1821] sm:$0xf]
  %1824 = vset.pattern.permute.xlu0 0
  %1825 = vperm.xlu0 %1824, %v1822
  %v1826 = vpop.permute.xlu0 %1825
  %v1828 = vlaneseq
  %v1829 = vshrl.u32 %v1828, 7
  %v1830 = vsub.s32 3, %v1829
  %v1831 = vrot.slane %v1724, %v1830
  %v1832 = vlaneseq
  %v1833 = vshrl.u32 %v1832, 7
  %v1834 = vsub.s32 3, %v1833
  %v1835 = vrot.slane %v1725, %v1834
  %v1836 = vlaneseq
  %v1837 = vshrl.u32 %v1836, 7
  %v1838 = vsub.s32 3, %v1837
  %v1839 = vrot.slane %v1726, %v1838
  %v1840 = vlaneseq
  %v1841 = vshrl.u32 %v1840, 7
  %v1842 = vsub.s32 3, %v1841
  %v1843 = vrot.slane %v1727, %v1842
  %v1844 = vmul.f32 %v1826, %v1831
  %v1845 = vmul.f32 %v1826, %v1835
  %v1846 = vmul.f32 %v1826, %v1839
  %v1847 = vmul.f32 %v1826, %v1843
  %v1848 = vadd.f32 %v1708, %v1844
  %v1849 = vadd.f32 %v1709, %v1845
  %v1850 = vadd.f32 %v1710, %v1846
  %v1851 = vadd.f32 %v1711, %v1847
  %1852 = vrot.lane.b32.xlu0 %v1569, 15
  %v1853 = vpop.permute.xlu0 %1852
  %1854 = vrot.lane.b32.xlu0 %v1570, 15
  %v1855 = vpop.permute.xlu0 %1854
  %1856 = vrot.lane.b32.xlu0 %v1571, 15
  %v1857 = vpop.permute.xlu0 %1856
  %1858 = vrot.lane.b32.xlu0 %v1572, 15
  %v1859 = vpop.permute.xlu0 %1858
  %v1860 = vsel %vm367, %v1857, %v1859
  %v1861 = vsel %vm367, %v1855, %v1857
  %v1862 = vsel %vm367, %v1853, %v1855
  %v1863 = vsel %vm367, %v1859, %v1853
  %v1864 = vmul.f32 %v1863, %v378
  %v1865 = vmul.f32 %v1862, %v382
  %v1866 = vmul.f32 %v1861, %v386
  %v1867 = vmul.f32 %v1860, %v390
  %s1868 = scalar_lea.vmem %s3, 32
  %v1869 = vld [vmem:[%s1868] sm:$0xf]
  %1871 = vset.pattern.permute.xlu0 0
  %1872 = vperm.xlu0 %1871, %v1869
  %v1873 = vpop.permute.xlu0 %1872
  %v1875 = vlaneseq
  %v1876 = vshrl.u32 %v1875, 7
  %v1877 = vsub.s32 0, %v1876
  %v1878 = vrot.slane %v1864, %v1877
  %v1879 = vlaneseq
  %v1880 = vshrl.u32 %v1879, 7
  %v1881 = vsub.s32 0, %v1880
  %v1882 = vrot.slane %v1865, %v1881
  %v1883 = vlaneseq
  %v1884 = vshrl.u32 %v1883, 7
  %v1885 = vsub.s32 0, %v1884
  %v1886 = vrot.slane %v1866, %v1885
  %v1887 = vlaneseq
  %v1888 = vshrl.u32 %v1887, 7
  %v1889 = vsub.s32 0, %v1888
  %v1890 = vrot.slane %v1867, %v1889
  %v1891 = vmul.f32 %v1873, %v1878
  %v1892 = vmul.f32 %v1873, %v1882
  %v1893 = vmul.f32 %v1873, %v1886
  %v1894 = vmul.f32 %v1873, %v1890
  %v1895 = vadd.f32 %v1755, %v1891
  %v1896 = vadd.f32 %v1756, %v1892
  %v1897 = vadd.f32 %v1757, %v1893
  %v1898 = vadd.f32 %v1758, %v1894
  %s1899 = scalar_lea.vmem %s3, 36
  %v1900 = vld [vmem:[%s1899] sm:$0xf]
  %1902 = vset.pattern.permute.xlu0 0
  %1903 = vperm.xlu0 %1902, %v1900
  %v1904 = vpop.permute.xlu0 %1903
  %v1906 = vlaneseq
  %v1907 = vshrl.u32 %v1906, 7
  %v1908 = vsub.s32 1, %v1907
  %v1909 = vrot.slane %v1864, %v1908
  %v1910 = vlaneseq
  %v1911 = vshrl.u32 %v1910, 7
  %v1912 = vsub.s32 1, %v1911
  %v1913 = vrot.slane %v1865, %v1912
  %v1914 = vlaneseq
  %v1915 = vshrl.u32 %v1914, 7
  %v1916 = vsub.s32 1, %v1915
  %v1917 = vrot.slane %v1866, %v1916
  %v1918 = vlaneseq
  %v1919 = vshrl.u32 %v1918, 7
  %v1920 = vsub.s32 1, %v1919
  %v1921 = vrot.slane %v1867, %v1920
  %v1922 = vmul.f32 %v1904, %v1909
  %v1923 = vmul.f32 %v1904, %v1913
  %v1924 = vmul.f32 %v1904, %v1917
  %v1925 = vmul.f32 %v1904, %v1921
  %v1926 = vadd.f32 %v1786, %v1922
  %v1927 = vadd.f32 %v1787, %v1923
  %v1928 = vadd.f32 %v1788, %v1924
  %v1929 = vadd.f32 %v1789, %v1925
  %s1930 = scalar_lea.vmem %s3, 40
  %v1931 = vld [vmem:[%s1930] sm:$0xf]
  %1933 = vset.pattern.permute.xlu0 0
  %1934 = vperm.xlu0 %1933, %v1931
  %v1935 = vpop.permute.xlu0 %1934
  %v1937 = vlaneseq
  %v1938 = vshrl.u32 %v1937, 7
  %v1939 = vsub.s32 2, %v1938
  %v1940 = vrot.slane %v1864, %v1939
  %v1941 = vlaneseq
  %v1942 = vshrl.u32 %v1941, 7
  %v1943 = vsub.s32 2, %v1942
  %v1944 = vrot.slane %v1865, %v1943
  %v1945 = vlaneseq
  %v1946 = vshrl.u32 %v1945, 7
  %v1947 = vsub.s32 2, %v1946
  %v1948 = vrot.slane %v1866, %v1947
  %v1949 = vlaneseq
  %v1950 = vshrl.u32 %v1949, 7
  %v1951 = vsub.s32 2, %v1950
  %v1952 = vrot.slane %v1867, %v1951
  %v1953 = vmul.f32 %v1935, %v1940
  %v1954 = vmul.f32 %v1935, %v1944
  %v1955 = vmul.f32 %v1935, %v1948
  %v1956 = vmul.f32 %v1935, %v1952
  %v1957 = vadd.f32 %v1817, %v1953
  %v1958 = vadd.f32 %v1818, %v1954
  %v1959 = vadd.f32 %v1819, %v1955
  %v1960 = vadd.f32 %v1820, %v1956
  %s1961 = scalar_lea.vmem %s3, 44
  %v1962 = vld [vmem:[%s1961] sm:$0xf]
  %1964 = vset.pattern.permute.xlu0 0
  %1965 = vperm.xlu0 %1964, %v1962
  %v1966 = vpop.permute.xlu0 %1965
  %v1968 = vlaneseq
  %v1969 = vshrl.u32 %v1968, 7
  %v1970 = vsub.s32 3, %v1969
  %v1971 = vrot.slane %v1864, %v1970
  %v1972 = vlaneseq
  %v1973 = vshrl.u32 %v1972, 7
  %v1974 = vsub.s32 3, %v1973
  %v1975 = vrot.slane %v1865, %v1974
  %v1976 = vlaneseq
  %v1977 = vshrl.u32 %v1976, 7
  %v1978 = vsub.s32 3, %v1977
  %v1979 = vrot.slane %v1866, %v1978
  %v1980 = vlaneseq
  %v1981 = vshrl.u32 %v1980, 7
  %v1982 = vsub.s32 3, %v1981
  %v1983 = vrot.slane %v1867, %v1982
  %v1984 = vmul.f32 %v1966, %v1971
  %v1985 = vmul.f32 %v1966, %v1975
  %v1986 = vmul.f32 %v1966, %v1979
  %v1987 = vmul.f32 %v1966, %v1983
  %v1988 = vadd.f32 %v1848, %v1984
  %v1989 = vadd.f32 %v1849, %v1985
  %v1990 = vadd.f32 %v1850, %v1986
  %v1991 = vadd.f32 %v1851, %v1987
  %1992 = vrot.lane.b32.xlu0 %v1569, 1
  %v1993 = vpop.permute.xlu0 %1992
  %1994 = vrot.lane.b32.xlu0 %v1570, 1
  %v1995 = vpop.permute.xlu0 %1994
  %1996 = vrot.lane.b32.xlu0 %v1571, 1
  %v1997 = vpop.permute.xlu0 %1996
  %1998 = vrot.lane.b32.xlu0 %v1572, 1
  %v1999 = vpop.permute.xlu0 %1998
  %v2000 = vsel %vm531, %v1997, %v1999
  %v2001 = vsel %vm531, %v1995, %v1997
  %v2002 = vsel %vm531, %v1993, %v1995
  %v2003 = vsel %vm531, %v1999, %v1993
  %v2004 = vmul.f32 %v2003, %v542
  %v2005 = vmul.f32 %v2002, %v546
  %v2006 = vmul.f32 %v2001, %v550
  %v2007 = vmul.f32 %v2000, %v554
  %s2008 = scalar_lea.vmem %s3, 48
  %v2009 = vld [vmem:[%s2008] sm:$0xf]
  %2011 = vset.pattern.permute.xlu0 0
  %2012 = vperm.xlu0 %2011, %v2009
  %v2013 = vpop.permute.xlu0 %2012
  %v2015 = vlaneseq
  %v2016 = vshrl.u32 %v2015, 7
  %v2017 = vsub.s32 0, %v2016
  %v2018 = vrot.slane %v2004, %v2017
  %v2019 = vlaneseq
  %v2020 = vshrl.u32 %v2019, 7
  %v2021 = vsub.s32 0, %v2020
  %v2022 = vrot.slane %v2005, %v2021
  %v2023 = vlaneseq
  %v2024 = vshrl.u32 %v2023, 7
  %v2025 = vsub.s32 0, %v2024
  %v2026 = vrot.slane %v2006, %v2025
  %v2027 = vlaneseq
  %v2028 = vshrl.u32 %v2027, 7
  %v2029 = vsub.s32 0, %v2028
  %v2030 = vrot.slane %v2007, %v2029
  %v2031 = vmul.f32 %v2013, %v2018
  %v2032 = vmul.f32 %v2013, %v2022
  %v2033 = vmul.f32 %v2013, %v2026
  %v2034 = vmul.f32 %v2013, %v2030
  %v2035 = vadd.f32 %v1895, %v2031
  %v2036 = vadd.f32 %v1896, %v2032
  %v2037 = vadd.f32 %v1897, %v2033
  %v2038 = vadd.f32 %v1898, %v2034
  %s2039 = scalar_lea.vmem %s3, 52
  %v2040 = vld [vmem:[%s2039] sm:$0xf]
  %2042 = vset.pattern.permute.xlu0 0
  %2043 = vperm.xlu0 %2042, %v2040
  %v2044 = vpop.permute.xlu0 %2043
  %v2046 = vlaneseq
  %v2047 = vshrl.u32 %v2046, 7
  %v2048 = vsub.s32 1, %v2047
  %v2049 = vrot.slane %v2004, %v2048
  %v2050 = vlaneseq
  %v2051 = vshrl.u32 %v2050, 7
  %v2052 = vsub.s32 1, %v2051
  %v2053 = vrot.slane %v2005, %v2052
  %v2054 = vlaneseq
  %v2055 = vshrl.u32 %v2054, 7
  %v2056 = vsub.s32 1, %v2055
  %v2057 = vrot.slane %v2006, %v2056
  %v2058 = vlaneseq
  %v2059 = vshrl.u32 %v2058, 7
  %v2060 = vsub.s32 1, %v2059
  %v2061 = vrot.slane %v2007, %v2060
  %v2062 = vmul.f32 %v2044, %v2049
  %v2063 = vmul.f32 %v2044, %v2053
  %v2064 = vmul.f32 %v2044, %v2057
  %v2065 = vmul.f32 %v2044, %v2061
  %v2066 = vadd.f32 %v1926, %v2062
  %v2067 = vadd.f32 %v1927, %v2063
  %v2068 = vadd.f32 %v1928, %v2064
  %v2069 = vadd.f32 %v1929, %v2065
  %s2070 = scalar_lea.vmem %s3, 56
  %v2071 = vld [vmem:[%s2070] sm:$0xf]
  %2073 = vset.pattern.permute.xlu0 0
  %2074 = vperm.xlu0 %2073, %v2071
  %v2075 = vpop.permute.xlu0 %2074
  %v2077 = vlaneseq
  %v2078 = vshrl.u32 %v2077, 7
  %v2079 = vsub.s32 2, %v2078
  %v2080 = vrot.slane %v2004, %v2079
  %v2081 = vlaneseq
  %v2082 = vshrl.u32 %v2081, 7
  %v2083 = vsub.s32 2, %v2082
  %v2084 = vrot.slane %v2005, %v2083
  %v2085 = vlaneseq
  %v2086 = vshrl.u32 %v2085, 7
  %v2087 = vsub.s32 2, %v2086
  %v2088 = vrot.slane %v2006, %v2087
  %v2089 = vlaneseq
  %v2090 = vshrl.u32 %v2089, 7
  %v2091 = vsub.s32 2, %v2090
  %v2092 = vrot.slane %v2007, %v2091
  %v2093 = vmul.f32 %v2075, %v2080
  %v2094 = vmul.f32 %v2075, %v2084
  %v2095 = vmul.f32 %v2075, %v2088
  %v2096 = vmul.f32 %v2075, %v2092
  %v2097 = vadd.f32 %v1957, %v2093
  %v2098 = vadd.f32 %v1958, %v2094
  %v2099 = vadd.f32 %v1959, %v2095
  %v2100 = vadd.f32 %v1960, %v2096
  %s2101 = scalar_lea.vmem %s3, 60
  %v2102 = vld [vmem:[%s2101] sm:$0xf]
  %2104 = vset.pattern.permute.xlu0 0
  %2105 = vperm.xlu0 %2104, %v2102
  %v2106 = vpop.permute.xlu0 %2105
  %v2108 = vlaneseq
  %v2109 = vshrl.u32 %v2108, 7
  %v2110 = vsub.s32 3, %v2109
  %v2111 = vrot.slane %v2004, %v2110
  %v2112 = vlaneseq
  %v2113 = vshrl.u32 %v2112, 7
  %v2114 = vsub.s32 3, %v2113
  %v2115 = vrot.slane %v2005, %v2114
  %v2116 = vlaneseq
  %v2117 = vshrl.u32 %v2116, 7
  %v2118 = vsub.s32 3, %v2117
  %v2119 = vrot.slane %v2006, %v2118
  %v2120 = vlaneseq
  %v2121 = vshrl.u32 %v2120, 7
  %v2122 = vsub.s32 3, %v2121
  %v2123 = vrot.slane %v2007, %v2122
  %v2124 = vmul.f32 %v2106, %v2111
  %v2125 = vmul.f32 %v2106, %v2115
  %v2126 = vmul.f32 %v2106, %v2119
  %v2127 = vmul.f32 %v2106, %v2123
  %v2128 = vadd.f32 %v1988, %v2124
  %v2129 = vadd.f32 %v1989, %v2125
  %v2130 = vadd.f32 %v1990, %v2126
  %v2131 = vadd.f32 %v1991, %v2127
  %s2132 = scalar_lea.vmem %s3, 64
  %v2133 = vld [vmem:[%s2132] sm:$0xf]
  %2135 = vset.pattern.permute.xlu0 0
  %2136 = vperm.xlu0 %2135, %v2133
  %v2137 = vpop.permute.xlu0 %2136
  %v2139 = vlaneseq
  %v2140 = vshrl.u32 %v2139, 7
  %v2141 = vsub.s32 0, %v2140
  %v2142 = vrot.slane %v1569, %v2141
  %v2143 = vlaneseq
  %v2144 = vshrl.u32 %v2143, 7
  %v2145 = vsub.s32 0, %v2144
  %v2146 = vrot.slane %v1570, %v2145
  %v2147 = vlaneseq
  %v2148 = vshrl.u32 %v2147, 7
  %v2149 = vsub.s32 0, %v2148
  %v2150 = vrot.slane %v1571, %v2149
  %v2151 = vlaneseq
  %v2152 = vshrl.u32 %v2151, 7
  %v2153 = vsub.s32 0, %v2152
  %v2154 = vrot.slane %v1572, %v2153
  %v2155 = vmul.f32 %v2137, %v2142
  %v2156 = vmul.f32 %v2137, %v2146
  %v2157 = vmul.f32 %v2137, %v2150
  %v2158 = vmul.f32 %v2137, %v2154
  %v2159 = vadd.f32 %v2035, %v2155
  %v2160 = vadd.f32 %v2036, %v2156
  %v2161 = vadd.f32 %v2037, %v2157
  %v2162 = vadd.f32 %v2038, %v2158
  %s2163 = scalar_lea.vmem %s3, 68
  %v2164 = vld [vmem:[%s2163] sm:$0xf]
  %2166 = vset.pattern.permute.xlu0 0
  %2167 = vperm.xlu0 %2166, %v2164
  %v2168 = vpop.permute.xlu0 %2167
  %v2170 = vlaneseq
  %v2171 = vshrl.u32 %v2170, 7
  %v2172 = vsub.s32 1, %v2171
  %v2173 = vrot.slane %v1569, %v2172
  %v2174 = vlaneseq
  %v2175 = vshrl.u32 %v2174, 7
  %v2176 = vsub.s32 1, %v2175
  %v2177 = vrot.slane %v1570, %v2176
  %v2178 = vlaneseq
  %v2179 = vshrl.u32 %v2178, 7
  %v2180 = vsub.s32 1, %v2179
  %v2181 = vrot.slane %v1571, %v2180
  %v2182 = vlaneseq
  %v2183 = vshrl.u32 %v2182, 7
  %v2184 = vsub.s32 1, %v2183
  %v2185 = vrot.slane %v1572, %v2184
  %v2186 = vmul.f32 %v2168, %v2173
  %v2187 = vmul.f32 %v2168, %v2177
  %v2188 = vmul.f32 %v2168, %v2181
  %v2189 = vmul.f32 %v2168, %v2185
  %v2190 = vadd.f32 %v2066, %v2186
  %v2191 = vadd.f32 %v2067, %v2187
  %v2192 = vadd.f32 %v2068, %v2188
  %v2193 = vadd.f32 %v2069, %v2189
  %s2194 = scalar_lea.vmem %s3, 72
  %v2195 = vld [vmem:[%s2194] sm:$0xf]
  %2197 = vset.pattern.permute.xlu0 0
  %2198 = vperm.xlu0 %2197, %v2195
  %v2199 = vpop.permute.xlu0 %2198
  %v2201 = vlaneseq
  %v2202 = vshrl.u32 %v2201, 7
  %v2203 = vsub.s32 2, %v2202
  %v2204 = vrot.slane %v1569, %v2203
  %v2205 = vlaneseq
  %v2206 = vshrl.u32 %v2205, 7
  %v2207 = vsub.s32 2, %v2206
  %v2208 = vrot.slane %v1570, %v2207
  %v2209 = vlaneseq
  %v2210 = vshrl.u32 %v2209, 7
  %v2211 = vsub.s32 2, %v2210
  %v2212 = vrot.slane %v1571, %v2211
  %v2213 = vlaneseq
  %v2214 = vshrl.u32 %v2213, 7
  %v2215 = vsub.s32 2, %v2214
  %v2216 = vrot.slane %v1572, %v2215
  %v2217 = vmul.f32 %v2199, %v2204
  %v2218 = vmul.f32 %v2199, %v2208
  %v2219 = vmul.f32 %v2199, %v2212
  %v2220 = vmul.f32 %v2199, %v2216
  %v2221 = vadd.f32 %v2097, %v2217
  %v2222 = vadd.f32 %v2098, %v2218
  %v2223 = vadd.f32 %v2099, %v2219
  %v2224 = vadd.f32 %v2100, %v2220
  %s2225 = scalar_lea.vmem %s3, 76
  %v2226 = vld [vmem:[%s2225] sm:$0xf]
  %2228 = vset.pattern.permute.xlu0 0
  %2229 = vperm.xlu0 %2228, %v2226
  %v2230 = vpop.permute.xlu0 %2229
  %v2232 = vlaneseq
  %v2233 = vshrl.u32 %v2232, 7
  %v2234 = vsub.s32 3, %v2233
  %v2235 = vrot.slane %v1569, %v2234
  %v2236 = vlaneseq
  %v2237 = vshrl.u32 %v2236, 7
  %v2238 = vsub.s32 3, %v2237
  %v2239 = vrot.slane %v1570, %v2238
  %v2240 = vlaneseq
  %v2241 = vshrl.u32 %v2240, 7
  %v2242 = vsub.s32 3, %v2241
  %v2243 = vrot.slane %v1571, %v2242
  %v2244 = vlaneseq
  %v2245 = vshrl.u32 %v2244, 7
  %v2246 = vsub.s32 3, %v2245
  %v2247 = vrot.slane %v1572, %v2246
  %v2248 = vmul.f32 %v2230, %v2235
  %v2249 = vmul.f32 %v2230, %v2239
  %v2250 = vmul.f32 %v2230, %v2243
  %v2251 = vmul.f32 %v2230, %v2247
  %v2252 = vadd.f32 %v2128, %v2248
  %v2253 = vadd.f32 %v2129, %v2249
  %v2254 = vadd.f32 %v2130, %v2250
  %v2255 = vadd.f32 %v2131, %v2251
  %2256 = vrot.lane.b32.xlu0 %v1569, 127
  %v2257 = vpop.permute.xlu0 %2256
  %2258 = vrot.lane.b32.xlu0 %v1570, 127
  %v2259 = vpop.permute.xlu0 %2258
  %2260 = vrot.lane.b32.xlu0 %v1571, 127
  %v2261 = vpop.permute.xlu0 %2260
  %2262 = vrot.lane.b32.xlu0 %v1572, 127
  %v2263 = vpop.permute.xlu0 %2262
  %v2264 = vsel %vm899, %v2261, %v2263
  %v2265 = vsel %vm899, %v2259, %v2261
  %v2266 = vsel %vm899, %v2257, %v2259
  %v2267 = vsel %vm899, %v2263, %v2257
  %v2268 = vmul.f32 %v2266, %v910
  %v2269 = vmul.f32 %v2265, %v914
  %v2270 = vmul.f32 %v2264, %v918
  %v2271 = vmul.f32 %v2267, %v922
  %s2272 = scalar_lea.vmem %s3, 80
  %v2273 = vld [vmem:[%s2272] sm:$0xf]
  %2275 = vset.pattern.permute.xlu0 0
  %2276 = vperm.xlu0 %2275, %v2273
  %v2277 = vpop.permute.xlu0 %2276
  %v2279 = vlaneseq
  %v2280 = vshrl.u32 %v2279, 7
  %v2281 = vsub.s32 0, %v2280
  %v2282 = vrot.slane %v2268, %v2281
  %v2283 = vlaneseq
  %v2284 = vshrl.u32 %v2283, 7
  %v2285 = vsub.s32 0, %v2284
  %v2286 = vrot.slane %v2269, %v2285
  %v2287 = vlaneseq
  %v2288 = vshrl.u32 %v2287, 7
  %v2289 = vsub.s32 0, %v2288
  %v2290 = vrot.slane %v2270, %v2289
  %v2291 = vlaneseq
  %v2292 = vshrl.u32 %v2291, 7
  %v2293 = vsub.s32 0, %v2292
  %v2294 = vrot.slane %v2271, %v2293
  %v2295 = vmul.f32 %v2277, %v2282
  %v2296 = vmul.f32 %v2277, %v2286
  %v2297 = vmul.f32 %v2277, %v2290
  %v2298 = vmul.f32 %v2277, %v2294
  %v2299 = vadd.f32 %v2159, %v2295
  %v2300 = vadd.f32 %v2160, %v2296
  %v2301 = vadd.f32 %v2161, %v2297
  %v2302 = vadd.f32 %v2162, %v2298
  %s2303 = scalar_lea.vmem %s3, 84
  %v2304 = vld [vmem:[%s2303] sm:$0xf]
  %2306 = vset.pattern.permute.xlu0 0
  %2307 = vperm.xlu0 %2306, %v2304
  %v2308 = vpop.permute.xlu0 %2307
  %v2310 = vlaneseq
  %v2311 = vshrl.u32 %v2310, 7
  %v2312 = vsub.s32 1, %v2311
  %v2313 = vrot.slane %v2268, %v2312
  %v2314 = vlaneseq
  %v2315 = vshrl.u32 %v2314, 7
  %v2316 = vsub.s32 1, %v2315
  %v2317 = vrot.slane %v2269, %v2316
  %v2318 = vlaneseq
  %v2319 = vshrl.u32 %v2318, 7
  %v2320 = vsub.s32 1, %v2319
  %v2321 = vrot.slane %v2270, %v2320
  %v2322 = vlaneseq
  %v2323 = vshrl.u32 %v2322, 7
  %v2324 = vsub.s32 1, %v2323
  %v2325 = vrot.slane %v2271, %v2324
  %v2326 = vmul.f32 %v2308, %v2313
  %v2327 = vmul.f32 %v2308, %v2317
  %v2328 = vmul.f32 %v2308, %v2321
  %v2329 = vmul.f32 %v2308, %v2325
  %v2330 = vadd.f32 %v2190, %v2326
  %v2331 = vadd.f32 %v2191, %v2327
  %v2332 = vadd.f32 %v2192, %v2328
  %v2333 = vadd.f32 %v2193, %v2329
  %s2334 = scalar_lea.vmem %s3, 88
  %v2335 = vld [vmem:[%s2334] sm:$0xf]
  %2337 = vset.pattern.permute.xlu0 0
  %2338 = vperm.xlu0 %2337, %v2335
  %v2339 = vpop.permute.xlu0 %2338
  %v2341 = vlaneseq
  %v2342 = vshrl.u32 %v2341, 7
  %v2343 = vsub.s32 2, %v2342
  %v2344 = vrot.slane %v2268, %v2343
  %v2345 = vlaneseq
  %v2346 = vshrl.u32 %v2345, 7
  %v2347 = vsub.s32 2, %v2346
  %v2348 = vrot.slane %v2269, %v2347
  %v2349 = vlaneseq
  %v2350 = vshrl.u32 %v2349, 7
  %v2351 = vsub.s32 2, %v2350
  %v2352 = vrot.slane %v2270, %v2351
  %v2353 = vlaneseq
  %v2354 = vshrl.u32 %v2353, 7
  %v2355 = vsub.s32 2, %v2354
  %v2356 = vrot.slane %v2271, %v2355
  %v2357 = vmul.f32 %v2339, %v2344
  %v2358 = vmul.f32 %v2339, %v2348
  %v2359 = vmul.f32 %v2339, %v2352
  %v2360 = vmul.f32 %v2339, %v2356
  %v2361 = vadd.f32 %v2221, %v2357
  %v2362 = vadd.f32 %v2222, %v2358
  %v2363 = vadd.f32 %v2223, %v2359
  %v2364 = vadd.f32 %v2224, %v2360
  %s2365 = scalar_lea.vmem %s3, 92
  %v2366 = vld [vmem:[%s2365] sm:$0xf]
  %2368 = vset.pattern.permute.xlu0 0
  %2369 = vperm.xlu0 %2368, %v2366
  %v2370 = vpop.permute.xlu0 %2369
  %v2372 = vlaneseq
  %v2373 = vshrl.u32 %v2372, 7
  %v2374 = vsub.s32 3, %v2373
  %v2375 = vrot.slane %v2268, %v2374
  %v2376 = vlaneseq
  %v2377 = vshrl.u32 %v2376, 7
  %v2378 = vsub.s32 3, %v2377
  %v2379 = vrot.slane %v2269, %v2378
  %v2380 = vlaneseq
  %v2381 = vshrl.u32 %v2380, 7
  %v2382 = vsub.s32 3, %v2381
  %v2383 = vrot.slane %v2270, %v2382
  %v2384 = vlaneseq
  %v2385 = vshrl.u32 %v2384, 7
  %v2386 = vsub.s32 3, %v2385
  %v2387 = vrot.slane %v2271, %v2386
  %v2388 = vmul.f32 %v2370, %v2375
  %v2389 = vmul.f32 %v2370, %v2379
  %v2390 = vmul.f32 %v2370, %v2383
  %v2391 = vmul.f32 %v2370, %v2387
  %v2392 = vadd.f32 %v2252, %v2388
  %v2393 = vadd.f32 %v2253, %v2389
  %v2394 = vadd.f32 %v2254, %v2390
  %v2395 = vadd.f32 %v2255, %v2391
  %2396 = vrot.lane.b32.xlu0 %v1569, 113
  %v2397 = vpop.permute.xlu0 %2396
  %2398 = vrot.lane.b32.xlu0 %v1570, 113
  %v2399 = vpop.permute.xlu0 %2398
  %2400 = vrot.lane.b32.xlu0 %v1571, 113
  %v2401 = vpop.permute.xlu0 %2400
  %2402 = vrot.lane.b32.xlu0 %v1572, 113
  %v2403 = vpop.permute.xlu0 %2402
  %v2404 = vsel %vm1063, %v2401, %v2403
  %v2405 = vsel %vm1063, %v2399, %v2401
  %v2406 = vsel %vm1063, %v2397, %v2399
  %v2407 = vsel %vm1063, %v2403, %v2397
  %v2408 = vmul.f32 %v2406, %v1074
  %v2409 = vmul.f32 %v2405, %v1078
  %v2410 = vmul.f32 %v2404, %v1082
  %v2411 = vmul.f32 %v2407, %v1086
  %s2412 = scalar_lea.vmem %s3, 96
  %v2413 = vld [vmem:[%s2412] sm:$0xf]
  %2415 = vset.pattern.permute.xlu0 0
  %2416 = vperm.xlu0 %2415, %v2413
  %v2417 = vpop.permute.xlu0 %2416
  %v2419 = vlaneseq
  %v2420 = vshrl.u32 %v2419, 7
  %v2421 = vsub.s32 0, %v2420
  %v2422 = vrot.slane %v2408, %v2421
  %v2423 = vlaneseq
  %v2424 = vshrl.u32 %v2423, 7
  %v2425 = vsub.s32 0, %v2424
  %v2426 = vrot.slane %v2409, %v2425
  %v2427 = vlaneseq
  %v2428 = vshrl.u32 %v2427, 7
  %v2429 = vsub.s32 0, %v2428
  %v2430 = vrot.slane %v2410, %v2429
  %v2431 = vlaneseq
  %v2432 = vshrl.u32 %v2431, 7
  %v2433 = vsub.s32 0, %v2432
  %v2434 = vrot.slane %v2411, %v2433
  %v2435 = vmul.f32 %v2417, %v2422
  %v2436 = vmul.f32 %v2417, %v2426
  %v2437 = vmul.f32 %v2417, %v2430
  %v2438 = vmul.f32 %v2417, %v2434
  %v2439 = vadd.f32 %v2299, %v2435
  %v2440 = vadd.f32 %v2300, %v2436
  %v2441 = vadd.f32 %v2301, %v2437
  %v2442 = vadd.f32 %v2302, %v2438
  %s2443 = scalar_lea.vmem %s3, 100
  %v2444 = vld [vmem:[%s2443] sm:$0xf]
  %2446 = vset.pattern.permute.xlu0 0
  %2447 = vperm.xlu0 %2446, %v2444
  %v2448 = vpop.permute.xlu0 %2447
  %v2450 = vlaneseq
  %v2451 = vshrl.u32 %v2450, 7
  %v2452 = vsub.s32 1, %v2451
  %v2453 = vrot.slane %v2408, %v2452
  %v2454 = vlaneseq
  %v2455 = vshrl.u32 %v2454, 7
  %v2456 = vsub.s32 1, %v2455
  %v2457 = vrot.slane %v2409, %v2456
  %v2458 = vlaneseq
  %v2459 = vshrl.u32 %v2458, 7
  %v2460 = vsub.s32 1, %v2459
  %v2461 = vrot.slane %v2410, %v2460
  %v2462 = vlaneseq
  %v2463 = vshrl.u32 %v2462, 7
  %v2464 = vsub.s32 1, %v2463
  %v2465 = vrot.slane %v2411, %v2464
  %v2466 = vmul.f32 %v2448, %v2453
  %v2467 = vmul.f32 %v2448, %v2457
  %v2468 = vmul.f32 %v2448, %v2461
  %v2469 = vmul.f32 %v2448, %v2465
  %v2470 = vadd.f32 %v2330, %v2466
  %v2471 = vadd.f32 %v2331, %v2467
  %v2472 = vadd.f32 %v2332, %v2468
  %v2473 = vadd.f32 %v2333, %v2469
  %s2474 = scalar_lea.vmem %s3, 104
  %v2475 = vld [vmem:[%s2474] sm:$0xf]
  %2477 = vset.pattern.permute.xlu0 0
  %2478 = vperm.xlu0 %2477, %v2475
  %v2479 = vpop.permute.xlu0 %2478
  %v2481 = vlaneseq
  %v2482 = vshrl.u32 %v2481, 7
  %v2483 = vsub.s32 2, %v2482
  %v2484 = vrot.slane %v2408, %v2483
  %v2485 = vlaneseq
  %v2486 = vshrl.u32 %v2485, 7
  %v2487 = vsub.s32 2, %v2486
  %v2488 = vrot.slane %v2409, %v2487
  %v2489 = vlaneseq
  %v2490 = vshrl.u32 %v2489, 7
  %v2491 = vsub.s32 2, %v2490
  %v2492 = vrot.slane %v2410, %v2491
  %v2493 = vlaneseq
  %v2494 = vshrl.u32 %v2493, 7
  %v2495 = vsub.s32 2, %v2494
  %v2496 = vrot.slane %v2411, %v2495
  %v2497 = vmul.f32 %v2479, %v2484
  %v2498 = vmul.f32 %v2479, %v2488
  %v2499 = vmul.f32 %v2479, %v2492
  %v2500 = vmul.f32 %v2479, %v2496
  %v2501 = vadd.f32 %v2361, %v2497
  %v2502 = vadd.f32 %v2362, %v2498
  %v2503 = vadd.f32 %v2363, %v2499
  %v2504 = vadd.f32 %v2364, %v2500
  %s2505 = scalar_lea.vmem %s3, 108
  %v2506 = vld [vmem:[%s2505] sm:$0xf]
  %2508 = vset.pattern.permute.xlu0 0
  %2509 = vperm.xlu0 %2508, %v2506
  %v2510 = vpop.permute.xlu0 %2509
  %v2512 = vlaneseq
  %v2513 = vshrl.u32 %v2512, 7
  %v2514 = vsub.s32 3, %v2513
  %v2515 = vrot.slane %v2408, %v2514
  %v2516 = vlaneseq
  %v2517 = vshrl.u32 %v2516, 7
  %v2518 = vsub.s32 3, %v2517
  %v2519 = vrot.slane %v2409, %v2518
  %v2520 = vlaneseq
  %v2521 = vshrl.u32 %v2520, 7
  %v2522 = vsub.s32 3, %v2521
  %v2523 = vrot.slane %v2410, %v2522
  %v2524 = vlaneseq
  %v2525 = vshrl.u32 %v2524, 7
  %v2526 = vsub.s32 3, %v2525
  %v2527 = vrot.slane %v2411, %v2526
  %v2528 = vmul.f32 %v2510, %v2515
  %v2529 = vmul.f32 %v2510, %v2519
  %v2530 = vmul.f32 %v2510, %v2523
  %v2531 = vmul.f32 %v2510, %v2527
  %v2532 = vadd.f32 %v2392, %v2528
  %v2533 = vadd.f32 %v2393, %v2529
  %v2534 = vadd.f32 %v2394, %v2530
  %v2535 = vadd.f32 %v2395, %v2531
  %2536 = vrot.lane.b32.xlu0 %v1569, 112
  %v2537 = vpop.permute.xlu0 %2536
  %2538 = vrot.lane.b32.xlu0 %v1570, 112
  %v2539 = vpop.permute.xlu0 %2538
  %2540 = vrot.lane.b32.xlu0 %v1571, 112
  %v2541 = vpop.permute.xlu0 %2540
  %2542 = vrot.lane.b32.xlu0 %v1572, 112
  %v2543 = vpop.permute.xlu0 %2542
  %v2544 = vsel %vm1227, %v2541, %v2543
  %v2545 = vsel %vm1227, %v2539, %v2541
  %v2546 = vsel %vm1227, %v2537, %v2539
  %v2547 = vsel %vm1227, %v2543, %v2537
  %v2548 = vmul.f32 %v2546, %v1238
  %v2549 = vmul.f32 %v2545, %v1242
  %v2550 = vmul.f32 %v2544, %v1246
  %v2551 = vmul.f32 %v2547, %v1250
  %s2552 = scalar_lea.vmem %s3, 112
  %v2553 = vld [vmem:[%s2552] sm:$0xf]
  %2555 = vset.pattern.permute.xlu0 0
  %2556 = vperm.xlu0 %2555, %v2553
  %v2557 = vpop.permute.xlu0 %2556
  %v2559 = vlaneseq
  %v2560 = vshrl.u32 %v2559, 7
  %v2561 = vsub.s32 0, %v2560
  %v2562 = vrot.slane %v2548, %v2561
  %v2563 = vlaneseq
  %v2564 = vshrl.u32 %v2563, 7
  %v2565 = vsub.s32 0, %v2564
  %v2566 = vrot.slane %v2549, %v2565
  %v2567 = vlaneseq
  %v2568 = vshrl.u32 %v2567, 7
  %v2569 = vsub.s32 0, %v2568
  %v2570 = vrot.slane %v2550, %v2569
  %v2571 = vlaneseq
  %v2572 = vshrl.u32 %v2571, 7
  %v2573 = vsub.s32 0, %v2572
  %v2574 = vrot.slane %v2551, %v2573
  %v2575 = vmul.f32 %v2557, %v2562
  %v2576 = vmul.f32 %v2557, %v2566
  %v2577 = vmul.f32 %v2557, %v2570
  %v2578 = vmul.f32 %v2557, %v2574
  %v2579 = vadd.f32 %v2439, %v2575
  %v2580 = vadd.f32 %v2440, %v2576
  %v2581 = vadd.f32 %v2441, %v2577
  %v2582 = vadd.f32 %v2442, %v2578
  %s2583 = scalar_lea.vmem %s3, 116
  %v2584 = vld [vmem:[%s2583] sm:$0xf]
  %2586 = vset.pattern.permute.xlu0 0
  %2587 = vperm.xlu0 %2586, %v2584
  %v2588 = vpop.permute.xlu0 %2587
  %v2590 = vlaneseq
  %v2591 = vshrl.u32 %v2590, 7
  %v2592 = vsub.s32 1, %v2591
  %v2593 = vrot.slane %v2548, %v2592
  %v2594 = vlaneseq
  %v2595 = vshrl.u32 %v2594, 7
  %v2596 = vsub.s32 1, %v2595
  %v2597 = vrot.slane %v2549, %v2596
  %v2598 = vlaneseq
  %v2599 = vshrl.u32 %v2598, 7
  %v2600 = vsub.s32 1, %v2599
  %v2601 = vrot.slane %v2550, %v2600
  %v2602 = vlaneseq
  %v2603 = vshrl.u32 %v2602, 7
  %v2604 = vsub.s32 1, %v2603
  %v2605 = vrot.slane %v2551, %v2604
  %v2606 = vmul.f32 %v2588, %v2593
  %v2607 = vmul.f32 %v2588, %v2597
  %v2608 = vmul.f32 %v2588, %v2601
  %v2609 = vmul.f32 %v2588, %v2605
  %v2610 = vadd.f32 %v2470, %v2606
  %v2611 = vadd.f32 %v2471, %v2607
  %v2612 = vadd.f32 %v2472, %v2608
  %v2613 = vadd.f32 %v2473, %v2609
  %s2614 = scalar_lea.vmem %s3, 120
  %v2615 = vld [vmem:[%s2614] sm:$0xf]
  %2617 = vset.pattern.permute.xlu0 0
  %2618 = vperm.xlu0 %2617, %v2615
  %v2619 = vpop.permute.xlu0 %2618
  %v2621 = vlaneseq
  %v2622 = vshrl.u32 %v2621, 7
  %v2623 = vsub.s32 2, %v2622
  %v2624 = vrot.slane %v2548, %v2623
  %v2625 = vlaneseq
  %v2626 = vshrl.u32 %v2625, 7
  %v2627 = vsub.s32 2, %v2626
  %v2628 = vrot.slane %v2549, %v2627
  %v2629 = vlaneseq
  %v2630 = vshrl.u32 %v2629, 7
  %v2631 = vsub.s32 2, %v2630
  %v2632 = vrot.slane %v2550, %v2631
  %v2633 = vlaneseq
  %v2634 = vshrl.u32 %v2633, 7
  %v2635 = vsub.s32 2, %v2634
  %v2636 = vrot.slane %v2551, %v2635
  %v2637 = vmul.f32 %v2619, %v2624
  %v2638 = vmul.f32 %v2619, %v2628
  %v2639 = vmul.f32 %v2619, %v2632
  %v2640 = vmul.f32 %v2619, %v2636
  %v2641 = vadd.f32 %v2501, %v2637
  %v2642 = vadd.f32 %v2502, %v2638
  %v2643 = vadd.f32 %v2503, %v2639
  %v2644 = vadd.f32 %v2504, %v2640
  %s2645 = scalar_lea.vmem %s3, 124
  %v2646 = vld [vmem:[%s2645] sm:$0xf]
  %2648 = vset.pattern.permute.xlu0 0
  %2649 = vperm.xlu0 %2648, %v2646
  %v2650 = vpop.permute.xlu0 %2649
  %v2652 = vlaneseq
  %v2653 = vshrl.u32 %v2652, 7
  %v2654 = vsub.s32 3, %v2653
  %v2655 = vrot.slane %v2548, %v2654
  %v2656 = vlaneseq
  %v2657 = vshrl.u32 %v2656, 7
  %v2658 = vsub.s32 3, %v2657
  %v2659 = vrot.slane %v2549, %v2658
  %v2660 = vlaneseq
  %v2661 = vshrl.u32 %v2660, 7
  %v2662 = vsub.s32 3, %v2661
  %v2663 = vrot.slane %v2550, %v2662
  %v2664 = vlaneseq
  %v2665 = vshrl.u32 %v2664, 7
  %v2666 = vsub.s32 3, %v2665
  %v2667 = vrot.slane %v2551, %v2666
  %v2668 = vmul.f32 %v2650, %v2655
  %v2669 = vmul.f32 %v2650, %v2659
  %v2670 = vmul.f32 %v2650, %v2663
  %v2671 = vmul.f32 %v2650, %v2667
  %v2672 = vadd.f32 %v2532, %v2668
  %v2673 = vadd.f32 %v2533, %v2669
  %v2674 = vadd.f32 %v2534, %v2670
  %v2675 = vadd.f32 %v2535, %v2671
  %2676 = vrot.lane.b32.xlu0 %v1569, 111
  %v2677 = vpop.permute.xlu0 %2676
  %2678 = vrot.lane.b32.xlu0 %v1570, 111
  %v2679 = vpop.permute.xlu0 %2678
  %2680 = vrot.lane.b32.xlu0 %v1571, 111
  %v2681 = vpop.permute.xlu0 %2680
  %2682 = vrot.lane.b32.xlu0 %v1572, 111
  %v2683 = vpop.permute.xlu0 %2682
  %v2684 = vsel %vm1391, %v2681, %v2683
  %v2685 = vsel %vm1391, %v2679, %v2681
  %v2686 = vsel %vm1391, %v2677, %v2679
  %v2687 = vsel %vm1391, %v2683, %v2677
  %v2688 = vmul.f32 %v2686, %v1402
  %v2689 = vmul.f32 %v2685, %v1406
  %v2690 = vmul.f32 %v2684, %v1410
  %v2691 = vmul.f32 %v2687, %v1414
  %s2692 = scalar_lea.vmem %s3, 128
  %v2693 = vld [vmem:[%s2692] sm:$0xf]
  %2695 = vset.pattern.permute.xlu0 0
  %2696 = vperm.xlu0 %2695, %v2693
  %v2697 = vpop.permute.xlu0 %2696
  %v2699 = vlaneseq
  %v2700 = vshrl.u32 %v2699, 7
  %v2701 = vsub.s32 0, %v2700
  %v2702 = vrot.slane %v2688, %v2701
  %v2703 = vlaneseq
  %v2704 = vshrl.u32 %v2703, 7
  %v2705 = vsub.s32 0, %v2704
  %v2706 = vrot.slane %v2689, %v2705
  %v2707 = vlaneseq
  %v2708 = vshrl.u32 %v2707, 7
  %v2709 = vsub.s32 0, %v2708
  %v2710 = vrot.slane %v2690, %v2709
  %v2711 = vlaneseq
  %v2712 = vshrl.u32 %v2711, 7
  %v2713 = vsub.s32 0, %v2712
  %v2714 = vrot.slane %v2691, %v2713
  %v2715 = vmul.f32 %v2697, %v2702
  %v2716 = vmul.f32 %v2697, %v2706
  %v2717 = vmul.f32 %v2697, %v2710
  %v2718 = vmul.f32 %v2697, %v2714
  %v2719 = vadd.f32 %v2579, %v2715
  %v2720 = vadd.f32 %v2580, %v2716
  %v2721 = vadd.f32 %v2581, %v2717
  %v2722 = vadd.f32 %v2582, %v2718
  %s2723 = scalar_lea.vmem %s3, 132
  %v2724 = vld [vmem:[%s2723] sm:$0xf]
  %2726 = vset.pattern.permute.xlu0 0
  %2727 = vperm.xlu0 %2726, %v2724
  %v2728 = vpop.permute.xlu0 %2727
  %v2730 = vlaneseq
  %v2731 = vshrl.u32 %v2730, 7
  %v2732 = vsub.s32 1, %v2731
  %v2733 = vrot.slane %v2688, %v2732
  %v2734 = vlaneseq
  %v2735 = vshrl.u32 %v2734, 7
  %v2736 = vsub.s32 1, %v2735
  %v2737 = vrot.slane %v2689, %v2736
  %v2738 = vlaneseq
  %v2739 = vshrl.u32 %v2738, 7
  %v2740 = vsub.s32 1, %v2739
  %v2741 = vrot.slane %v2690, %v2740
  %v2742 = vlaneseq
  %v2743 = vshrl.u32 %v2742, 7
  %v2744 = vsub.s32 1, %v2743
  %v2745 = vrot.slane %v2691, %v2744
  %v2746 = vmul.f32 %v2728, %v2733
  %v2747 = vmul.f32 %v2728, %v2737
  %v2748 = vmul.f32 %v2728, %v2741
  %v2749 = vmul.f32 %v2728, %v2745
  %v2750 = vadd.f32 %v2610, %v2746
  %v2751 = vadd.f32 %v2611, %v2747
  %v2752 = vadd.f32 %v2612, %v2748
  %v2753 = vadd.f32 %v2613, %v2749
  %s2754 = scalar_lea.vmem %s3, 136
  %v2755 = vld [vmem:[%s2754] sm:$0xf]
  %2757 = vset.pattern.permute.xlu0 0
  %2758 = vperm.xlu0 %2757, %v2755
  %v2759 = vpop.permute.xlu0 %2758
  %v2761 = vlaneseq
  %v2762 = vshrl.u32 %v2761, 7
  %v2763 = vsub.s32 2, %v2762
  %v2764 = vrot.slane %v2688, %v2763
  %v2765 = vlaneseq
  %v2766 = vshrl.u32 %v2765, 7
  %v2767 = vsub.s32 2, %v2766
  %v2768 = vrot.slane %v2689, %v2767
  %v2769 = vlaneseq
  %v2770 = vshrl.u32 %v2769, 7
  %v2771 = vsub.s32 2, %v2770
  %v2772 = vrot.slane %v2690, %v2771
  %v2773 = vlaneseq
  %v2774 = vshrl.u32 %v2773, 7
  %v2775 = vsub.s32 2, %v2774
  %v2776 = vrot.slane %v2691, %v2775
  %v2777 = vmul.f32 %v2759, %v2764
  %v2778 = vmul.f32 %v2759, %v2768
  %v2779 = vmul.f32 %v2759, %v2772
  %v2780 = vmul.f32 %v2759, %v2776
  %v2781 = vadd.f32 %v2641, %v2777
  %v2782 = vadd.f32 %v2642, %v2778
  %v2783 = vadd.f32 %v2643, %v2779
  %v2784 = vadd.f32 %v2644, %v2780
  %s2785 = scalar_lea.vmem %s3, 140
  %v2786 = vld [vmem:[%s2785] sm:$0xf]
  %2788 = vset.pattern.permute.xlu0 0
  %2789 = vperm.xlu0 %2788, %v2786
  %v2790 = vpop.permute.xlu0 %2789
  %v2792 = vlaneseq
  %v2793 = vshrl.u32 %v2792, 7
  %v2794 = vsub.s32 3, %v2793
  %v2795 = vrot.slane %v2688, %v2794
  %v2796 = vlaneseq
  %v2797 = vshrl.u32 %v2796, 7
  %v2798 = vsub.s32 3, %v2797
  %v2799 = vrot.slane %v2689, %v2798
  %v2800 = vlaneseq
  %v2801 = vshrl.u32 %v2800, 7
  %v2802 = vsub.s32 3, %v2801
  %v2803 = vrot.slane %v2690, %v2802
  %v2804 = vlaneseq
  %v2805 = vshrl.u32 %v2804, 7
  %v2806 = vsub.s32 3, %v2805
  %v2807 = vrot.slane %v2691, %v2806
  %v2808 = vmul.f32 %v2790, %v2795
  %v2809 = vmul.f32 %v2790, %v2799
  %v2810 = vmul.f32 %v2790, %v2803
  %v2811 = vmul.f32 %v2790, %v2807
  %v2812 = vadd.f32 %v2672, %v2808
  %v2813 = vadd.f32 %v2673, %v2809
  %v2814 = vadd.f32 %v2674, %v2810
  %v2815 = vadd.f32 %v2675, %v2811
  %v2816 = vadd.f32 %v2719, %v2750
  %v2817 = vadd.f32 %v2720, %v2751
  %v2818 = vadd.f32 %v2721, %v2752
  %v2819 = vadd.f32 %v2722, %v2753
  %v2820 = vadd.f32 %v2781, %v2812
  %v2821 = vadd.f32 %v2782, %v2813
  %v2822 = vadd.f32 %v2783, %v2814
  %v2823 = vadd.f32 %v2784, %v2815
  %v2824 = vadd.f32 %v2816, %v2820
  %v2825 = vadd.f32 %v2817, %v2821
  %v2826 = vadd.f32 %v2818, %v2822
  %v2827 = vadd.f32 %v2819, %v2823
  %v2828 = vld [vmem:[%s4] sm:$0xf]
  %2830 = vset.pattern.permute.xlu0 0
  %2831 = vperm.xlu0 %2830, %v2828
  %v2832 = vpop.permute.xlu0 %2831
  %v2834 = vadd.f32 %v2824, %v2832
  %v2835 = vadd.f32 %v2825, %v2832
  %v2836 = vadd.f32 %v2826, %v2832
  %v2837 = vadd.f32 %v2827, %v2832
  %v2842 = vcombine.low %v2834, %v2835
  %v2843 = vcombine.low %v2836, %v2837
  %v2846 = vadd.f32 %v23, %v2842
  %v2847 = vadd.f32 %v24, %v2843
  %v2848 = vmax.f32 %v2846, 0.0
  %v2849 = vmax.f32 %v2847, 0.0
  %2850 = vst [vmem:[%s6] sm:$0xff] %v2848
  %2851 = vst [vmem:[%s6 + $0x8] sm:$0xff] %v2849
  // Predicated region
  $region26: #{residual_layer_forward.1} parent=0 // pred_check
    _
  $region27: #{residual_layer_forward.1} parent=0 // pred_check_branch
    %2853 = sbr.rel (0) target = $region29
  $region28: #{residual_layer_forward.1} parent=0 // pred_region
    _
  $region29: #{residual_layer_forward.1} parent=0 // pred_fallthru
    _
  // Predicated region
  $region30: #{residual_layer_forward.1} parent=0 // pred_check
    _
  $region31: #{residual_layer_forward.1} parent=0 // pred_check_branch
    %2855 = sbr.rel (0) target = $region33
  $region32: #{residual_layer_forward.1} parent=0 // pred_region
    _
  $region33: #{residual_layer_forward.1} parent=0 // pred_fallthru
    _

</llo_original>
